<compile_context>
chip_gen: v7x
topology: tpu7x:2x2x1
jax: 0.10.0
libtpu: 0.0.40
codegen_flags: <defaults>
</compile_context>

<pallas_src>
import math
import jax
import jax.numpy as jnp
from jax.experimental import pallas as pl
from jax.experimental.pallas import tpu as pltpu

IN_DIM, HID, OUT_DIM = 6, 512, 3
TB = 256  # batch tile


def dqn_kernel(x_ref,
               w1_ref, b1_ref,
               w2_ref, b2_ref,
               w3_ref, b3_ref,
               w4_ref, b4_ref,
               o_ref):
    # Layer 1: (TB, 6) @ (6, 512) + b1 -> ReLU       (bf16 operands, f32 accumulate)
    x = x_ref[...].astype(jnp.bfloat16)
    h = jnp.dot(x, w1_ref[...], preferred_element_type=jnp.float32)
    h = jnp.maximum(h + b1_ref[...], 0.0).astype(jnp.bfloat16)
    # Layer 2: (TB, 512) @ (512, 512) + b2 -> ReLU
    h = jnp.dot(h, w2_ref[...], preferred_element_type=jnp.float32)
    h = jnp.maximum(h + b2_ref[...], 0.0).astype(jnp.bfloat16)
    # Layer 3: (TB, 512) @ (512, 512) + b3 -> ReLU
    h = jnp.dot(h, w3_ref[...], preferred_element_type=jnp.float32)
    h = jnp.maximum(h + b3_ref[...], 0.0).astype(jnp.bfloat16)
    # Output layer: (TB, 512) @ (512, 3) + b4   (no activation)
    out = jnp.dot(h, w4_ref[...], preferred_element_type=jnp.float32)
    o_ref[...] = (out + b4_ref[...]).astype(o_ref.dtype)


def dqn_forward(x, params):
    """x: (B, 6) float32. params: bf16 weights / f32 biases (see prepare_params).
    Returns (B, 3) float32 Q-values."""
    B = x.shape[0]
    B_pad = max(TB, ((B + TB - 1) // TB) * TB)
    if B_pad != B:
        x = jnp.pad(x, ((0, B_pad - B), (0, 0)))
    grid = (B_pad // TB,)

    batch_map = lambda i: (i, 0)      # batch-tiled arrays
    resident_map = lambda i: (0, 0)   # weights/biases: same block every step -> stay in VMEM

    in_specs = [
        pl.BlockSpec((TB, IN_DIM), batch_map),        # x
        pl.BlockSpec((IN_DIM, HID), resident_map),    # w1
        pl.BlockSpec((1, HID), resident_map),         # b1
        pl.BlockSpec((HID, HID), resident_map),       # w2
        pl.BlockSpec((1, HID), resident_map),         # b2
        pl.BlockSpec((HID, HID), resident_map),       # w3
        pl.BlockSpec((1, HID), resident_map),         # b3
        pl.BlockSpec((HID, OUT_DIM), resident_map),   # w4
        pl.BlockSpec((1, OUT_DIM), resident_map),     # b4
    ]
    out_spec = pl.BlockSpec((TB, OUT_DIM), batch_map)

    flops = 2 * B_pad * (IN_DIM * HID + HID * HID + HID * HID + HID * OUT_DIM)
    weight_bytes = 2 * (IN_DIM * HID + 2 * HID * HID + HID * OUT_DIM)   # bf16 weights
    bias_bytes = 4 * (3 * HID + OUT_DIM)                                # f32 biases
    io_bytes = 4 * B_pad * (IN_DIM + OUT_DIM)                           # f32 x + out
    cost = pl.CostEstimate(flops=flops, transcendentals=0,
                           bytes_accessed=weight_bytes + bias_bytes + io_bytes)

    out = pl.pallas_call(
        dqn_kernel,
        out_shape=jax.ShapeDtypeStruct((B_pad, OUT_DIM), jnp.float32),
        grid=grid,
        in_specs=in_specs,
        out_specs=out_spec,
        compiler_params=pltpu.CompilerParams(
            dimension_semantics=("parallel",)),
        cost_estimate=cost,
    )(x,
      params["w1"], params["b1"],
      params["w2"], params["b2"],
      params["w3"], params["b3"],
      params["w4"], params["b4"])
    return out[:B]


def init_params(key):
    """f32 params mimicking nn.Linear default init (U[-1/sqrt(fan_in), +1/sqrt(fan_in)]).
    Weights are stored (in_features, out_features) so the kernel does x @ W + b."""
    dims = [(IN_DIM, HID), (HID, HID), (HID, HID), (HID, OUT_DIM)]
    params = {}
    keys = jax.random.split(key, 2 * len(dims))
    for i, (fan_in, fan_out) in enumerate(dims):
        bound = 1.0 / math.sqrt(fan_in)
        params[f"w{i + 1}"] = jax.random.uniform(
            keys[2 * i], (fan_in, fan_out), minval=-bound, maxval=bound,
            dtype=jnp.float32)
        params[f"b{i + 1}"] = jax.random.uniform(
            keys[2 * i + 1], (1, fan_out), minval=-bound, maxval=bound,
            dtype=jnp.float32)
    return params


def prepare_params(params_f32):
    """One-time cast: bf16 weights (MXU-native), f32 biases (added post-accumulate)."""
    out = {}
    for k, v in params_f32.items():
        out[k] = v.astype(jnp.bfloat16) if k.startswith("w") else v
    return out


def dqn_reference_f32(x, params):
    h = jnp.maximum(x @ params["w1"] + params["b1"], 0.0)
    h = jnp.maximum(h @ params["w2"] + params["b2"], 0.0)
    h = jnp.maximum(h @ params["w3"] + params["b3"], 0.0)
    return h @ params["w4"] + params["b4"]


def dqn_reference_bf16(x, params_bf16):
    h = x.astype(jnp.bfloat16)
    h = jnp.dot(h, params_bf16["w1"], preferred_element_type=jnp.float32) + params_bf16["b1"]
    h = jnp.maximum(h, 0.0).astype(jnp.bfloat16)
    h = jnp.dot(h, params_bf16["w2"], preferred_element_type=jnp.float32) + params_bf16["b2"]
    h = jnp.maximum(h, 0.0).astype(jnp.bfloat16)
    h = jnp.dot(h, params_bf16["w3"], preferred_element_type=jnp.float32) + params_bf16["b3"]
    h = jnp.maximum(h, 0.0).astype(jnp.bfloat16)
    return jnp.dot(h, params_bf16["w4"], preferred_element_type=jnp.float32) + params_bf16["b4"]


if __name__ == "__main__":
    key = jax.random.PRNGKey(0)
    pkey, xkey = jax.random.split(key)
    params_f32 = init_params(pkey)
    params = prepare_params(params_f32)

    B = 8  # small batch of game states (6 features each)
    x = jax.random.normal(xkey, (B, IN_DIM), dtype=jnp.float32)

    out = dqn_forward(x, params)
    out = jax.block_until_ready(out)
    assert out.shape == (B, OUT_DIM)

    # Same-precision (bf16-path) reference: should match closely.
    ref_bf16 = dqn_reference_bf16(x, params)
    assert jnp.allclose(out, ref_bf16, atol=1e-2, rtol=1e-2), "mismatch vs bf16-path reference"

    # Full-f32 reference: loosened tolerance for bf16 weights/activations.
    ref_f32 = dqn_reference_f32(x, params_f32)
    assert jnp.allclose(out, ref_f32, atol=3e-2, rtol=3e-2), "mismatch vs f32 reference"

    print("KERNEL_OK")
</pallas_src>

<mosaic_0001>
module attributes {stable_mosaic.version = 11 : i64} {
  func.func @dqn_kernel(%arg0: i32, %arg1: memref<256x6xf32, #tpu.memory_space<vmem>>, %arg2: memref<6x512xbf16, #tpu.memory_space<vmem>>, %arg3: memref<1x512xf32, #tpu.memory_space<vmem>>, %arg4: memref<512x512xbf16, #tpu.memory_space<vmem>>, %arg5: memref<1x512xf32, #tpu.memory_space<vmem>>, %arg6: memref<512x512xbf16, #tpu.memory_space<vmem>>, %arg7: memref<1x512xf32, #tpu.memory_space<vmem>>, %arg8: memref<512x3xbf16, #tpu.memory_space<vmem>>, %arg9: memref<1x3xf32, #tpu.memory_space<vmem>>, %arg10: memref<256x3xf32, #tpu.memory_space<vmem>>) attributes {dimension_semantics = [#tpu.dimension_semantics<parallel>], iteration_bounds = array<i64: 1>, scalar_prefetch = 0 : i64, scratch_operands = 0 : i64, tpu.core_type = #tpu.core_type<tc>, window_params = [{transform_indices = @transform_0, window_bounds = array<i64: 256, 6>}, {pipeline_mode = #tpu.pipeline_mode<synchronous>, transform_indices = @transform_1, window_bounds = array<i64: 6, 512>}, {pipeline_mode = #tpu.pipeline_mode<synchronous>, transform_indices = @transform_2, window_bounds = array<i64: 1, 512>}, {pipeline_mode = #tpu.pipeline_mode<synchronous>, transform_indices = @transform_3, window_bounds = array<i64: 512, 512>}, {pipeline_mode = #tpu.pipeline_mode<synchronous>, transform_indices = @transform_4, window_bounds = array<i64: 1, 512>}, {pipeline_mode = #tpu.pipeline_mode<synchronous>, transform_indices = @transform_5, window_bounds = array<i64: 512, 512>}, {pipeline_mode = #tpu.pipeline_mode<synchronous>, transform_indices = @transform_6, window_bounds = array<i64: 1, 512>}, {pipeline_mode = #tpu.pipeline_mode<synchronous>, transform_indices = @transform_7, window_bounds = array<i64: 512, 3>}, {pipeline_mode = #tpu.pipeline_mode<synchronous>, transform_indices = @transform_8, window_bounds = array<i64: 1, 3>}, {transform_indices = @transform_9, window_bounds = array<i64: 256, 3>}]} {
    %c0 = arith.constant 0 : index
    %c0_0 = arith.constant 0 : index
    %0 = vector.load %arg1[%c0, %c0_0] : memref<256x6xf32, #tpu.memory_space<vmem>>, vector<256x6xf32>
    %1 = arith.truncf %0 : vector<256x6xf32> to vector<256x6xbf16>
    %c0_1 = arith.constant 0 : index
    %c0_2 = arith.constant 0 : index
    %2 = vector.load %arg2[%c0_1, %c0_2] : memref<6x512xbf16, #tpu.memory_space<vmem>>, vector<6x512xbf16>
    %cst = arith.constant dense<0.000000e+00> : vector<256x512xf32>
    %3 = tpu.matmul %1, %2, %cst {dimension_numbers = #tpu.dot_dimension_numbers<[1], [0], [0], [1], [0, 0, 1, 1], [], []>} : vector<256x6xbf16>, vector<6x512xbf16>, vector<256x512xf32> -> vector<256x512xf32>
    %c0_3 = arith.constant 0 : index
    %c0_4 = arith.constant 0 : index
    %4 = vector.load %arg3[%c0_3, %c0_4] : memref<1x512xf32, #tpu.memory_space<vmem>>, vector<1x512xf32>
    %5 = vector.broadcast %4 : vector<1x512xf32> to vector<256x512xf32>
    %6 = arith.addf %3, %5 : vector<256x512xf32>
    %cst_5 = arith.constant 0.000000e+00 : f32
    %7 = vector.broadcast %cst_5 : f32 to vector<256x512xf32>
    %8 = arith.maximumf %6, %7 : vector<256x512xf32>
    %9 = arith.truncf %8 : vector<256x512xf32> to vector<256x512xbf16>
    %c0_6 = arith.constant 0 : index
    %c0_7 = arith.constant 0 : index
    %10 = vector.load %arg4[%c0_6, %c0_7] : memref<512x512xbf16, #tpu.memory_space<vmem>>, vector<512x512xbf16>
    %cst_8 = arith.constant dense<0.000000e+00> : vector<256x512xf32>
    %11 = tpu.matmul %9, %10, %cst_8 {dimension_numbers = #tpu.dot_dimension_numbers<[1], [0], [0], [1], [0, 0, 1, 1], [], []>} : vector<256x512xbf16>, vector<512x512xbf16>, vector<256x512xf32> -> vector<256x512xf32>
    %c0_9 = arith.constant 0 : index
    %c0_10 = arith.constant 0 : index
    %12 = vector.load %arg5[%c0_9, %c0_10] : memref<1x512xf32, #tpu.memory_space<vmem>>, vector<1x512xf32>
    %13 = vector.broadcast %12 : vector<1x512xf32> to vector<256x512xf32>
    %14 = arith.addf %11, %13 : vector<256x512xf32>
    %cst_11 = arith.constant 0.000000e+00 : f32
    %15 = vector.broadcast %cst_11 : f32 to vector<256x512xf32>
    %16 = arith.maximumf %14, %15 : vector<256x512xf32>
    %17 = arith.truncf %16 : vector<256x512xf32> to vector<256x512xbf16>
    %c0_12 = arith.constant 0 : index
    %c0_13 = arith.constant 0 : index
    %18 = vector.load %arg6[%c0_12, %c0_13] : memref<512x512xbf16, #tpu.memory_space<vmem>>, vector<512x512xbf16>
    %cst_14 = arith.constant dense<0.000000e+00> : vector<256x512xf32>
    %19 = tpu.matmul %17, %18, %cst_14 {dimension_numbers = #tpu.dot_dimension_numbers<[1], [0], [0], [1], [0, 0, 1, 1], [], []>} : vector<256x512xbf16>, vector<512x512xbf16>, vector<256x512xf32> -> vector<256x512xf32>
    %c0_15 = arith.constant 0 : index
    %c0_16 = arith.constant 0 : index
    %20 = vector.load %arg7[%c0_15, %c0_16] : memref<1x512xf32, #tpu.memory_space<vmem>>, vector<1x512xf32>
    %21 = vector.broadcast %20 : vector<1x512xf32> to vector<256x512xf32>
    %22 = arith.addf %19, %21 : vector<256x512xf32>
    %cst_17 = arith.constant 0.000000e+00 : f32
    %23 = vector.broadcast %cst_17 : f32 to vector<256x512xf32>
    %24 = arith.maximumf %22, %23 : vector<256x512xf32>
    %25 = arith.truncf %24 : vector<256x512xf32> to vector<256x512xbf16>
    %c0_18 = arith.constant 0 : index
    %c0_19 = arith.constant 0 : index
    %26 = vector.load %arg8[%c0_18, %c0_19] : memref<512x3xbf16, #tpu.memory_space<vmem>>, vector<512x3xbf16>
    %cst_20 = arith.constant dense<0.000000e+00> : vector<256x3xf32>
    %27 = tpu.matmul %25, %26, %cst_20 {dimension_numbers = #tpu.dot_dimension_numbers<[1], [0], [0], [1], [0, 0, 1, 1], [], []>} : vector<256x512xbf16>, vector<512x3xbf16>, vector<256x3xf32> -> vector<256x3xf32>
    %c0_21 = arith.constant 0 : index
    %c0_22 = arith.constant 0 : index
    %28 = vector.load %arg9[%c0_21, %c0_22] : memref<1x3xf32, #tpu.memory_space<vmem>>, vector<1x3xf32>
    %29 = vector.broadcast %28 : vector<1x3xf32> to vector<256x3xf32>
    %30 = arith.addf %27, %29 : vector<256x3xf32>
    %c0_23 = arith.constant 0 : index
    %c0_24 = arith.constant 0 : index
    %31 = vector.load %arg10[%c0_23, %c0_24] : memref<256x3xf32, #tpu.memory_space<vmem>>, vector<256x3xf32>
    tpu.vector_store %arg10[%c0_23, %c0_24], %30 {strides = array<i32>} : memref<256x3xf32, #tpu.memory_space<vmem>>, vector<256x3xf32>,
    return
  }
  func.func @transform_0(%arg0: i32) -> (i32, i32) {
    %c0_i32 = arith.constant 0 : i32
    %c0_i32_0 = arith.constant 0 : i32
    return %arg0, %c0_i32 : i32, i32
  }
  func.func @transform_1(%arg0: i32) -> (i32, i32) {
    %c0_i32 = arith.constant 0 : i32
    %c0_i32_0 = arith.constant 0 : i32
    %c0_i32_1 = arith.constant 0 : i32
    return %c0_i32, %c0_i32_0 : i32, i32
  }
  func.func @transform_2(%arg0: i32) -> (i32, i32) {
    %c0_i32 = arith.constant 0 : i32
    %c0_i32_0 = arith.constant 0 : i32
    %c0_i32_1 = arith.constant 0 : i32
    return %c0_i32, %c0_i32_0 : i32, i32
  }
  func.func @transform_3(%arg0: i32) -> (i32, i32) {
    %c0_i32 = arith.constant 0 : i32
    %c0_i32_0 = arith.constant 0 : i32
    %c0_i32_1 = arith.constant 0 : i32
    return %c0_i32, %c0_i32_0 : i32, i32
  }
  func.func @transform_4(%arg0: i32) -> (i32, i32) {
    %c0_i32 = arith.constant 0 : i32
    %c0_i32_0 = arith.constant 0 : i32
    %c0_i32_1 = arith.constant 0 : i32
    return %c0_i32, %c0_i32_0 : i32, i32
  }
  func.func @transform_5(%arg0: i32) -> (i32, i32) {
    %c0_i32 = arith.constant 0 : i32
    %c0_i32_0 = arith.constant 0 : i32
    %c0_i32_1 = arith.constant 0 : i32
    return %c0_i32, %c0_i32_0 : i32, i32
  }
  func.func @transform_6(%arg0: i32) -> (i32, i32) {
    %c0_i32 = arith.constant 0 : i32
    %c0_i32_0 = arith.constant 0 : i32
    %c0_i32_1 = arith.constant 0 : i32
    return %c0_i32, %c0_i32_0 : i32, i32
  }
  func.func @transform_7(%arg0: i32) -> (i32, i32) {
    %c0_i32 = arith.constant 0 : i32
    %c0_i32_0 = arith.constant 0 : i32
    %c0_i32_1 = arith.constant 0 : i32
    return %c0_i32, %c0_i32_0 : i32, i32
  }
  func.func @transform_8(%arg0: i32) -> (i32, i32) {
    %c0_i32 = arith.constant 0 : i32
    %c0_i32_0 = arith.constant 0 : i32
    %c0_i32_1 = arith.constant 0 : i32
    return %c0_i32, %c0_i32_0 : i32, i32
  }
  func.func @transform_9(%arg0: i32) -> (i32, i32) {
    %c0_i32 = arith.constant 0 : i32
    %c0_i32_0 = arith.constant 0 : i32
    return %arg0, %c0_i32 : i32, i32
  }
}

</mosaic_0001>

<llo_original>
// kernel: tpu_custom_call.1
$region0: #{tpu_custom_call.1}
  #allocation0 [shape = 'u32[]', space=smem, size = 0x4, offset = 0x4, fixed_abs, tag = 'smem constant byte address 0x4 - core index']
  #allocation1 [shape = 'u32[144,128]{1,0:T(1,128)}', space=vmem, size = 0x12000, scoped, tag = 'internal scratch']
  %s0 = inlined_call_operand.vmem [shape: f32[256,6], index: 0, kind: input, shape index: {}]
  %s1 = inlined_call_operand.vmem [shape: bf16[6,512], index: 1, kind: input, shape index: {}]
  %s2 = inlined_call_operand.vmem [shape: f32[1,512], index: 2, kind: input, shape index: {}]
  %s3 = inlined_call_operand.hbm [shape: bf16[512,512], index: 3, kind: input, shape index: {}]
  %s4 = inlined_call_operand.vmem [shape: f32[1,512], index: 4, kind: input, shape index: {}]
  %s5 = inlined_call_operand.hbm [shape: bf16[512,512], index: 5, kind: input, shape index: {}]
  %s6 = inlined_call_operand.vmem [shape: f32[1,512], index: 6, kind: input, shape index: {}]
  %s7 = inlined_call_operand.vmem [shape: bf16[512,3], index: 7, kind: input, shape index: {}]
  %s8 = inlined_call_operand.vmem [shape: f32[1,3], index: 8, kind: input, shape index: {}]
  %s9 = inlined_call_operand.vmem [shape: f32[256,3], index: 9, kind: output, shape index: {}]
  %s10 = sld [smem:[#allocation0]]
  $region54: #{tpu_custom_call.1} parent=0
    _
  %s12 = ssub.s32 1, %s10
  %s13 = scalar_select 0, %s12, %s10
  $region1: #{tpu_custom_call.1} parent=0
    #allocation2 [shape = 'u8[524288]{0}', space=vmem, size = 0x80000, scoped, tag = 'input window, operand 3, single buffered']
    #allocation3 [shape = 's32[1]{0}', space=sflag, size = 0x4, scoped, tag = 'scoped memory for tpu_custom_call.1']
    #allocation4 [shape = 'u8[524288]{0}', space=vmem, size = 0x80000, scoped, tag = 'input window, operand 5, single buffered']
    #allocation5 [shape = 's32[1]{0}', space=sflag, size = 0x4, scoped, tag = 'scoped memory for tpu_custom_call.1']
    %14 = vsyncpa [#allocation3], 0
    %15 = vsyncpa [#allocation5], 0
    // Predicated region
    $region2: #{tpu_custom_call.1} parent=1 // pred_check
      _
    $region3: #{tpu_custom_call.1} parent=1 // pred_check_branch
      %17 = sbr.rel (0) target = $region5
    $region4: #{tpu_custom_call.1} parent=1 // pred_region
      _
    $region5: #{tpu_custom_call.1} parent=1 // pred_fallthru
      _
    // Predicated region
    $region6: #{tpu_custom_call.1} parent=1 // pred_check
      _
    $region7: #{tpu_custom_call.1} parent=1 // pred_check_branch
      %19 = sbr.rel (0) target = $region9
    $region8: #{tpu_custom_call.1} parent=1 // pred_region
      _
    $region9: #{tpu_custom_call.1} parent=1 // pred_fallthru
      _
    // Predicated region
    $region10: #{tpu_custom_call.1} parent=1 // pred_check
      _
    $region11: #{tpu_custom_call.1} parent=1 // pred_check_branch
      %21 = sbr.rel (0) target = $region13
    $region12: #{tpu_custom_call.1} parent=1 // pred_region
      _
    $region13: #{tpu_custom_call.1} parent=1 // pred_fallthru
      _
    // Predicated region
    $region14: #{tpu_custom_call.1} parent=1 // pred_check
      _
    $region15: #{tpu_custom_call.1} parent=1 // pred_check_branch
      %23 = sbr.rel (0) target = $region17
    $region16: #{tpu_custom_call.1} parent=1 // pred_region
      %s25 = ssub.s32 16384, 16384
      %26 = vsyncadd [#allocation3], %s25
      %s27 = sshll.u32 [#allocation2], 4
      %s28 = int_to_ptr.vmem [resolvable:$true] %s27
      %33 = dma.hbm_to_vmem [thread:$0]  %s3, 16384, %s28, [#allocation3], 256, 256, 16
    $region17: #{tpu_custom_call.1} parent=1 // pred_fallthru
      _
    // Predicated region
    $region18: #{tpu_custom_call.1} parent=1 // pred_check
      _
    $region19: #{tpu_custom_call.1} parent=1 // pred_check_branch
      %35 = sbr.rel (0) target = $region21
    $region20: #{tpu_custom_call.1} parent=1 // pred_region
      _
    $region21: #{tpu_custom_call.1} parent=1 // pred_fallthru
      _
    // Predicated region
    $region22: #{tpu_custom_call.1} parent=1 // pred_check
      _
    $region23: #{tpu_custom_call.1} parent=1 // pred_check_branch
      %37 = sbr.rel (0) target = $region25
    $region24: #{tpu_custom_call.1} parent=1 // pred_region
      %s39 = ssub.s32 16384, 16384
      %40 = vsyncadd [#allocation5], %s39
      %s41 = sshll.u32 [#allocation4], 4
      %s42 = int_to_ptr.vmem [resolvable:$true] %s41
      %47 = dma.hbm_to_vmem [thread:$0]  %s5, 16384, %s42, [#allocation5], 256, 256, 16
    $region25: #{tpu_custom_call.1} parent=1 // pred_fallthru
      _
    // Predicated region
    $region26: #{tpu_custom_call.1} parent=1 // pred_check
      _
    $region27: #{tpu_custom_call.1} parent=1 // pred_check_branch
      %49 = sbr.rel (0) target = $region29
    $region28: #{tpu_custom_call.1} parent=1 // pred_region
      _
    $region29: #{tpu_custom_call.1} parent=1 // pred_fallthru
      _
    // Predicated region
    $region30: #{tpu_custom_call.1} parent=1 // pred_check
      _
    $region31: #{tpu_custom_call.1} parent=1 // pred_check_branch
      %51 = sbr.rel (0) target = $region33
    $region32: #{tpu_custom_call.1} parent=1 // pred_region
      _
    $region33: #{tpu_custom_call.1} parent=1 // pred_fallthru
      _
    // Predicated region
    $region34: #{tpu_custom_call.1} parent=1 // pred_check
      _
    $region35: #{tpu_custom_call.1} parent=1 // pred_check_branch
      %53 = sbr.rel (0) target = $region37
    $region36: #{tpu_custom_call.1} parent=1 // pred_region
      _
    $region37: #{tpu_custom_call.1} parent=1 // pred_fallthru
      _
    // Predicated region
    $region38: #{tpu_custom_call.1} parent=1 // pred_check
      _
    $region39: #{tpu_custom_call.1} parent=1 // pred_check_branch
      %55 = sbr.rel (0) target = $region41
    $region40: #{tpu_custom_call.1} parent=1 // pred_region
      %56 = dma.done [#allocation3], 16384
    $region41: #{tpu_custom_call.1} parent=1 // pred_fallthru
      _
    // Predicated region
    $region42: #{tpu_custom_call.1} parent=1 // pred_check
      _
    $region43: #{tpu_custom_call.1} parent=1 // pred_check_branch
      %58 = sbr.rel (0) target = $region45
    $region44: #{tpu_custom_call.1} parent=1 // pred_region
      %59 = dma.done [#allocation5], 16384
    $region45: #{tpu_custom_call.1} parent=1 // pred_fallthru
      _
    %v61 = vld [vmem:[%s0] sm:$0xff]
    %v62 = vld [vmem:[%s0 + $0x8] sm:$0xff]
    %v63 = vld [vmem:[%s0 + $0x10] sm:$0xff]
    %v64 = vld [vmem:[%s0 + $0x18] sm:$0xff]
    %v65 = vld [vmem:[%s0 + $0x20] sm:$0xff]
    %v66 = vld [vmem:[%s0 + $0x28] sm:$0xff]
    %v67 = vld [vmem:[%s0 + $0x30] sm:$0xff]
    %v68 = vld [vmem:[%s0 + $0x38] sm:$0xff]
    %v69 = vld [vmem:[%s0 + $0x40] sm:$0xff]
    %v70 = vld [vmem:[%s0 + $0x48] sm:$0xff]
    %v71 = vld [vmem:[%s0 + $0x50] sm:$0xff]
    %v72 = vld [vmem:[%s0 + $0x58] sm:$0xff]
    %v73 = vld [vmem:[%s0 + $0x60] sm:$0xff]
    %v74 = vld [vmem:[%s0 + $0x68] sm:$0xff]
    %v75 = vld [vmem:[%s0 + $0x70] sm:$0xff]
    %v76 = vld [vmem:[%s0 + $0x78] sm:$0xff]
    %v77 = vld [vmem:[%s0 + $0x80] sm:$0xff]
    %v78 = vld [vmem:[%s0 + $0x88] sm:$0xff]
    %v79 = vld [vmem:[%s0 + $0x90] sm:$0xff]
    %v80 = vld [vmem:[%s0 + $0x98] sm:$0xff]
    %v81 = vld [vmem:[%s0 + $0xa0] sm:$0xff]
    %v82 = vld [vmem:[%s0 + $0xa8] sm:$0xff]
    %v83 = vld [vmem:[%s0 + $0xb0] sm:$0xff]
    %v84 = vld [vmem:[%s0 + $0xb8] sm:$0xff]
    %v85 = vld [vmem:[%s0 + $0xc0] sm:$0xff]
    %v86 = vld [vmem:[%s0 + $0xc8] sm:$0xff]
    %v87 = vld [vmem:[%s0 + $0xd0] sm:$0xff]
    %v88 = vld [vmem:[%s0 + $0xd8] sm:$0xff]
    %v89 = vld [vmem:[%s0 + $0xe0] sm:$0xff]
    %v90 = vld [vmem:[%s0 + $0xe8] sm:$0xff]
    %v91 = vld [vmem:[%s0 + $0xf0] sm:$0xff]
    %v92 = vld [vmem:[%s0 + $0xf8] sm:$0xff]
    %v93 = vpack.c.bf16 %v62, %v61
    %v94 = vpack.c.bf16 %v64, %v63
    %v95 = vpack.c.bf16 %v66, %v65
    %v96 = vpack.c.bf16 %v68, %v67
    %v97 = vpack.c.bf16 %v70, %v69
    %v98 = vpack.c.bf16 %v72, %v71
    %v99 = vpack.c.bf16 %v74, %v73
    %v100 = vpack.c.bf16 %v76, %v75
    %v101 = vpack.c.bf16 %v78, %v77
    %v102 = vpack.c.bf16 %v80, %v79
    %v103 = vpack.c.bf16 %v82, %v81
    %v104 = vpack.c.bf16 %v84, %v83
    %v105 = vpack.c.bf16 %v86, %v85
    %v106 = vpack.c.bf16 %v88, %v87
    %v107 = vpack.c.bf16 %v90, %v89
    %v108 = vpack.c.bf16 %v92, %v91
    %v109 = vld [vmem:[%s1] sm:$0x77]
    %v110 = vld [vmem:[%s1 + $0x8] sm:$0x77]
    %v111 = vld [vmem:[%s2] sm:$0xf]
    %v113 = vlaneseq
    %v114 = vshrl.u32 %v113, 7
    %v115 = vsub.s32 0, %v114
    %v116 = vrot.slane %v111, %v115
    %v117 = vlaneseq
    %v118 = vshrl.u32 %v117, 7
    %v119 = vsub.s32 1, %v118
    %v120 = vrot.slane %v111, %v119
    %v121 = vlaneseq
    %v122 = vshrl.u32 %v121, 7
    %v123 = vsub.s32 2, %v122
    %v124 = vrot.slane %v111, %v123
    %v125 = vlaneseq
    %v126 = vshrl.u32 %v125, 7
    %v127 = vsub.s32 3, %v126
    %v128 = vrot.slane %v111, %v127
    %v135 = vunpack.c.l.b16 %v109
    %v136 = vunpack.c.h.b16 %v109
    %v137 = vunpack.c.l.b16 %v110
    %v138 = vunpack.c.h.b16 %v110
    %v139 = vpack.c.b16 %v135, %v135
    %v140 = vpack.c.b16 %v136, %v136
    %v141 = vpack.c.b16 %v137, %v137
    %v142 = vpack.c.b16 %v138, %v138
    %vm143 = vcmask 48128
    %v145 = vsel %vm143, %v93, 0
    %v148 = vsel %vm143, %v94, 0
    %v151 = vsel %vm143, %v95, 0
    %v154 = vsel %vm143, %v96, 0
    %v157 = vsel %vm143, %v97, 0
    %v160 = vsel %vm143, %v98, 0
    %v163 = vsel %vm143, %v99, 0
    %v166 = vsel %vm143, %v100, 0
    %v169 = vsel %vm143, %v101, 0
    %v172 = vsel %vm143, %v102, 0
    %v175 = vsel %vm143, %v103, 0
    %v178 = vsel %vm143, %v104, 0
    %v181 = vsel %vm143, %v105, 0
    %v184 = vsel %vm143, %v106, 0
    %v187 = vsel %vm143, %v107, 0
    %v190 = vsel %vm143, %v108, 0
    %vm192 = vcmask 1042432
    %v194 = vsel %vm192, %v139, 0
    %v197 = vsel %vm192, %v140, 0
    %v200 = vsel %vm192, %v141, 0
    %v203 = vsel %vm192, %v142, 0
    %205 = vmatprep.subr.bf16.mxu0 %v197
    %206 = vmatpush1.bf16.msra.mxu0 %v194
    %207 = vmatprep.subr.bf16.mxu0 0
    %208 = vmatpush1.bf16.msra.mxu0 0
    %209 = vmatprep.subr.bf16.mxu0 0
    %210 = vmatpush1.bf16.msra.mxu0 0
    %211 = vmatprep.subr.bf16.mxu0 0
    %212 = vmatpush1.bf16.msra.mxu0 0
    %213 = vmatprep.subr.bf16.mxu0 0
    %214 = vmatpush1.bf16.msra.mxu0 0
    %215 = vmatprep.subr.bf16.mxu0 0
    %216 = vmatpush1.bf16.msra.mxu0 0
    %217 = vmatprep.subr.bf16.mxu0 0
    %218 = vmatpush1.bf16.msra.mxu0 0
    %219 = vmatprep.subr.bf16.mxu0 0
    %220 = vmatpush1.bf16.msra.mxu0 0
    %221 = vmatprep.subr.bf16.mxu0 0
    %222 = vmatpush1.bf16.msra.mxu0 0
    %223 = vmatprep.subr.bf16.mxu0 0
    %224 = vmatpush1.bf16.msra.mxu0 0
    %225 = vmatprep.subr.bf16.mxu0 0
    %226 = vmatpush1.bf16.msra.mxu0 0
    %227 = vmatprep.subr.bf16.mxu0 0
    %228 = vmatpush1.bf16.msra.mxu0 0
    %229 = vmatprep.subr.bf16.mxu0 0
    %230 = vmatpush1.bf16.msra.mxu0 0
    %231 = vmatprep.subr.bf16.mxu0 0
    %232 = vmatpush1.bf16.msra.mxu0 0
    %233 = vmatprep.subr.bf16.mxu0 0
    %234 = vmatpush1.bf16.msra.mxu0 0
    %235 = vmatprep.subr.bf16.mxu0 0
    %236 = vmatpush1.bf16.msra.mxu0 0
    %237 = vmatprep.mubr.bf16.mxu0 0
    %238 = vmatmul.mubr.bf16.gmra.mrb[0].mxu0 %v145
    %v239 = vpop.f32.mrb[0].mxu0
    %v240 = vadd.f32 %v116, %v239
    %v241 = vpop.f32.mrb[0].mxu0
    %v242 = vadd.f32 %v120, %v241
    %v243 = vpop.f32.mrb[0].mxu0
    %v244 = vadd.f32 %v116, %v243
    %v245 = vpop.f32.mrb[0].mxu0
    %v246 = vadd.f32 %v120, %v245
    %247 = vmatprep.mubr.bf16.mxu0 0
    %248 = vmatmul.mubr.bf16.gmra.mrb[0].mxu0 %v148
    %v249 = vpop.f32.mrb[0].mxu0
    %v250 = vadd.f32 %v116, %v249
    %v251 = vpop.f32.mrb[0].mxu0
    %v252 = vadd.f32 %v120, %v251
    %v253 = vpop.f32.mrb[0].mxu0
    %v254 = vadd.f32 %v116, %v253
    %v255 = vpop.f32.mrb[0].mxu0
    %v256 = vadd.f32 %v120, %v255
    %257 = vmatprep.mubr.bf16.mxu0 0
    %258 = vmatmul.mubr.bf16.gmra.mrb[0].mxu0 %v151
    %v259 = vpop.f32.mrb[0].mxu0
    %v260 = vadd.f32 %v116, %v259
    %v261 = vpop.f32.mrb[0].mxu0
    %v262 = vadd.f32 %v120, %v261
    %v263 = vpop.f32.mrb[0].mxu0
    %v264 = vadd.f32 %v116, %v263
    %v265 = vpop.f32.mrb[0].mxu0
    %v266 = vadd.f32 %v120, %v265
    %267 = vmatprep.mubr.bf16.mxu0 0
    %268 = vmatmul.mubr.bf16.gmra.mrb[0].mxu0 %v154
    %v269 = vpop.f32.mrb[0].mxu0
    %v270 = vadd.f32 %v116, %v269
    %v271 = vpop.f32.mrb[0].mxu0
    %v272 = vadd.f32 %v120, %v271
    %v273 = vpop.f32.mrb[0].mxu0
    %v274 = vadd.f32 %v116, %v273
    %v275 = vpop.f32.mrb[0].mxu0
    %v276 = vadd.f32 %v120, %v275
    %277 = vmatprep.mubr.bf16.mxu0 0
    %278 = vmatmul.mubr.bf16.gmra.mrb[0].mxu0 %v157
    %v279 = vpop.f32.mrb[0].mxu0
    %v280 = vadd.f32 %v116, %v279
    %v281 = vpop.f32.mrb[0].mxu0
    %v282 = vadd.f32 %v120, %v281
    %v283 = vpop.f32.mrb[0].mxu0
    %v284 = vadd.f32 %v116, %v283
    %v285 = vpop.f32.mrb[0].mxu0
    %v286 = vadd.f32 %v120, %v285
    %287 = vmatprep.mubr.bf16.mxu0 0
    %288 = vmatmul.mubr.bf16.gmra.mrb[0].mxu0 %v160
    %v289 = vpop.f32.mrb[0].mxu0
    %v290 = vadd.f32 %v116, %v289
    %v291 = vpop.f32.mrb[0].mxu0
    %v292 = vadd.f32 %v120, %v291
    %v293 = vpop.f32.mrb[0].mxu0
    %v294 = vadd.f32 %v116, %v293
    %v295 = vpop.f32.mrb[0].mxu0
    %v296 = vadd.f32 %v120, %v295
    %297 = vmatprep.mubr.bf16.mxu0 0
    %298 = vmatmul.mubr.bf16.gmra.mrb[0].mxu0 %v163
    %v299 = vpop.f32.mrb[0].mxu0
    %v300 = vadd.f32 %v116, %v299
    %v301 = vpop.f32.mrb[0].mxu0
    %v302 = vadd.f32 %v120, %v301
    %v303 = vpop.f32.mrb[0].mxu0
    %v304 = vadd.f32 %v116, %v303
    %v305 = vpop.f32.mrb[0].mxu0
    %v306 = vadd.f32 %v120, %v305
    %307 = vmatprep.mubr.bf16.mxu0 0
    %308 = vmatmul.mubr.bf16.gmra.mrb[0].mxu0 %v166
    %v309 = vpop.f32.mrb[0].mxu0
    %v310 = vadd.f32 %v116, %v309
    %v311 = vpop.f32.mrb[0].mxu0
    %v312 = vadd.f32 %v120, %v311
    %v313 = vpop.f32.mrb[0].mxu0
    %v314 = vadd.f32 %v116, %v313
    %v315 = vpop.f32.mrb[0].mxu0
    %v316 = vadd.f32 %v120, %v315
    %317 = vmatprep.mubr.bf16.mxu0 0
    %318 = vmatmul.mubr.bf16.gmra.mrb[0].mxu0 %v169
    %v319 = vpop.f32.mrb[0].mxu0
    %v320 = vadd.f32 %v116, %v319
    %v321 = vpop.f32.mrb[0].mxu0
    %v322 = vadd.f32 %v120, %v321
    %v323 = vpop.f32.mrb[0].mxu0
    %v324 = vadd.f32 %v116, %v323
    %v325 = vpop.f32.mrb[0].mxu0
    %v326 = vadd.f32 %v120, %v325
    %327 = vmatprep.mubr.bf16.mxu0 0
    %328 = vmatmul.mubr.bf16.gmra.mrb[0].mxu0 %v172
    %v329 = vpop.f32.mrb[0].mxu0
    %v330 = vadd.f32 %v116, %v329
    %v331 = vpop.f32.mrb[0].mxu0
    %v332 = vadd.f32 %v120, %v331
    %v333 = vpop.f32.mrb[0].mxu0
    %v334 = vadd.f32 %v116, %v333
    %v335 = vpop.f32.mrb[0].mxu0
    %v336 = vadd.f32 %v120, %v335
    %337 = vmatprep.mubr.bf16.mxu0 0
    %338 = vmatmul.mubr.bf16.gmra.mrb[0].mxu0 %v175
    %v339 = vpop.f32.mrb[0].mxu0
    %v340 = vadd.f32 %v116, %v339
    %v341 = vpop.f32.mrb[0].mxu0
    %v342 = vadd.f32 %v120, %v341
    %v343 = vpop.f32.mrb[0].mxu0
    %v344 = vadd.f32 %v116, %v343
    %v345 = vpop.f32.mrb[0].mxu0
    %v346 = vadd.f32 %v120, %v345
    %347 = vmatprep.mubr.bf16.mxu0 0
    %348 = vmatmul.mubr.bf16.gmra.mrb[0].mxu0 %v178
    %v349 = vpop.f32.mrb[0].mxu0
    %v350 = vadd.f32 %v116, %v349
    %v351 = vpop.f32.mrb[0].mxu0
    %v352 = vadd.f32 %v120, %v351
    %v353 = vpop.f32.mrb[0].mxu0
    %v354 = vadd.f32 %v116, %v353
    %v355 = vpop.f32.mrb[0].mxu0
    %v356 = vadd.f32 %v120, %v355
    %357 = vmatprep.mubr.bf16.mxu0 0
    %358 = vmatmul.mubr.bf16.gmra.mrb[0].mxu0 %v181
    %v359 = vpop.f32.mrb[0].mxu0
    %v360 = vadd.f32 %v116, %v359
    %v361 = vpop.f32.mrb[0].mxu0
    %v362 = vadd.f32 %v120, %v361
    %v363 = vpop.f32.mrb[0].mxu0
    %v364 = vadd.f32 %v116, %v363
    %v365 = vpop.f32.mrb[0].mxu0
    %v366 = vadd.f32 %v120, %v365
    %367 = vmatprep.mubr.bf16.mxu0 0
    %368 = vmatmul.mubr.bf16.gmra.mrb[0].mxu0 %v184
    %v369 = vpop.f32.mrb[0].mxu0
    %v370 = vadd.f32 %v116, %v369
    %v371 = vpop.f32.mrb[0].mxu0
    %v372 = vadd.f32 %v120, %v371
    %v373 = vpop.f32.mrb[0].mxu0
    %v374 = vadd.f32 %v116, %v373
    %v375 = vpop.f32.mrb[0].mxu0
    %v376 = vadd.f32 %v120, %v375
    %377 = vmatprep.mubr.bf16.mxu0 0
    %378 = vmatmul.mubr.bf16.gmra.mrb[0].mxu0 %v187
    %v379 = vpop.f32.mrb[0].mxu0
    %v380 = vadd.f32 %v116, %v379
    %v381 = vpop.f32.mrb[0].mxu0
    %v382 = vadd.f32 %v120, %v381
    %v383 = vpop.f32.mrb[0].mxu0
    %v384 = vadd.f32 %v116, %v383
    %v385 = vpop.f32.mrb[0].mxu0
    %v386 = vadd.f32 %v120, %v385
    %387 = vmatprep.mubr.bf16.mxu0 0
    %388 = vmatmul.mubr.bf16.gmra.mrb[0].mxu0 %v190
    %v389 = vpop.f32.mrb[0].mxu0
    %v390 = vadd.f32 %v116, %v389
    %v391 = vpop.f32.mrb[0].mxu0
    %v392 = vadd.f32 %v120, %v391
    %v393 = vpop.f32.mrb[0].mxu0
    %v394 = vadd.f32 %v116, %v393
    %v395 = vpop.f32.mrb[0].mxu0
    %v396 = vadd.f32 %v120, %v395
    %397 = vdwg.mxu0
    %398 = vmatprep.subr.bf16.mxu0 %v203
    %399 = vmatpush1.bf16.msra.mxu0 %v200
    %400 = vmatprep.subr.bf16.mxu0 0
    %401 = vmatpush1.bf16.msra.mxu0 0
    %402 = vmatprep.subr.bf16.mxu0 0
    %403 = vmatpush1.bf16.msra.mxu0 0
    %404 = vmatprep.subr.bf16.mxu0 0
    %405 = vmatpush1.bf16.msra.mxu0 0
    %406 = vmatprep.subr.bf16.mxu0 0
    %407 = vmatpush1.bf16.msra.mxu0 0
    %408 = vmatprep.subr.bf16.mxu0 0
    %409 = vmatpush1.bf16.msra.mxu0 0
    %410 = vmatprep.subr.bf16.mxu0 0
    %411 = vmatpush1.bf16.msra.mxu0 0
    %412 = vmatprep.subr.bf16.mxu0 0
    %413 = vmatpush1.bf16.msra.mxu0 0
    %414 = vmatprep.subr.bf16.mxu0 0
    %415 = vmatpush1.bf16.msra.mxu0 0
    %416 = vmatprep.subr.bf16.mxu0 0
    %417 = vmatpush1.bf16.msra.mxu0 0
    %418 = vmatprep.subr.bf16.mxu0 0
    %419 = vmatpush1.bf16.msra.mxu0 0
    %420 = vmatprep.subr.bf16.mxu0 0
    %421 = vmatpush1.bf16.msra.mxu0 0
    %422 = vmatprep.subr.bf16.mxu0 0
    %423 = vmatpush1.bf16.msra.mxu0 0
    %424 = vmatprep.subr.bf16.mxu0 0
    %425 = vmatpush1.bf16.msra.mxu0 0
    %426 = vmatprep.subr.bf16.mxu0 0
    %427 = vmatpush1.bf16.msra.mxu0 0
    %428 = vmatprep.subr.bf16.mxu0 0
    %429 = vmatpush1.bf16.msra.mxu0 0
    %430 = vmatprep.mubr.bf16.mxu0 0
    %431 = vmatmul.mubr.bf16.gmra.mrb[0].mxu0 %v145
    %v432 = vpop.f32.mrb[0].mxu0
    %v433 = vadd.f32 %v124, %v432
    %v434 = vpop.f32.mrb[0].mxu0
    %v435 = vadd.f32 %v128, %v434
    %v436 = vpop.f32.mrb[0].mxu0
    %v437 = vadd.f32 %v124, %v436
    %v438 = vpop.f32.mrb[0].mxu0
    %v439 = vadd.f32 %v128, %v438
    %440 = vmatprep.mubr.bf16.mxu0 0
    %441 = vmatmul.mubr.bf16.gmra.mrb[0].mxu0 %v148
    %v442 = vpop.f32.mrb[0].mxu0
    %v443 = vadd.f32 %v124, %v442
    %v444 = vpop.f32.mrb[0].mxu0
    %v445 = vadd.f32 %v128, %v444
    %v446 = vpop.f32.mrb[0].mxu0
    %v447 = vadd.f32 %v124, %v446
    %v448 = vpop.f32.mrb[0].mxu0
    %v449 = vadd.f32 %v128, %v448
    %450 = vmatprep.mubr.bf16.mxu0 0
    %451 = vmatmul.mubr.bf16.gmra.mrb[0].mxu0 %v151
    %v452 = vpop.f32.mrb[0].mxu0
    %v453 = vadd.f32 %v124, %v452
    %v454 = vpop.f32.mrb[0].mxu0
    %v455 = vadd.f32 %v128, %v454
    %v456 = vpop.f32.mrb[0].mxu0
    %v457 = vadd.f32 %v124, %v456
    %v458 = vpop.f32.mrb[0].mxu0
    %v459 = vadd.f32 %v128, %v458
    %460 = vmatprep.mubr.bf16.mxu0 0
    %461 = vmatmul.mubr.bf16.gmra.mrb[0].mxu0 %v154
    %v462 = vpop.f32.mrb[0].mxu0
    %v463 = vadd.f32 %v124, %v462
    %v464 = vpop.f32.mrb[0].mxu0
    %v465 = vadd.f32 %v128, %v464
    %v466 = vpop.f32.mrb[0].mxu0
    %v467 = vadd.f32 %v124, %v466
    %v468 = vpop.f32.mrb[0].mxu0
    %v469 = vadd.f32 %v128, %v468
    %470 = vmatprep.mubr.bf16.mxu0 0
    %471 = vmatmul.mubr.bf16.gmra.mrb[0].mxu0 %v157
    %v472 = vpop.f32.mrb[0].mxu0
    %v473 = vadd.f32 %v124, %v472
    %v474 = vpop.f32.mrb[0].mxu0
    %v475 = vadd.f32 %v128, %v474
    %v476 = vpop.f32.mrb[0].mxu0
    %v477 = vadd.f32 %v124, %v476
    %v478 = vpop.f32.mrb[0].mxu0
    %v479 = vadd.f32 %v128, %v478
    %480 = vmatprep.mubr.bf16.mxu0 0
    %481 = vmatmul.mubr.bf16.gmra.mrb[0].mxu0 %v160
    %v482 = vpop.f32.mrb[0].mxu0
    %v483 = vadd.f32 %v124, %v482
    %v484 = vpop.f32.mrb[0].mxu0
    %v485 = vadd.f32 %v128, %v484
    %v486 = vpop.f32.mrb[0].mxu0
    %v487 = vadd.f32 %v124, %v486
    %v488 = vpop.f32.mrb[0].mxu0
    %v489 = vadd.f32 %v128, %v488
    %490 = vmatprep.mubr.bf16.mxu0 0
    %491 = vmatmul.mubr.bf16.gmra.mrb[0].mxu0 %v163
    %v492 = vpop.f32.mrb[0].mxu0
    %v493 = vadd.f32 %v124, %v492
    %v494 = vpop.f32.mrb[0].mxu0
    %v495 = vadd.f32 %v128, %v494
    %v496 = vpop.f32.mrb[0].mxu0
    %v497 = vadd.f32 %v124, %v496
    %v498 = vpop.f32.mrb[0].mxu0
    %v499 = vadd.f32 %v128, %v498
    %500 = vmatprep.mubr.bf16.mxu0 0
    %501 = vmatmul.mubr.bf16.gmra.mrb[0].mxu0 %v166
    %v502 = vpop.f32.mrb[0].mxu0
    %v503 = vadd.f32 %v124, %v502
    %v504 = vpop.f32.mrb[0].mxu0
    %v505 = vadd.f32 %v128, %v504
    %v506 = vpop.f32.mrb[0].mxu0
    %v507 = vadd.f32 %v124, %v506
    %v508 = vpop.f32.mrb[0].mxu0
    %v509 = vadd.f32 %v128, %v508
    %510 = vmatprep.mubr.bf16.mxu0 0
    %511 = vmatmul.mubr.bf16.gmra.mrb[0].mxu0 %v169
    %v512 = vpop.f32.mrb[0].mxu0
    %v513 = vadd.f32 %v124, %v512
    %v514 = vpop.f32.mrb[0].mxu0
    %v515 = vadd.f32 %v128, %v514
    %v516 = vpop.f32.mrb[0].mxu0
    %v517 = vadd.f32 %v124, %v516
    %v518 = vpop.f32.mrb[0].mxu0
    %v519 = vadd.f32 %v128, %v518
    %520 = vmatprep.mubr.bf16.mxu0 0
    %521 = vmatmul.mubr.bf16.gmra.mrb[0].mxu0 %v172
    %v522 = vpop.f32.mrb[0].mxu0
    %v523 = vadd.f32 %v124, %v522
    %v524 = vpop.f32.mrb[0].mxu0
    %v525 = vadd.f32 %v128, %v524
    %v526 = vpop.f32.mrb[0].mxu0
    %v527 = vadd.f32 %v124, %v526
    %v528 = vpop.f32.mrb[0].mxu0
    %v529 = vadd.f32 %v128, %v528
    %530 = vmatprep.mubr.bf16.mxu0 0
    %531 = vmatmul.mubr.bf16.gmra.mrb[0].mxu0 %v175
    %v532 = vpop.f32.mrb[0].mxu0
    %v533 = vadd.f32 %v124, %v532
    %v534 = vpop.f32.mrb[0].mxu0
    %v535 = vadd.f32 %v128, %v534
    %v536 = vpop.f32.mrb[0].mxu0
    %v537 = vadd.f32 %v124, %v536
    %v538 = vpop.f32.mrb[0].mxu0
    %v539 = vadd.f32 %v128, %v538
    %540 = vmatprep.mubr.bf16.mxu0 0
    %541 = vmatmul.mubr.bf16.gmra.mrb[0].mxu0 %v178
    %v542 = vpop.f32.mrb[0].mxu0
    %v543 = vadd.f32 %v124, %v542
    %v544 = vpop.f32.mrb[0].mxu0
    %v545 = vadd.f32 %v128, %v544
    %v546 = vpop.f32.mrb[0].mxu0
    %v547 = vadd.f32 %v124, %v546
    %v548 = vpop.f32.mrb[0].mxu0
    %v549 = vadd.f32 %v128, %v548
    %550 = vmatprep.mubr.bf16.mxu0 0
    %551 = vmatmul.mubr.bf16.gmra.mrb[0].mxu0 %v181
    %v552 = vpop.f32.mrb[0].mxu0
    %v553 = vadd.f32 %v124, %v552
    %v554 = vpop.f32.mrb[0].mxu0
    %v555 = vadd.f32 %v128, %v554
    %v556 = vpop.f32.mrb[0].mxu0
    %v557 = vadd.f32 %v124, %v556
    %v558 = vpop.f32.mrb[0].mxu0
    %v559 = vadd.f32 %v128, %v558
    %560 = vmatprep.mubr.bf16.mxu0 0
    %561 = vmatmul.mubr.bf16.gmra.mrb[0].mxu0 %v184
    %v562 = vpop.f32.mrb[0].mxu0
    %v563 = vadd.f32 %v124, %v562
    %v564 = vpop.f32.mrb[0].mxu0
    %v565 = vadd.f32 %v128, %v564
    %v566 = vpop.f32.mrb[0].mxu0
    %v567 = vadd.f32 %v124, %v566
    %v568 = vpop.f32.mrb[0].mxu0
    %v569 = vadd.f32 %v128, %v568
    %570 = vmatprep.mubr.bf16.mxu0 0
    %571 = vmatmul.mubr.bf16.gmra.mrb[0].mxu0 %v187
    %v572 = vpop.f32.mrb[0].mxu0
    %v573 = vadd.f32 %v124, %v572
    %v574 = vpop.f32.mrb[0].mxu0
    %v575 = vadd.f32 %v128, %v574
    %v576 = vpop.f32.mrb[0].mxu0
    %v577 = vadd.f32 %v124, %v576
    %v578 = vpop.f32.mrb[0].mxu0
    %v579 = vadd.f32 %v128, %v578
    %580 = vmatprep.mubr.bf16.mxu0 0
    %581 = vmatmul.mubr.bf16.gmra.mrb[0].mxu0 %v190
    %v582 = vpop.f32.mrb[0].mxu0
    %v583 = vadd.f32 %v124, %v582
    %v584 = vpop.f32.mrb[0].mxu0
    %v585 = vadd.f32 %v128, %v584
    %v586 = vpop.f32.mrb[0].mxu0
    %v587 = vadd.f32 %v124, %v586
    %v588 = vpop.f32.mrb[0].mxu0
    %v589 = vadd.f32 %v128, %v588
    %590 = vdwg.mxu0
    %v591 = vmax.f32 %v240, 0.0
    %v592 = vmax.f32 %v242, 0.0
    %v593 = vmax.f32 %v433, 0.0
    %v594 = vmax.f32 %v435, 0.0
    %v595 = vmax.f32 %v244, 0.0
    %v596 = vmax.f32 %v246, 0.0
    %v597 = vmax.f32 %v437, 0.0
    %v598 = vmax.f32 %v439, 0.0
    %v599 = vmax.f32 %v250, 0.0
    %v600 = vmax.f32 %v252, 0.0
    %v601 = vmax.f32 %v443, 0.0
    %v602 = vmax.f32 %v445, 0.0
    %v603 = vmax.f32 %v254, 0.0
    %v604 = vmax.f32 %v256, 0.0
    %v605 = vmax.f32 %v447, 0.0
    %v606 = vmax.f32 %v449, 0.0
    %v607 = vmax.f32 %v260, 0.0
    %v608 = vmax.f32 %v262, 0.0
    %v609 = vmax.f32 %v453, 0.0
    %v610 = vmax.f32 %v455, 0.0
    %v611 = vmax.f32 %v264, 0.0
    %v612 = vmax.f32 %v266, 0.0
    %v613 = vmax.f32 %v457, 0.0
    %v614 = vmax.f32 %v459, 0.0
    %v615 = vmax.f32 %v270, 0.0
    %v616 = vmax.f32 %v272, 0.0
    %v617 = vmax.f32 %v463, 0.0
    %v618 = vmax.f32 %v465, 0.0
    %v619 = vmax.f32 %v274, 0.0
    %v620 = vmax.f32 %v276, 0.0
    %v621 = vmax.f32 %v467, 0.0
    %v622 = vmax.f32 %v469, 0.0
    %v623 = vmax.f32 %v280, 0.0
    %v624 = vmax.f32 %v282, 0.0
    %v625 = vmax.f32 %v473, 0.0
    %v626 = vmax.f32 %v475, 0.0
    %v627 = vmax.f32 %v284, 0.0
    %v628 = vmax.f32 %v286, 0.0
    %v629 = vmax.f32 %v477, 0.0
    %v630 = vmax.f32 %v479, 0.0
    %v631 = vmax.f32 %v290, 0.0
    %v632 = vmax.f32 %v292, 0.0
    %v633 = vmax.f32 %v483, 0.0
    %v634 = vmax.f32 %v485, 0.0
    %v635 = vmax.f32 %v294, 0.0
    %v636 = vmax.f32 %v296, 0.0
    %v637 = vmax.f32 %v487, 0.0
    %v638 = vmax.f32 %v489, 0.0
    %v639 = vmax.f32 %v300, 0.0
    %v640 = vmax.f32 %v302, 0.0
    %v641 = vmax.f32 %v493, 0.0
    %v642 = vmax.f32 %v495, 0.0
    %v643 = vmax.f32 %v304, 0.0
    %v644 = vmax.f32 %v306, 0.0
    %v645 = vmax.f32 %v497, 0.0
    %v646 = vmax.f32 %v499, 0.0
    %v647 = vmax.f32 %v310, 0.0
    %v648 = vmax.f32 %v312, 0.0
    %v649 = vmax.f32 %v503, 0.0
    %v650 = vmax.f32 %v505, 0.0
    %v651 = vmax.f32 %v314, 0.0
    %v652 = vmax.f32 %v316, 0.0
    %v653 = vmax.f32 %v507, 0.0
    %v654 = vmax.f32 %v509, 0.0
    %v655 = vmax.f32 %v320, 0.0
    %v656 = vmax.f32 %v322, 0.0
    %v657 = vmax.f32 %v513, 0.0
    %v658 = vmax.f32 %v515, 0.0
    %v659 = vmax.f32 %v324, 0.0
    %v660 = vmax.f32 %v326, 0.0
    %v661 = vmax.f32 %v517, 0.0
    %v662 = vmax.f32 %v519, 0.0
    %v663 = vmax.f32 %v330, 0.0
    %v664 = vmax.f32 %v332, 0.0
    %v665 = vmax.f32 %v523, 0.0
    %v666 = vmax.f32 %v525, 0.0
    %v667 = vmax.f32 %v334, 0.0
    %v668 = vmax.f32 %v336, 0.0
    %v669 = vmax.f32 %v527, 0.0
    %v670 = vmax.f32 %v529, 0.0
    %v671 = vmax.f32 %v340, 0.0
    %v672 = vmax.f32 %v342, 0.0
    %v673 = vmax.f32 %v533, 0.0
    %v674 = vmax.f32 %v535, 0.0
    %v675 = vmax.f32 %v344, 0.0
    %v676 = vmax.f32 %v346, 0.0
    %v677 = vmax.f32 %v537, 0.0
    %v678 = vmax.f32 %v539, 0.0
    %v679 = vmax.f32 %v350, 0.0
    %v680 = vmax.f32 %v352, 0.0
    %v681 = vmax.f32 %v543, 0.0
    %v682 = vmax.f32 %v545, 0.0
    %v683 = vmax.f32 %v354, 0.0
    %v684 = vmax.f32 %v356, 0.0
    %v685 = vmax.f32 %v547, 0.0
    %v686 = vmax.f32 %v549, 0.0
    %v687 = vmax.f32 %v360, 0.0
    %v688 = vmax.f32 %v362, 0.0
    %v689 = vmax.f32 %v553, 0.0
    %v690 = vmax.f32 %v555, 0.0
    %v691 = vmax.f32 %v364, 0.0
    %v692 = vmax.f32 %v366, 0.0
    %v693 = vmax.f32 %v557, 0.0
    %v694 = vmax.f32 %v559, 0.0
    %v695 = vmax.f32 %v370, 0.0
    %v696 = vmax.f32 %v372, 0.0
    %v697 = vmax.f32 %v563, 0.0
    %v698 = vmax.f32 %v565, 0.0
    %v699 = vmax.f32 %v374, 0.0
    %v700 = vmax.f32 %v376, 0.0
    %v701 = vmax.f32 %v567, 0.0
    %v702 = vmax.f32 %v569, 0.0
    %v703 = vmax.f32 %v380, 0.0
    %v704 = vmax.f32 %v382, 0.0
    %v705 = vmax.f32 %v573, 0.0
    %v706 = vmax.f32 %v575, 0.0
    %v707 = vmax.f32 %v384, 0.0
    %v708 = vmax.f32 %v386, 0.0
    %v709 = vmax.f32 %v577, 0.0
    %v710 = vmax.f32 %v579, 0.0
    %v711 = vmax.f32 %v390, 0.0
    %v712 = vmax.f32 %v392, 0.0
    %v713 = vmax.f32 %v583, 0.0
    %v714 = vmax.f32 %v585, 0.0
    %v715 = vmax.f32 %v394, 0.0
    %v716 = vmax.f32 %v396, 0.0
    %v717 = vmax.f32 %v587, 0.0
    %v718 = vmax.f32 %v589, 0.0
    %v719 = vpack.c.bf16 %v595, %v591
    %v720 = vpack.c.bf16 %v596, %v592
    %v721 = vpack.c.bf16 %v597, %v593
    %v722 = vpack.c.bf16 %v598, %v594
    %v723 = vpack.c.bf16 %v603, %v599
    %v724 = vpack.c.bf16 %v604, %v600
    %v725 = vpack.c.bf16 %v605, %v601
    %v726 = vpack.c.bf16 %v606, %v602
    %v727 = vpack.c.bf16 %v611, %v607
    %v728 = vpack.c.bf16 %v612, %v608
    %v729 = vpack.c.bf16 %v613, %v609
    %v730 = vpack.c.bf16 %v614, %v610
    %v731 = vpack.c.bf16 %v619, %v615
    %v732 = vpack.c.bf16 %v620, %v616
    %v733 = vpack.c.bf16 %v621, %v617
    %v734 = vpack.c.bf16 %v622, %v618
    %v735 = vpack.c.bf16 %v627, %v623
    %v736 = vpack.c.bf16 %v628, %v624
    %v737 = vpack.c.bf16 %v629, %v625
    %v738 = vpack.c.bf16 %v630, %v626
    %v739 = vpack.c.bf16 %v635, %v631
    %v740 = vpack.c.bf16 %v636, %v632
    %v741 = vpack.c.bf16 %v637, %v633
    %v742 = vpack.c.bf16 %v638, %v634
    %v743 = vpack.c.bf16 %v643, %v639
    %v744 = vpack.c.bf16 %v644, %v640
    %v745 = vpack.c.bf16 %v645, %v641
    %v746 = vpack.c.bf16 %v646, %v642
    %v747 = vpack.c.bf16 %v651, %v647
    %v748 = vpack.c.bf16 %v652, %v648
    %v749 = vpack.c.bf16 %v653, %v649
    %v750 = vpack.c.bf16 %v654, %v650
    %v751 = vpack.c.bf16 %v659, %v655
    %v752 = vpack.c.bf16 %v660, %v656
    %v753 = vpack.c.bf16 %v661, %v657
    %v754 = vpack.c.bf16 %v662, %v658
    %v755 = vpack.c.bf16 %v667, %v663
    %v756 = vpack.c.bf16 %v668, %v664
    %v757 = vpack.c.bf16 %v669, %v665
    %v758 = vpack.c.bf16 %v670, %v666
    %v759 = vpack.c.bf16 %v675, %v671
    %v760 = vpack.c.bf16 %v676, %v672
    %v761 = vpack.c.bf16 %v677, %v673
    %v762 = vpack.c.bf16 %v678, %v674
    %v763 = vpack.c.bf16 %v683, %v679
    %v764 = vpack.c.bf16 %v684, %v680
    %v765 = vpack.c.bf16 %v685, %v681
    %v766 = vpack.c.bf16 %v686, %v682
    %v767 = vpack.c.bf16 %v691, %v687
    %v768 = vpack.c.bf16 %v692, %v688
    %v769 = vpack.c.bf16 %v693, %v689
    %v770 = vpack.c.bf16 %v694, %v690
    %v771 = vpack.c.bf16 %v699, %v695
    %v772 = vpack.c.bf16 %v700, %v696
    %v773 = vpack.c.bf16 %v701, %v697
    %v774 = vpack.c.bf16 %v702, %v698
    %v775 = vpack.c.bf16 %v707, %v703
    %v776 = vpack.c.bf16 %v708, %v704
    %v777 = vpack.c.bf16 %v709, %v705
    %v778 = vpack.c.bf16 %v710, %v706
    %v779 = vpack.c.bf16 %v715, %v711
    %v780 = vpack.c.bf16 %v716, %v712
    %v781 = vpack.c.bf16 %v717, %v713
    %v782 = vpack.c.bf16 %v718, %v714
    %v783 = vld [vmem:[#allocation2] sm:$0xff]
    %v784 = vld [vmem:[#allocation2 + $0x8] sm:$0xff]
    %v785 = vld [vmem:[#allocation2 + $0x10] sm:$0xff]
    %v786 = vld [vmem:[#allocation2 + $0x18] sm:$0xff]
    %v787 = vld [vmem:[#allocation2 + $0x20] sm:$0xff]
    %v788 = vld [vmem:[#allocation2 + $0x28] sm:$0xff]
    %v789 = vld [vmem:[#allocation2 + $0x30] sm:$0xff]
    %v790 = vld [vmem:[#allocation2 + $0x38] sm:$0xff]
    %v791 = vld [vmem:[#allocation2 + $0x40] sm:$0xff]
    %v792 = vld [vmem:[#allocation2 + $0x48] sm:$0xff]
    %v793 = vld [vmem:[#allocation2 + $0x50] sm:$0xff]
    %v794 = vld [vmem:[#allocation2 + $0x58] sm:$0xff]
    %v795 = vld [vmem:[#allocation2 + $0x60] sm:$0xff]
    %v796 = vld [vmem:[#allocation2 + $0x68] sm:$0xff]
    %v797 = vld [vmem:[#allocation2 + $0x70] sm:$0xff]
    %v798 = vld [vmem:[#allocation2 + $0x78] sm:$0xff]
    %v799 = vld [vmem:[#allocation2 + $0x80] sm:$0xff]
    %v800 = vld [vmem:[#allocation2 + $0x88] sm:$0xff]
    %v801 = vld [vmem:[#allocation2 + $0x90] sm:$0xff]
    %v802 = vld [vmem:[#allocation2 + $0x98] sm:$0xff]
    %v803 = vld [vmem:[#allocation2 + $0xa0] sm:$0xff]
    %v804 = vld [vmem:[#allocation2 + $0xa8] sm:$0xff]
    %v805 = vld [vmem:[#allocation2 + $0xb0] sm:$0xff]
    %v806 = vld [vmem:[#allocation2 + $0xb8] sm:$0xff]
    %v807 = vld [vmem:[#allocation2 + $0xc0] sm:$0xff]
    %v808 = vld [vmem:[#allocation2 + $0xc8] sm:$0xff]
    %v809 = vld [vmem:[#allocation2 + $0xd0] sm:$0xff]
    %v810 = vld [vmem:[#allocation2 + $0xd8] sm:$0xff]
    %v811 = vld [vmem:[#allocation2 + $0xe0] sm:$0xff]
    %v812 = vld [vmem:[#allocation2 + $0xe8] sm:$0xff]
    %v813 = vld [vmem:[#allocation2 + $0xf0] sm:$0xff]
    %v814 = vld [vmem:[#allocation2 + $0xf8] sm:$0xff]
    %v815 = vld [vmem:[#allocation2 + $0x100] sm:$0xff]
    %v816 = vld [vmem:[#allocation2 + $0x108] sm:$0xff]
    %v817 = vld [vmem:[#allocation2 + $0x110] sm:$0xff]
    %v818 = vld [vmem:[#allocation2 + $0x118] sm:$0xff]
    %v819 = vld [vmem:[#allocation2 + $0x120] sm:$0xff]
    %v820 = vld [vmem:[#allocation2 + $0x128] sm:$0xff]
    %v821 = vld [vmem:[#allocation2 + $0x130] sm:$0xff]
    %v822 = vld [vmem:[#allocation2 + $0x138] sm:$0xff]
    %v823 = vld [vmem:[#allocation2 + $0x140] sm:$0xff]
    %v824 = vld [vmem:[#allocation2 + $0x148] sm:$0xff]
    %v825 = vld [vmem:[#allocation2 + $0x150] sm:$0xff]
    %v826 = vld [vmem:[#allocation2 + $0x158] sm:$0xff]
    %v827 = vld [vmem:[#allocation2 + $0x160] sm:$0xff]
    %v828 = vld [vmem:[#allocation2 + $0x168] sm:$0xff]
    %v829 = vld [vmem:[#allocation2 + $0x170] sm:$0xff]
    %v830 = vld [vmem:[#allocation2 + $0x178] sm:$0xff]
    %v831 = vld [vmem:[#allocation2 + $0x180] sm:$0xff]
    %v832 = vld [vmem:[#allocation2 + $0x188] sm:$0xff]
    %v833 = vld [vmem:[#allocation2 + $0x190] sm:$0xff]
    %v834 = vld [vmem:[#allocation2 + $0x198] sm:$0xff]
    %v835 = vld [vmem:[#allocation2 + $0x1a0] sm:$0xff]
    %v836 = vld [vmem:[#allocation2 + $0x1a8] sm:$0xff]
    %v837 = vld [vmem:[#allocation2 + $0x1b0] sm:$0xff]
    %v838 = vld [vmem:[#allocation2 + $0x1b8] sm:$0xff]
    %v839 = vld [vmem:[#allocation2 + $0x1c0] sm:$0xff]
    %v840 = vld [vmem:[#allocation2 + $0x1c8] sm:$0xff]
    %v841 = vld [vmem:[#allocation2 + $0x1d0] sm:$0xff]
    %v842 = vld [vmem:[#allocation2 + $0x1d8] sm:$0xff]
    %v843 = vld [vmem:[#allocation2 + $0x1e0] sm:$0xff]
    %v844 = vld [vmem:[#allocation2 + $0x1e8] sm:$0xff]
    %v845 = vld [vmem:[#allocation2 + $0x1f0] sm:$0xff]
    %v846 = vld [vmem:[#allocation2 + $0x1f8] sm:$0xff]
    %v847 = vld [vmem:[#allocation2 + $0x200] sm:$0xff]
    %v848 = vld [vmem:[#allocation2 + $0x208] sm:$0xff]
    %v849 = vld [vmem:[#allocation2 + $0x210] sm:$0xff]
    %v850 = vld [vmem:[#allocation2 + $0x218] sm:$0xff]
    %v851 = vld [vmem:[#allocation2 + $0x220] sm:$0xff]
    %v852 = vld [vmem:[#allocation2 + $0x228] sm:$0xff]
    %v853 = vld [vmem:[#allocation2 + $0x230] sm:$0xff]
    %v854 = vld [vmem:[#allocation2 + $0x238] sm:$0xff]
    %v855 = vld [vmem:[#allocation2 + $0x240] sm:$0xff]
    %v856 = vld [vmem:[#allocation2 + $0x248] sm:$0xff]
    %v857 = vld [vmem:[#allocation2 + $0x250] sm:$0xff]
    %v858 = vld [vmem:[#allocation2 + $0x258] sm:$0xff]
    %v859 = vld [vmem:[#allocation2 + $0x260] sm:$0xff]
    %v860 = vld [vmem:[#allocation2 + $0x268] sm:$0xff]
    %v861 = vld [vmem:[#allocation2 + $0x270] sm:$0xff]
    %v862 = vld [vmem:[#allocation2 + $0x278] sm:$0xff]
    %v863 = vld [vmem:[#allocation2 + $0x280] sm:$0xff]
    %v864 = vld [vmem:[#allocation2 + $0x288] sm:$0xff]
    %v865 = vld [vmem:[#allocation2 + $0x290] sm:$0xff]
    %v866 = vld [vmem:[#allocation2 + $0x298] sm:$0xff]
    %v867 = vld [vmem:[#allocation2 + $0x2a0] sm:$0xff]
    %v868 = vld [vmem:[#allocation2 + $0x2a8] sm:$0xff]
    %v869 = vld [vmem:[#allocation2 + $0x2b0] sm:$0xff]
    %v870 = vld [vmem:[#allocation2 + $0x2b8] sm:$0xff]
    %v871 = vld [vmem:[#allocation2 + $0x2c0] sm:$0xff]
    %v872 = vld [vmem:[#allocation2 + $0x2c8] sm:$0xff]
    %v873 = vld [vmem:[#allocation2 + $0x2d0] sm:$0xff]
    %v874 = vld [vmem:[#allocation2 + $0x2d8] sm:$0xff]
    %v875 = vld [vmem:[#allocation2 + $0x2e0] sm:$0xff]
    %v876 = vld [vmem:[#allocation2 + $0x2e8] sm:$0xff]
    %v877 = vld [vmem:[#allocation2 + $0x2f0] sm:$0xff]
    %v878 = vld [vmem:[#allocation2 + $0x2f8] sm:$0xff]
    %v879 = vld [vmem:[#allocation2 + $0x300] sm:$0xff]
    %v880 = vld [vmem:[#allocation2 + $0x308] sm:$0xff]
    %v881 = vld [vmem:[#allocation2 + $0x310] sm:$0xff]
    %v882 = vld [vmem:[#allocation2 + $0x318] sm:$0xff]
    %v883 = vld [vmem:[#allocation2 + $0x320] sm:$0xff]
    %v884 = vld [vmem:[#allocation2 + $0x328] sm:$0xff]
    %v885 = vld [vmem:[#allocation2 + $0x330] sm:$0xff]
    %v886 = vld [vmem:[#allocation2 + $0x338] sm:$0xff]
    %v887 = vld [vmem:[#allocation2 + $0x340] sm:$0xff]
    %v888 = vld [vmem:[#allocation2 + $0x348] sm:$0xff]
    %v889 = vld [vmem:[#allocation2 + $0x350] sm:$0xff]
    %v890 = vld [vmem:[#allocation2 + $0x358] sm:$0xff]
    %v891 = vld [vmem:[#allocation2 + $0x360] sm:$0xff]
    %v892 = vld [vmem:[#allocation2 + $0x368] sm:$0xff]
    %v893 = vld [vmem:[#allocation2 + $0x370] sm:$0xff]
    %v894 = vld [vmem:[#allocation2 + $0x378] sm:$0xff]
    %v895 = vld [vmem:[#allocation2 + $0x380] sm:$0xff]
    %v896 = vld [vmem:[#allocation2 + $0x388] sm:$0xff]
    %v897 = vld [vmem:[#allocation2 + $0x390] sm:$0xff]
    %v898 = vld [vmem:[#allocation2 + $0x398] sm:$0xff]
    %v899 = vld [vmem:[#allocation2 + $0x3a0] sm:$0xff]
    %v900 = vld [vmem:[#allocation2 + $0x3a8] sm:$0xff]
    %v901 = vld [vmem:[#allocation2 + $0x3b0] sm:$0xff]
    %v902 = vld [vmem:[#allocation2 + $0x3b8] sm:$0xff]
    %v903 = vld [vmem:[#allocation2 + $0x3c0] sm:$0xff]
    %v904 = vld [vmem:[#allocation2 + $0x3c8] sm:$0xff]
    %v905 = vld [vmem:[#allocation2 + $0x3d0] sm:$0xff]
    %v906 = vld [vmem:[#allocation2 + $0x3d8] sm:$0xff]
    %v907 = vld [vmem:[#allocation2 + $0x3e0] sm:$0xff]
    %v908 = vld [vmem:[#allocation2 + $0x3e8] sm:$0xff]
    %v909 = vld [vmem:[#allocation2 + $0x3f0] sm:$0xff]
    %v910 = vld [vmem:[#allocation2 + $0x3f8] sm:$0xff]
    %v911 = vld [vmem:[%s4] sm:$0xf]
    %v913 = vlaneseq
    %v914 = vshrl.u32 %v913, 7
    %v915 = vsub.s32 0, %v914
    %v916 = vrot.slane %v911, %v915
    %v917 = vlaneseq
    %v918 = vshrl.u32 %v917, 7
    %v919 = vsub.s32 1, %v918
    %v920 = vrot.slane %v911, %v919
    %v921 = vlaneseq
    %v922 = vshrl.u32 %v921, 7
    %v923 = vsub.s32 2, %v922
    %v924 = vrot.slane %v911, %v923
    %v925 = vlaneseq
    %v926 = vshrl.u32 %v925, 7
    %v927 = vsub.s32 3, %v926
    %v928 = vrot.slane %v911, %v927
    %v1061 = vunpack.c.l.b16 %v783
    %v1062 = vunpack.c.h.b16 %v783
    %v1063 = vunpack.c.l.b16 %v784
    %v1064 = vunpack.c.h.b16 %v784
    %v1065 = vunpack.c.l.b16 %v785
    %v1066 = vunpack.c.h.b16 %v785
    %v1067 = vunpack.c.l.b16 %v786
    %v1068 = vunpack.c.h.b16 %v786
    %v1069 = vunpack.c.l.b16 %v787
    %v1070 = vunpack.c.h.b16 %v787
    %v1071 = vunpack.c.l.b16 %v788
    %v1072 = vunpack.c.h.b16 %v788
    %v1073 = vunpack.c.l.b16 %v789
    %v1074 = vunpack.c.h.b16 %v789
    %v1075 = vunpack.c.l.b16 %v790
    %v1076 = vunpack.c.h.b16 %v790
    %v1077 = vunpack.c.l.b16 %v791
    %v1078 = vunpack.c.h.b16 %v791
    %v1079 = vunpack.c.l.b16 %v792
    %v1080 = vunpack.c.h.b16 %v792
    %v1081 = vunpack.c.l.b16 %v793
    %v1082 = vunpack.c.h.b16 %v793
    %v1083 = vunpack.c.l.b16 %v794
    %v1084 = vunpack.c.h.b16 %v794
    %v1085 = vunpack.c.l.b16 %v795
    %v1086 = vunpack.c.h.b16 %v795
    %v1087 = vunpack.c.l.b16 %v796
    %v1088 = vunpack.c.h.b16 %v796
    %v1089 = vunpack.c.l.b16 %v797
    %v1090 = vunpack.c.h.b16 %v797
    %v1091 = vunpack.c.l.b16 %v798
    %v1092 = vunpack.c.h.b16 %v798
    %v1093 = vunpack.c.l.b16 %v799
    %v1094 = vunpack.c.h.b16 %v799
    %v1095 = vunpack.c.l.b16 %v800
    %v1096 = vunpack.c.h.b16 %v800
    %v1097 = vunpack.c.l.b16 %v801
    %v1098 = vunpack.c.h.b16 %v801
    %v1099 = vunpack.c.l.b16 %v802
    %v1100 = vunpack.c.h.b16 %v802
    %v1101 = vunpack.c.l.b16 %v803
    %v1102 = vunpack.c.h.b16 %v803
    %v1103 = vunpack.c.l.b16 %v804
    %v1104 = vunpack.c.h.b16 %v804
    %v1105 = vunpack.c.l.b16 %v805
    %v1106 = vunpack.c.h.b16 %v805
    %v1107 = vunpack.c.l.b16 %v806
    %v1108 = vunpack.c.h.b16 %v806
    %v1109 = vunpack.c.l.b16 %v807
    %v1110 = vunpack.c.h.b16 %v807
    %v1111 = vunpack.c.l.b16 %v808
    %v1112 = vunpack.c.h.b16 %v808
    %v1113 = vunpack.c.l.b16 %v809
    %v1114 = vunpack.c.h.b16 %v809
    %v1115 = vunpack.c.l.b16 %v810
    %v1116 = vunpack.c.h.b16 %v810
    %v1117 = vunpack.c.l.b16 %v811
    %v1118 = vunpack.c.h.b16 %v811
    %v1119 = vunpack.c.l.b16 %v812
    %v1120 = vunpack.c.h.b16 %v812
    %v1121 = vunpack.c.l.b16 %v813
    %v1122 = vunpack.c.h.b16 %v813
    %v1123 = vunpack.c.l.b16 %v814
    %v1124 = vunpack.c.h.b16 %v814
    %v1125 = vunpack.c.l.b16 %v815
    %v1126 = vunpack.c.h.b16 %v815
    %v1127 = vunpack.c.l.b16 %v816
    %v1128 = vunpack.c.h.b16 %v816
    %v1129 = vunpack.c.l.b16 %v817
    %v1130 = vunpack.c.h.b16 %v817
    %v1131 = vunpack.c.l.b16 %v818
    %v1132 = vunpack.c.h.b16 %v818
    %v1133 = vunpack.c.l.b16 %v819
    %v1134 = vunpack.c.h.b16 %v819
    %v1135 = vunpack.c.l.b16 %v820
    %v1136 = vunpack.c.h.b16 %v820
    %v1137 = vunpack.c.l.b16 %v821
    %v1138 = vunpack.c.h.b16 %v821
    %v1139 = vunpack.c.l.b16 %v822
    %v1140 = vunpack.c.h.b16 %v822
    %v1141 = vunpack.c.l.b16 %v823
    %v1142 = vunpack.c.h.b16 %v823
    %v1143 = vunpack.c.l.b16 %v824
    %v1144 = vunpack.c.h.b16 %v824
    %v1145 = vunpack.c.l.b16 %v825
    %v1146 = vunpack.c.h.b16 %v825
    %v1147 = vunpack.c.l.b16 %v826
    %v1148 = vunpack.c.h.b16 %v826
    %v1149 = vunpack.c.l.b16 %v827
    %v1150 = vunpack.c.h.b16 %v827
    %v1151 = vunpack.c.l.b16 %v828
    %v1152 = vunpack.c.h.b16 %v828
    %v1153 = vunpack.c.l.b16 %v829
    %v1154 = vunpack.c.h.b16 %v829
    %v1155 = vunpack.c.l.b16 %v830
    %v1156 = vunpack.c.h.b16 %v830
    %v1157 = vunpack.c.l.b16 %v831
    %v1158 = vunpack.c.h.b16 %v831
    %v1159 = vunpack.c.l.b16 %v832
    %v1160 = vunpack.c.h.b16 %v832
    %v1161 = vunpack.c.l.b16 %v833
    %v1162 = vunpack.c.h.b16 %v833
    %v1163 = vunpack.c.l.b16 %v834
    %v1164 = vunpack.c.h.b16 %v834
    %v1165 = vunpack.c.l.b16 %v835
    %v1166 = vunpack.c.h.b16 %v835
    %v1167 = vunpack.c.l.b16 %v836
    %v1168 = vunpack.c.h.b16 %v836
    %v1169 = vunpack.c.l.b16 %v837
    %v1170 = vunpack.c.h.b16 %v837
    %v1171 = vunpack.c.l.b16 %v838
    %v1172 = vunpack.c.h.b16 %v838
    %v1173 = vunpack.c.l.b16 %v839
    %v1174 = vunpack.c.h.b16 %v839
    %v1175 = vunpack.c.l.b16 %v840
    %v1176 = vunpack.c.h.b16 %v840
    %v1177 = vunpack.c.l.b16 %v841
    %v1178 = vunpack.c.h.b16 %v841
    %v1179 = vunpack.c.l.b16 %v842
    %v1180 = vunpack.c.h.b16 %v842
    %v1181 = vunpack.c.l.b16 %v843
    %v1182 = vunpack.c.h.b16 %v843
    %v1183 = vunpack.c.l.b16 %v844
    %v1184 = vunpack.c.h.b16 %v844
    %v1185 = vunpack.c.l.b16 %v845
    %v1186 = vunpack.c.h.b16 %v845
    %v1187 = vunpack.c.l.b16 %v846
    %v1188 = vunpack.c.h.b16 %v846
    %v1189 = vunpack.c.l.b16 %v847
    %v1190 = vunpack.c.h.b16 %v847
    %v1191 = vunpack.c.l.b16 %v848
    %v1192 = vunpack.c.h.b16 %v848
    %v1193 = vunpack.c.l.b16 %v849
    %v1194 = vunpack.c.h.b16 %v849
    %v1195 = vunpack.c.l.b16 %v850
    %v1196 = vunpack.c.h.b16 %v850
    %v1197 = vunpack.c.l.b16 %v851
    %v1198 = vunpack.c.h.b16 %v851
    %v1199 = vunpack.c.l.b16 %v852
    %v1200 = vunpack.c.h.b16 %v852
    %v1201 = vunpack.c.l.b16 %v853
    %v1202 = vunpack.c.h.b16 %v853
    %v1203 = vunpack.c.l.b16 %v854
    %v1204 = vunpack.c.h.b16 %v854
    %v1205 = vunpack.c.l.b16 %v855
    %v1206 = vunpack.c.h.b16 %v855
    %v1207 = vunpack.c.l.b16 %v856
    %v1208 = vunpack.c.h.b16 %v856
    %v1209 = vunpack.c.l.b16 %v857
    %v1210 = vunpack.c.h.b16 %v857
    %v1211 = vunpack.c.l.b16 %v858
    %v1212 = vunpack.c.h.b16 %v858
    %v1213 = vunpack.c.l.b16 %v859
    %v1214 = vunpack.c.h.b16 %v859
    %v1215 = vunpack.c.l.b16 %v860
    %v1216 = vunpack.c.h.b16 %v860
    %v1217 = vunpack.c.l.b16 %v861
    %v1218 = vunpack.c.h.b16 %v861
    %v1219 = vunpack.c.l.b16 %v862
    %v1220 = vunpack.c.h.b16 %v862
    %v1221 = vunpack.c.l.b16 %v863
    %v1222 = vunpack.c.h.b16 %v863
    %v1223 = vunpack.c.l.b16 %v864
    %v1224 = vunpack.c.h.b16 %v864
    %v1225 = vunpack.c.l.b16 %v865
    %v1226 = vunpack.c.h.b16 %v865
    %v1227 = vunpack.c.l.b16 %v866
    %v1228 = vunpack.c.h.b16 %v866
    %v1229 = vunpack.c.l.b16 %v867
    %v1230 = vunpack.c.h.b16 %v867
    %v1231 = vunpack.c.l.b16 %v868
    %v1232 = vunpack.c.h.b16 %v868
    %v1233 = vunpack.c.l.b16 %v869
    %v1234 = vunpack.c.h.b16 %v869
    %v1235 = vunpack.c.l.b16 %v870
    %v1236 = vunpack.c.h.b16 %v870
    %v1237 = vunpack.c.l.b16 %v871
    %v1238 = vunpack.c.h.b16 %v871
    %v1239 = vunpack.c.l.b16 %v872
    %v1240 = vunpack.c.h.b16 %v872
    %v1241 = vunpack.c.l.b16 %v873
    %v1242 = vunpack.c.h.b16 %v873
    %v1243 = vunpack.c.l.b16 %v874
    %v1244 = vunpack.c.h.b16 %v874
    %v1245 = vunpack.c.l.b16 %v875
    %v1246 = vunpack.c.h.b16 %v875
    %v1247 = vunpack.c.l.b16 %v876
    %v1248 = vunpack.c.h.b16 %v876
    %v1249 = vunpack.c.l.b16 %v877
    %v1250 = vunpack.c.h.b16 %v877
    %v1251 = vunpack.c.l.b16 %v878
    %v1252 = vunpack.c.h.b16 %v878
    %v1253 = vunpack.c.l.b16 %v879
    %v1254 = vunpack.c.h.b16 %v879
    %v1255 = vunpack.c.l.b16 %v880
    %v1256 = vunpack.c.h.b16 %v880
    %v1257 = vunpack.c.l.b16 %v881
    %v1258 = vunpack.c.h.b16 %v881
    %v1259 = vunpack.c.l.b16 %v882
    %v1260 = vunpack.c.h.b16 %v882
    %v1261 = vunpack.c.l.b16 %v883
    %v1262 = vunpack.c.h.b16 %v883
    %v1263 = vunpack.c.l.b16 %v884
    %v1264 = vunpack.c.h.b16 %v884
    %v1265 = vunpack.c.l.b16 %v885
    %v1266 = vunpack.c.h.b16 %v885
    %v1267 = vunpack.c.l.b16 %v886
    %v1268 = vunpack.c.h.b16 %v886
    %v1269 = vunpack.c.l.b16 %v887
    %v1270 = vunpack.c.h.b16 %v887
    %v1271 = vunpack.c.l.b16 %v888
    %v1272 = vunpack.c.h.b16 %v888
    %v1273 = vunpack.c.l.b16 %v889
    %v1274 = vunpack.c.h.b16 %v889
    %v1275 = vunpack.c.l.b16 %v890
    %v1276 = vunpack.c.h.b16 %v890
    %v1277 = vunpack.c.l.b16 %v891
    %v1278 = vunpack.c.h.b16 %v891
    %v1279 = vunpack.c.l.b16 %v892
    %v1280 = vunpack.c.h.b16 %v892
    %v1281 = vunpack.c.l.b16 %v893
    %v1282 = vunpack.c.h.b16 %v893
    %v1283 = vunpack.c.l.b16 %v894
    %v1284 = vunpack.c.h.b16 %v894
    %v1285 = vunpack.c.l.b16 %v895
    %v1286 = vunpack.c.h.b16 %v895
    %v1287 = vunpack.c.l.b16 %v896
    %v1288 = vunpack.c.h.b16 %v896
    %v1289 = vunpack.c.l.b16 %v897
    %v1290 = vunpack.c.h.b16 %v897
    %v1291 = vunpack.c.l.b16 %v898
    %v1292 = vunpack.c.h.b16 %v898
    %v1293 = vunpack.c.l.b16 %v899
    %v1294 = vunpack.c.h.b16 %v899
    %v1295 = vunpack.c.l.b16 %v900
    %v1296 = vunpack.c.h.b16 %v900
    %v1297 = vunpack.c.l.b16 %v901
    %v1298 = vunpack.c.h.b16 %v901
    %v1299 = vunpack.c.l.b16 %v902
    %v1300 = vunpack.c.h.b16 %v902
    %v1301 = vunpack.c.l.b16 %v903
    %v1302 = vunpack.c.h.b16 %v903
    %v1303 = vunpack.c.l.b16 %v904
    %v1304 = vunpack.c.h.b16 %v904
    %v1305 = vunpack.c.l.b16 %v905
    %v1306 = vunpack.c.h.b16 %v905
    %v1307 = vunpack.c.l.b16 %v906
    %v1308 = vunpack.c.h.b16 %v906
    %v1309 = vunpack.c.l.b16 %v907
    %v1310 = vunpack.c.h.b16 %v907
    %v1311 = vunpack.c.l.b16 %v908
    %v1312 = vunpack.c.h.b16 %v908
    %v1313 = vunpack.c.l.b16 %v909
    %v1314 = vunpack.c.h.b16 %v909
    %v1315 = vunpack.c.l.b16 %v910
    %v1316 = vunpack.c.h.b16 %v910
    %v1317 = vpack.c.b16 %v1065, %v1061
    %v1318 = vpack.c.b16 %v1066, %v1062
    %v1319 = vpack.c.b16 %v1067, %v1063
    %v1320 = vpack.c.b16 %v1068, %v1064
    %v1321 = vpack.c.b16 %v1073, %v1069
    %v1322 = vpack.c.b16 %v1074, %v1070
    %v1323 = vpack.c.b16 %v1075, %v1071
    %v1324 = vpack.c.b16 %v1076, %v1072
    %v1325 = vpack.c.b16 %v1081, %v1077
    %v1326 = vpack.c.b16 %v1082, %v1078
    %v1327 = vpack.c.b16 %v1083, %v1079
    %v1328 = vpack.c.b16 %v1084, %v1080
    %v1329 = vpack.c.b16 %v1089, %v1085
    %v1330 = vpack.c.b16 %v1090, %v1086
    %v1331 = vpack.c.b16 %v1091, %v1087
    %v1332 = vpack.c.b16 %v1092, %v1088
    %v1333 = vpack.c.b16 %v1097, %v1093
    %v1334 = vpack.c.b16 %v1098, %v1094
    %v1335 = vpack.c.b16 %v1099, %v1095
    %v1336 = vpack.c.b16 %v1100, %v1096
    %v1337 = vpack.c.b16 %v1105, %v1101
    %v1338 = vpack.c.b16 %v1106, %v1102
    %v1339 = vpack.c.b16 %v1107, %v1103
    %v1340 = vpack.c.b16 %v1108, %v1104
    %v1341 = vpack.c.b16 %v1113, %v1109
    %v1342 = vpack.c.b16 %v1114, %v1110
    %v1343 = vpack.c.b16 %v1115, %v1111
    %v1344 = vpack.c.b16 %v1116, %v1112
    %v1345 = vpack.c.b16 %v1121, %v1117
    %v1346 = vpack.c.b16 %v1122, %v1118
    %v1347 = vpack.c.b16 %v1123, %v1119
    %v1348 = vpack.c.b16 %v1124, %v1120
    %v1349 = vpack.c.b16 %v1129, %v1125
    %v1350 = vpack.c.b16 %v1130, %v1126
    %v1351 = vpack.c.b16 %v1131, %v1127
    %v1352 = vpack.c.b16 %v1132, %v1128
    %v1353 = vpack.c.b16 %v1137, %v1133
    %v1354 = vpack.c.b16 %v1138, %v1134
    %v1355 = vpack.c.b16 %v1139, %v1135
    %v1356 = vpack.c.b16 %v1140, %v1136
    %v1357 = vpack.c.b16 %v1145, %v1141
    %v1358 = vpack.c.b16 %v1146, %v1142
    %v1359 = vpack.c.b16 %v1147, %v1143
    %v1360 = vpack.c.b16 %v1148, %v1144
    %v1361 = vpack.c.b16 %v1153, %v1149
    %v1362 = vpack.c.b16 %v1154, %v1150
    %v1363 = vpack.c.b16 %v1155, %v1151
    %v1364 = vpack.c.b16 %v1156, %v1152
    %v1365 = vpack.c.b16 %v1161, %v1157
    %v1366 = vpack.c.b16 %v1162, %v1158
    %v1367 = vpack.c.b16 %v1163, %v1159
    %v1368 = vpack.c.b16 %v1164, %v1160
    %v1369 = vpack.c.b16 %v1169, %v1165
    %v1370 = vpack.c.b16 %v1170, %v1166
    %v1371 = vpack.c.b16 %v1171, %v1167
    %v1372 = vpack.c.b16 %v1172, %v1168
    %v1373 = vpack.c.b16 %v1177, %v1173
    %v1374 = vpack.c.b16 %v1178, %v1174
    %v1375 = vpack.c.b16 %v1179, %v1175
    %v1376 = vpack.c.b16 %v1180, %v1176
    %v1377 = vpack.c.b16 %v1185, %v1181
    %v1378 = vpack.c.b16 %v1186, %v1182
    %v1379 = vpack.c.b16 %v1187, %v1183
    %v1380 = vpack.c.b16 %v1188, %v1184
    %v1381 = vpack.c.b16 %v1193, %v1189
    %v1382 = vpack.c.b16 %v1194, %v1190
    %v1383 = vpack.c.b16 %v1195, %v1191
    %v1384 = vpack.c.b16 %v1196, %v1192
    %v1385 = vpack.c.b16 %v1201, %v1197
    %v1386 = vpack.c.b16 %v1202, %v1198
    %v1387 = vpack.c.b16 %v1203, %v1199
    %v1388 = vpack.c.b16 %v1204, %v1200
    %v1389 = vpack.c.b16 %v1209, %v1205
    %v1390 = vpack.c.b16 %v1210, %v1206
    %v1391 = vpack.c.b16 %v1211, %v1207
    %v1392 = vpack.c.b16 %v1212, %v1208
    %v1393 = vpack.c.b16 %v1217, %v1213
    %v1394 = vpack.c.b16 %v1218, %v1214
    %v1395 = vpack.c.b16 %v1219, %v1215
    %v1396 = vpack.c.b16 %v1220, %v1216
    %v1397 = vpack.c.b16 %v1225, %v1221
    %v1398 = vpack.c.b16 %v1226, %v1222
    %v1399 = vpack.c.b16 %v1227, %v1223
    %v1400 = vpack.c.b16 %v1228, %v1224
    %v1401 = vpack.c.b16 %v1233, %v1229
    %v1402 = vpack.c.b16 %v1234, %v1230
    %v1403 = vpack.c.b16 %v1235, %v1231
    %v1404 = vpack.c.b16 %v1236, %v1232
    %v1405 = vpack.c.b16 %v1241, %v1237
    %v1406 = vpack.c.b16 %v1242, %v1238
    %v1407 = vpack.c.b16 %v1243, %v1239
    %v1408 = vpack.c.b16 %v1244, %v1240
    %v1409 = vpack.c.b16 %v1249, %v1245
    %v1410 = vpack.c.b16 %v1250, %v1246
    %v1411 = vpack.c.b16 %v1251, %v1247
    %v1412 = vpack.c.b16 %v1252, %v1248
    %v1413 = vpack.c.b16 %v1257, %v1253
    %v1414 = vpack.c.b16 %v1258, %v1254
    %v1415 = vpack.c.b16 %v1259, %v1255
    %v1416 = vpack.c.b16 %v1260, %v1256
    %v1417 = vpack.c.b16 %v1265, %v1261
    %v1418 = vpack.c.b16 %v1266, %v1262
    %v1419 = vpack.c.b16 %v1267, %v1263
    %v1420 = vpack.c.b16 %v1268, %v1264
    %v1421 = vpack.c.b16 %v1273, %v1269
    %v1422 = vpack.c.b16 %v1274, %v1270
    %v1423 = vpack.c.b16 %v1275, %v1271
    %v1424 = vpack.c.b16 %v1276, %v1272
    %v1425 = vpack.c.b16 %v1281, %v1277
    %v1426 = vpack.c.b16 %v1282, %v1278
    %v1427 = vpack.c.b16 %v1283, %v1279
    %v1428 = vpack.c.b16 %v1284, %v1280
    %v1429 = vpack.c.b16 %v1289, %v1285
    %v1430 = vpack.c.b16 %v1290, %v1286
    %v1431 = vpack.c.b16 %v1291, %v1287
    %v1432 = vpack.c.b16 %v1292, %v1288
    %v1433 = vpack.c.b16 %v1297, %v1293
    %v1434 = vpack.c.b16 %v1298, %v1294
    %v1435 = vpack.c.b16 %v1299, %v1295
    %v1436 = vpack.c.b16 %v1300, %v1296
    %v1437 = vpack.c.b16 %v1305, %v1301
    %v1438 = vpack.c.b16 %v1306, %v1302
    %v1439 = vpack.c.b16 %v1307, %v1303
    %v1440 = vpack.c.b16 %v1308, %v1304
    %v1441 = vpack.c.b16 %v1313, %v1309
    %v1442 = vpack.c.b16 %v1314, %v1310
    %v1443 = vpack.c.b16 %v1315, %v1311
    %v1444 = vpack.c.b16 %v1316, %v1312
    %1573 = vmatprep.subr.bf16.mxu0 %v1318
    %1574 = vmatpush1.bf16.msra.mxu0 %v1317
    %1575 = vmatprep.subr.bf16.mxu0 %v1322
    %1576 = vmatpush1.bf16.msra.mxu0 %v1321
    %1577 = vmatprep.subr.bf16.mxu0 %v1326
    %1578 = vmatpush1.bf16.msra.mxu0 %v1325
    %1579 = vmatprep.subr.bf16.mxu0 %v1330
    %1580 = vmatpush1.bf16.msra.mxu0 %v1329
    %1581 = vmatprep.subr.bf16.mxu0 %v1334
    %1582 = vmatpush1.bf16.msra.mxu0 %v1333
    %1583 = vmatprep.subr.bf16.mxu0 %v1338
    %1584 = vmatpush1.bf16.msra.mxu0 %v1337
    %1585 = vmatprep.subr.bf16.mxu0 %v1342
    %1586 = vmatpush1.bf16.msra.mxu0 %v1341
    %1587 = vmatprep.subr.bf16.mxu0 %v1346
    %1588 = vmatpush1.bf16.msra.mxu0 %v1345
    %1589 = vmatprep.subr.bf16.mxu0 %v1350
    %1590 = vmatpush1.bf16.msra.mxu0 %v1349
    %1591 = vmatprep.subr.bf16.mxu0 %v1354
    %1592 = vmatpush1.bf16.msra.mxu0 %v1353
    %1593 = vmatprep.subr.bf16.mxu0 %v1358
    %1594 = vmatpush1.bf16.msra.mxu0 %v1357
    %1595 = vmatprep.subr.bf16.mxu0 %v1362
    %1596 = vmatpush1.bf16.msra.mxu0 %v1361
    %1597 = vmatprep.subr.bf16.mxu0 %v1366
    %1598 = vmatpush1.bf16.msra.mxu0 %v1365
    %1599 = vmatprep.subr.bf16.mxu0 %v1370
    %1600 = vmatpush1.bf16.msra.mxu0 %v1369
    %1601 = vmatprep.subr.bf16.mxu0 %v1374
    %1602 = vmatpush1.bf16.msra.mxu0 %v1373
    %1603 = vmatprep.subr.bf16.mxu0 %v1378
    %1604 = vmatpush1.bf16.msra.mxu0 %v1377
    %1605 = vmatprep.mubr.bf16.mxu0 %v720
    %1606 = vmatmul.mubr.bf16.gmra.mrb[0].mxu0 %v719
    %v1607 = vpop.f32.mrb[0].mxu0
    %v1608 = vadd.f32 %v916, %v1607
    %v1609 = vpop.f32.mrb[0].mxu0
    %v1610 = vadd.f32 %v920, %v1609
    %v1611 = vpop.f32.mrb[0].mxu0
    %v1612 = vadd.f32 %v916, %v1611
    %v1613 = vpop.f32.mrb[0].mxu0
    %v1614 = vadd.f32 %v920, %v1613
    %1615 = vmatprep.mubr.bf16.mxu0 %v724
    %1616 = vmatmul.mubr.bf16.gmra.mrb[0].mxu0 %v723
    %v1617 = vpop.f32.mrb[0].mxu0
    %v1618 = vadd.f32 %v916, %v1617
    %v1619 = vpop.f32.mrb[0].mxu0
    %v1620 = vadd.f32 %v920, %v1619
    %v1621 = vpop.f32.mrb[0].mxu0
    %v1622 = vadd.f32 %v916, %v1621
    %v1623 = vpop.f32.mrb[0].mxu0
    %v1624 = vadd.f32 %v920, %v1623
    %1625 = vmatprep.mubr.bf16.mxu0 %v728
    %1626 = vmatmul.mubr.bf16.gmra.mrb[0].mxu0 %v727
    %v1627 = vpop.f32.mrb[0].mxu0
    %v1628 = vadd.f32 %v916, %v1627
    %v1629 = vpop.f32.mrb[0].mxu0
    %v1630 = vadd.f32 %v920, %v1629
    %v1631 = vpop.f32.mrb[0].mxu0
    %v1632 = vadd.f32 %v916, %v1631
    %v1633 = vpop.f32.mrb[0].mxu0
    %v1634 = vadd.f32 %v920, %v1633
    %1635 = vmatprep.mubr.bf16.mxu0 %v732
    %1636 = vmatmul.mubr.bf16.gmra.mrb[0].mxu0 %v731
    %v1637 = vpop.f32.mrb[0].mxu0
    %v1638 = vadd.f32 %v916, %v1637
    %v1639 = vpop.f32.mrb[0].mxu0
    %v1640 = vadd.f32 %v920, %v1639
    %v1641 = vpop.f32.mrb[0].mxu0
    %v1642 = vadd.f32 %v916, %v1641
    %v1643 = vpop.f32.mrb[0].mxu0
    %v1644 = vadd.f32 %v920, %v1643
    %1645 = vmatprep.mubr.bf16.mxu0 %v736
    %1646 = vmatmul.mubr.bf16.gmra.mrb[0].mxu0 %v735
    %v1647 = vpop.f32.mrb[0].mxu0
    %v1648 = vadd.f32 %v916, %v1647
    %v1649 = vpop.f32.mrb[0].mxu0
    %v1650 = vadd.f32 %v920, %v1649
    %v1651 = vpop.f32.mrb[0].mxu0
    %v1652 = vadd.f32 %v916, %v1651
    %v1653 = vpop.f32.mrb[0].mxu0
    %v1654 = vadd.f32 %v920, %v1653
    %1655 = vmatprep.mubr.bf16.mxu0 %v740
    %1656 = vmatmul.mubr.bf16.gmra.mrb[0].mxu0 %v739
    %v1657 = vpop.f32.mrb[0].mxu0
    %v1658 = vadd.f32 %v916, %v1657
    %v1659 = vpop.f32.mrb[0].mxu0
    %v1660 = vadd.f32 %v920, %v1659
    %v1661 = vpop.f32.mrb[0].mxu0
    %v1662 = vadd.f32 %v916, %v1661
    %v1663 = vpop.f32.mrb[0].mxu0
    %v1664 = vadd.f32 %v920, %v1663
    %1665 = vmatprep.mubr.bf16.mxu0 %v744
    %1666 = vmatmul.mubr.bf16.gmra.mrb[0].mxu0 %v743
    %v1667 = vpop.f32.mrb[0].mxu0
    %v1668 = vadd.f32 %v916, %v1667
    %v1669 = vpop.f32.mrb[0].mxu0
    %v1670 = vadd.f32 %v920, %v1669
    %v1671 = vpop.f32.mrb[0].mxu0
    %v1672 = vadd.f32 %v916, %v1671
    %v1673 = vpop.f32.mrb[0].mxu0
    %v1674 = vadd.f32 %v920, %v1673
    %1675 = vmatprep.mubr.bf16.mxu0 %v748
    %1676 = vmatmul.mubr.bf16.gmra.mrb[0].mxu0 %v747
    %v1677 = vpop.f32.mrb[0].mxu0
    %v1678 = vadd.f32 %v916, %v1677
    %v1679 = vpop.f32.mrb[0].mxu0
    %v1680 = vadd.f32 %v920, %v1679
    %v1681 = vpop.f32.mrb[0].mxu0
    %v1682 = vadd.f32 %v916, %v1681
    %v1683 = vpop.f32.mrb[0].mxu0
    %v1684 = vadd.f32 %v920, %v1683
    %1685 = vmatprep.mubr.bf16.mxu0 %v752
    %1686 = vmatmul.mubr.bf16.gmra.mrb[0].mxu0 %v751
    %v1687 = vpop.f32.mrb[0].mxu0
    %v1688 = vadd.f32 %v916, %v1687
    %v1689 = vpop.f32.mrb[0].mxu0
    %v1690 = vadd.f32 %v920, %v1689
    %v1691 = vpop.f32.mrb[0].mxu0
    %v1692 = vadd.f32 %v916, %v1691
    %v1693 = vpop.f32.mrb[0].mxu0
    %v1694 = vadd.f32 %v920, %v1693
    %1695 = vmatprep.mubr.bf16.mxu0 %v756
    %1696 = vmatmul.mubr.bf16.gmra.mrb[0].mxu0 %v755
    %v1697 = vpop.f32.mrb[0].mxu0
    %v1698 = vadd.f32 %v916, %v1697
    %v1699 = vpop.f32.mrb[0].mxu0
    %v1700 = vadd.f32 %v920, %v1699
    %v1701 = vpop.f32.mrb[0].mxu0
    %v1702 = vadd.f32 %v916, %v1701
    %v1703 = vpop.f32.mrb[0].mxu0
    %v1704 = vadd.f32 %v920, %v1703
    %1705 = vmatprep.mubr.bf16.mxu0 %v760
    %1706 = vmatmul.mubr.bf16.gmra.mrb[0].mxu0 %v759
    %v1707 = vpop.f32.mrb[0].mxu0
    %v1708 = vadd.f32 %v916, %v1707
    %v1709 = vpop.f32.mrb[0].mxu0
    %v1710 = vadd.f32 %v920, %v1709
    %v1711 = vpop.f32.mrb[0].mxu0
    %v1712 = vadd.f32 %v916, %v1711
    %v1713 = vpop.f32.mrb[0].mxu0
    %v1714 = vadd.f32 %v920, %v1713
    %1715 = vmatprep.mubr.bf16.mxu0 %v764
    %1716 = vmatmul.mubr.bf16.gmra.mrb[0].mxu0 %v763
    %v1717 = vpop.f32.mrb[0].mxu0
    %v1718 = vadd.f32 %v916, %v1717
    %v1719 = vpop.f32.mrb[0].mxu0
    %v1720 = vadd.f32 %v920, %v1719
    %v1721 = vpop.f32.mrb[0].mxu0
    %v1722 = vadd.f32 %v916, %v1721
    %v1723 = vpop.f32.mrb[0].mxu0
    %v1724 = vadd.f32 %v920, %v1723
    %1725 = vmatprep.mubr.bf16.mxu0 %v768
    %1726 = vmatmul.mubr.bf16.gmra.mrb[0].mxu0 %v767
    %v1727 = vpop.f32.mrb[0].mxu0
    %v1728 = vadd.f32 %v916, %v1727
    %v1729 = vpop.f32.mrb[0].mxu0
    %v1730 = vadd.f32 %v920, %v1729
    %v1731 = vpop.f32.mrb[0].mxu0
    %v1732 = vadd.f32 %v916, %v1731
    %v1733 = vpop.f32.mrb[0].mxu0
    %v1734 = vadd.f32 %v920, %v1733
    %1735 = vmatprep.mubr.bf16.mxu0 %v772
    %1736 = vmatmul.mubr.bf16.gmra.mrb[0].mxu0 %v771
    %v1737 = vpop.f32.mrb[0].mxu0
    %v1738 = vadd.f32 %v916, %v1737
    %v1739 = vpop.f32.mrb[0].mxu0
    %v1740 = vadd.f32 %v920, %v1739
    %v1741 = vpop.f32.mrb[0].mxu0
    %v1742 = vadd.f32 %v916, %v1741
    %v1743 = vpop.f32.mrb[0].mxu0
    %v1744 = vadd.f32 %v920, %v1743
    %1745 = vmatprep.mubr.bf16.mxu0 %v776
    %1746 = vmatmul.mubr.bf16.gmra.mrb[0].mxu0 %v775
    %v1747 = vpop.f32.mrb[0].mxu0
    %v1748 = vadd.f32 %v916, %v1747
    %v1749 = vpop.f32.mrb[0].mxu0
    %v1750 = vadd.f32 %v920, %v1749
    %v1751 = vpop.f32.mrb[0].mxu0
    %v1752 = vadd.f32 %v916, %v1751
    %v1753 = vpop.f32.mrb[0].mxu0
    %v1754 = vadd.f32 %v920, %v1753
    %1755 = vmatprep.mubr.bf16.mxu0 %v780
    %1756 = vmatmul.mubr.bf16.gmra.mrb[0].mxu0 %v779
    %v1757 = vpop.f32.mrb[0].mxu0
    %v1758 = vadd.f32 %v916, %v1757
    %v1759 = vpop.f32.mrb[0].mxu0
    %v1760 = vadd.f32 %v920, %v1759
    %v1761 = vpop.f32.mrb[0].mxu0
    %v1762 = vadd.f32 %v916, %v1761
    %v1763 = vpop.f32.mrb[0].mxu0
    %v1764 = vadd.f32 %v920, %v1763
    %1765 = vdwg.mxu0
    %1766 = vmatprep.subr.bf16.mxu0 %v1382
    %1767 = vmatpush1.bf16.msra.mxu0 %v1381
    %1768 = vmatprep.subr.bf16.mxu0 %v1386
    %1769 = vmatpush1.bf16.msra.mxu0 %v1385
    %1770 = vmatprep.subr.bf16.mxu0 %v1390
    %1771 = vmatpush1.bf16.msra.mxu0 %v1389
    %1772 = vmatprep.subr.bf16.mxu0 %v1394
    %1773 = vmatpush1.bf16.msra.mxu0 %v1393
    %1774 = vmatprep.subr.bf16.mxu0 %v1398
    %1775 = vmatpush1.bf16.msra.mxu0 %v1397
    %1776 = vmatprep.subr.bf16.mxu0 %v1402
    %1777 = vmatpush1.bf16.msra.mxu0 %v1401
    %1778 = vmatprep.subr.bf16.mxu0 %v1406
    %1779 = vmatpush1.bf16.msra.mxu0 %v1405
    %1780 = vmatprep.subr.bf16.mxu0 %v1410
    %1781 = vmatpush1.bf16.msra.mxu0 %v1409
    %1782 = vmatprep.subr.bf16.mxu0 %v1414
    %1783 = vmatpush1.bf16.msra.mxu0 %v1413
    %1784 = vmatprep.subr.bf16.mxu0 %v1418
    %1785 = vmatpush1.bf16.msra.mxu0 %v1417
    %1786 = vmatprep.subr.bf16.mxu0 %v1422
    %1787 = vmatpush1.bf16.msra.mxu0 %v1421
    %1788 = vmatprep.subr.bf16.mxu0 %v1426
    %1789 = vmatpush1.bf16.msra.mxu0 %v1425
    %1790 = vmatprep.subr.bf16.mxu0 %v1430
    %1791 = vmatpush1.bf16.msra.mxu0 %v1429
    %1792 = vmatprep.subr.bf16.mxu0 %v1434
    %1793 = vmatpush1.bf16.msra.mxu0 %v1433
    %1794 = vmatprep.subr.bf16.mxu0 %v1438
    %1795 = vmatpush1.bf16.msra.mxu0 %v1437
    %1796 = vmatprep.subr.bf16.mxu0 %v1442
    %1797 = vmatpush1.bf16.msra.mxu0 %v1441
    %1798 = vmatprep.mubr.bf16.mxu0 %v722
    %1799 = vmatmul.mubr.bf16.gmra.mrb[0].mxu0 %v721
    %v1800 = vpop.f32.mrb[0].mxu0
    %v1801 = vadd.f32 %v1608, %v1800
    %v1802 = vpop.f32.mrb[0].mxu0
    %v1803 = vadd.f32 %v1610, %v1802
    %v1804 = vpop.f32.mrb[0].mxu0
    %v1805 = vadd.f32 %v1612, %v1804
    %v1806 = vpop.f32.mrb[0].mxu0
    %v1807 = vadd.f32 %v1614, %v1806
    %1808 = vmatprep.mubr.bf16.mxu0 %v726
    %1809 = vmatmul.mubr.bf16.gmra.mrb[0].mxu0 %v725
    %v1810 = vpop.f32.mrb[0].mxu0
    %v1811 = vadd.f32 %v1618, %v1810
    %v1812 = vpop.f32.mrb[0].mxu0
    %v1813 = vadd.f32 %v1620, %v1812
    %v1814 = vpop.f32.mrb[0].mxu0
    %v1815 = vadd.f32 %v1622, %v1814
    %v1816 = vpop.f32.mrb[0].mxu0
    %v1817 = vadd.f32 %v1624, %v1816
    %1818 = vmatprep.mubr.bf16.mxu0 %v730
    %1819 = vmatmul.mubr.bf16.gmra.mrb[0].mxu0 %v729
    %v1820 = vpop.f32.mrb[0].mxu0
    %v1821 = vadd.f32 %v1628, %v1820
    %v1822 = vpop.f32.mrb[0].mxu0
    %v1823 = vadd.f32 %v1630, %v1822
    %v1824 = vpop.f32.mrb[0].mxu0
    %v1825 = vadd.f32 %v1632, %v1824
    %v1826 = vpop.f32.mrb[0].mxu0
    %v1827 = vadd.f32 %v1634, %v1826
    %1828 = vmatprep.mubr.bf16.mxu0 %v734
    %1829 = vmatmul.mubr.bf16.gmra.mrb[0].mxu0 %v733
    %v1830 = vpop.f32.mrb[0].mxu0
    %v1831 = vadd.f32 %v1638, %v1830
    %v1832 = vpop.f32.mrb[0].mxu0
    %v1833 = vadd.f32 %v1640, %v1832
    %v1834 = vpop.f32.mrb[0].mxu0
    %v1835 = vadd.f32 %v1642, %v1834
    %v1836 = vpop.f32.mrb[0].mxu0
    %v1837 = vadd.f32 %v1644, %v1836
    %1838 = vmatprep.mubr.bf16.mxu0 %v738
    %1839 = vmatmul.mubr.bf16.gmra.mrb[0].mxu0 %v737
    %v1840 = vpop.f32.mrb[0].mxu0
    %v1841 = vadd.f32 %v1648, %v1840
    %v1842 = vpop.f32.mrb[0].mxu0
    %v1843 = vadd.f32 %v1650, %v1842
    %v1844 = vpop.f32.mrb[0].mxu0
    %v1845 = vadd.f32 %v1652, %v1844
    %v1846 = vpop.f32.mrb[0].mxu0
    %v1847 = vadd.f32 %v1654, %v1846
    %1848 = vmatprep.mubr.bf16.mxu0 %v742
    %1849 = vmatmul.mubr.bf16.gmra.mrb[0].mxu0 %v741
    %v1850 = vpop.f32.mrb[0].mxu0
    %v1851 = vadd.f32 %v1658, %v1850
    %v1852 = vpop.f32.mrb[0].mxu0
    %v1853 = vadd.f32 %v1660, %v1852
    %v1854 = vpop.f32.mrb[0].mxu0
    %v1855 = vadd.f32 %v1662, %v1854
    %v1856 = vpop.f32.mrb[0].mxu0
    %v1857 = vadd.f32 %v1664, %v1856
    %1858 = vmatprep.mubr.bf16.mxu0 %v746
    %1859 = vmatmul.mubr.bf16.gmra.mrb[0].mxu0 %v745
    %v1860 = vpop.f32.mrb[0].mxu0
    %v1861 = vadd.f32 %v1668, %v1860
    %v1862 = vpop.f32.mrb[0].mxu0
    %v1863 = vadd.f32 %v1670, %v1862
    %v1864 = vpop.f32.mrb[0].mxu0
    %v1865 = vadd.f32 %v1672, %v1864
    %v1866 = vpop.f32.mrb[0].mxu0
    %v1867 = vadd.f32 %v1674, %v1866
    %1868 = vmatprep.mubr.bf16.mxu0 %v750
    %1869 = vmatmul.mubr.bf16.gmra.mrb[0].mxu0 %v749
    %v1870 = vpop.f32.mrb[0].mxu0
    %v1871 = vadd.f32 %v1678, %v1870
    %v1872 = vpop.f32.mrb[0].mxu0
    %v1873 = vadd.f32 %v1680, %v1872
    %v1874 = vpop.f32.mrb[0].mxu0
    %v1875 = vadd.f32 %v1682, %v1874
    %v1876 = vpop.f32.mrb[0].mxu0
    %v1877 = vadd.f32 %v1684, %v1876
    %1878 = vmatprep.mubr.bf16.mxu0 %v754
    %1879 = vmatmul.mubr.bf16.gmra.mrb[0].mxu0 %v753
    %v1880 = vpop.f32.mrb[0].mxu0
    %v1881 = vadd.f32 %v1688, %v1880
    %v1882 = vpop.f32.mrb[0].mxu0
    %v1883 = vadd.f32 %v1690, %v1882
    %v1884 = vpop.f32.mrb[0].mxu0
    %v1885 = vadd.f32 %v1692, %v1884
    %v1886 = vpop.f32.mrb[0].mxu0
    %v1887 = vadd.f32 %v1694, %v1886
    %1888 = vmatprep.mubr.bf16.mxu0 %v758
    %1889 = vmatmul.mubr.bf16.gmra.mrb[0].mxu0 %v757
    %v1890 = vpop.f32.mrb[0].mxu0
    %v1891 = vadd.f32 %v1698, %v1890
    %v1892 = vpop.f32.mrb[0].mxu0
    %v1893 = vadd.f32 %v1700, %v1892
    %v1894 = vpop.f32.mrb[0].mxu0
    %v1895 = vadd.f32 %v1702, %v1894
    %v1896 = vpop.f32.mrb[0].mxu0
    %v1897 = vadd.f32 %v1704, %v1896
    %1898 = vmatprep.mubr.bf16.mxu0 %v762
    %1899 = vmatmul.mubr.bf16.gmra.mrb[0].mxu0 %v761
    %v1900 = vpop.f32.mrb[0].mxu0
    %v1901 = vadd.f32 %v1708, %v1900
    %v1902 = vpop.f32.mrb[0].mxu0
    %v1903 = vadd.f32 %v1710, %v1902
    %v1904 = vpop.f32.mrb[0].mxu0
    %v1905 = vadd.f32 %v1712, %v1904
    %v1906 = vpop.f32.mrb[0].mxu0
    %v1907 = vadd.f32 %v1714, %v1906
    %1908 = vmatprep.mubr.bf16.mxu0 %v766
    %1909 = vmatmul.mubr.bf16.gmra.mrb[0].mxu0 %v765
    %v1910 = vpop.f32.mrb[0].mxu0
    %v1911 = vadd.f32 %v1718, %v1910
    %v1912 = vpop.f32.mrb[0].mxu0
    %v1913 = vadd.f32 %v1720, %v1912
    %v1914 = vpop.f32.mrb[0].mxu0
    %v1915 = vadd.f32 %v1722, %v1914
    %v1916 = vpop.f32.mrb[0].mxu0
    %v1917 = vadd.f32 %v1724, %v1916
    %1918 = vmatprep.mubr.bf16.mxu0 %v770
    %1919 = vmatmul.mubr.bf16.gmra.mrb[0].mxu0 %v769
    %v1920 = vpop.f32.mrb[0].mxu0
    %v1921 = vadd.f32 %v1728, %v1920
    %v1922 = vpop.f32.mrb[0].mxu0
    %v1923 = vadd.f32 %v1730, %v1922
    %v1924 = vpop.f32.mrb[0].mxu0
    %v1925 = vadd.f32 %v1732, %v1924
    %v1926 = vpop.f32.mrb[0].mxu0
    %v1927 = vadd.f32 %v1734, %v1926
    %1928 = vmatprep.mubr.bf16.mxu0 %v774
    %1929 = vmatmul.mubr.bf16.gmra.mrb[0].mxu0 %v773
    %v1930 = vpop.f32.mrb[0].mxu0
    %v1931 = vadd.f32 %v1738, %v1930
    %v1932 = vpop.f32.mrb[0].mxu0
    %v1933 = vadd.f32 %v1740, %v1932
    %v1934 = vpop.f32.mrb[0].mxu0
    %v1935 = vadd.f32 %v1742, %v1934
    %v1936 = vpop.f32.mrb[0].mxu0
    %v1937 = vadd.f32 %v1744, %v1936
    %1938 = vmatprep.mubr.bf16.mxu0 %v778
    %1939 = vmatmul.mubr.bf16.gmra.mrb[0].mxu0 %v777
    %v1940 = vpop.f32.mrb[0].mxu0
    %v1941 = vadd.f32 %v1748, %v1940
    %v1942 = vpop.f32.mrb[0].mxu0
    %v1943 = vadd.f32 %v1750, %v1942
    %v1944 = vpop.f32.mrb[0].mxu0
    %v1945 = vadd.f32 %v1752, %v1944
    %v1946 = vpop.f32.mrb[0].mxu0
    %v1947 = vadd.f32 %v1754, %v1946
    %1948 = vmatprep.mubr.bf16.mxu0 %v782
    %1949 = vmatmul.mubr.bf16.gmra.mrb[0].mxu0 %v781
    %v1950 = vpop.f32.mrb[0].mxu0
    %v1951 = vadd.f32 %v1758, %v1950
    %v1952 = vpop.f32.mrb[0].mxu0
    %v1953 = vadd.f32 %v1760, %v1952
    %v1954 = vpop.f32.mrb[0].mxu0
    %v1955 = vadd.f32 %v1762, %v1954
    %v1956 = vpop.f32.mrb[0].mxu0
    %v1957 = vadd.f32 %v1764, %v1956
    %1958 = vdwg.mxu0
    %1959 = vmatprep.subr.bf16.mxu0 %v1320
    %1960 = vmatpush1.bf16.msra.mxu0 %v1319
    %1961 = vmatprep.subr.bf16.mxu0 %v1324
    %1962 = vmatpush1.bf16.msra.mxu0 %v1323
    %1963 = vmatprep.subr.bf16.mxu0 %v1328
    %1964 = vmatpush1.bf16.msra.mxu0 %v1327
    %1965 = vmatprep.subr.bf16.mxu0 %v1332
    %1966 = vmatpush1.bf16.msra.mxu0 %v1331
    %1967 = vmatprep.subr.bf16.mxu0 %v1336
    %1968 = vmatpush1.bf16.msra.mxu0 %v1335
    %1969 = vmatprep.subr.bf16.mxu0 %v1340
    %1970 = vmatpush1.bf16.msra.mxu0 %v1339
    %1971 = vmatprep.subr.bf16.mxu0 %v1344
    %1972 = vmatpush1.bf16.msra.mxu0 %v1343
    %1973 = vmatprep.subr.bf16.mxu0 %v1348
    %1974 = vmatpush1.bf16.msra.mxu0 %v1347
    %1975 = vmatprep.subr.bf16.mxu0 %v1352
    %1976 = vmatpush1.bf16.msra.mxu0 %v1351
    %1977 = vmatprep.subr.bf16.mxu0 %v1356
    %1978 = vmatpush1.bf16.msra.mxu0 %v1355
    %1979 = vmatprep.subr.bf16.mxu0 %v1360
    %1980 = vmatpush1.bf16.msra.mxu0 %v1359
    %1981 = vmatprep.subr.bf16.mxu0 %v1364
    %1982 = vmatpush1.bf16.msra.mxu0 %v1363
    %1983 = vmatprep.subr.bf16.mxu0 %v1368
    %1984 = vmatpush1.bf16.msra.mxu0 %v1367
    %1985 = vmatprep.subr.bf16.mxu0 %v1372
    %1986 = vmatpush1.bf16.msra.mxu0 %v1371
    %1987 = vmatprep.subr.bf16.mxu0 %v1376
    %1988 = vmatpush1.bf16.msra.mxu0 %v1375
    %1989 = vmatprep.subr.bf16.mxu0 %v1380
    %1990 = vmatpush1.bf16.msra.mxu0 %v1379
    %1991 = vmatprep.mubr.bf16.mxu0 %v720
    %1992 = vmatmul.mubr.bf16.gmra.mrb[0].mxu0 %v719
    %v1993 = vpop.f32.mrb[0].mxu0
    %v1994 = vadd.f32 %v924, %v1993
    %v1995 = vpop.f32.mrb[0].mxu0
    %v1996 = vadd.f32 %v928, %v1995
    %v1997 = vpop.f32.mrb[0].mxu0
    %v1998 = vadd.f32 %v924, %v1997
    %v1999 = vpop.f32.mrb[0].mxu0
    %v2000 = vadd.f32 %v928, %v1999
    %2001 = vmatprep.mubr.bf16.mxu0 %v724
    %2002 = vmatmul.mubr.bf16.gmra.mrb[0].mxu0 %v723
    %v2003 = vpop.f32.mrb[0].mxu0
    %v2004 = vadd.f32 %v924, %v2003
    %v2005 = vpop.f32.mrb[0].mxu0
    %v2006 = vadd.f32 %v928, %v2005
    %v2007 = vpop.f32.mrb[0].mxu0
    %v2008 = vadd.f32 %v924, %v2007
    %v2009 = vpop.f32.mrb[0].mxu0
    %v2010 = vadd.f32 %v928, %v2009
    %2011 = vmatprep.mubr.bf16.mxu0 %v728
    %2012 = vmatmul.mubr.bf16.gmra.mrb[0].mxu0 %v727
    %v2013 = vpop.f32.mrb[0].mxu0
    %v2014 = vadd.f32 %v924, %v2013
    %v2015 = vpop.f32.mrb[0].mxu0
    %v2016 = vadd.f32 %v928, %v2015
    %v2017 = vpop.f32.mrb[0].mxu0
    %v2018 = vadd.f32 %v924, %v2017
    %v2019 = vpop.f32.mrb[0].mxu0
    %v2020 = vadd.f32 %v928, %v2019
    %2021 = vmatprep.mubr.bf16.mxu0 %v732
    %2022 = vmatmul.mubr.bf16.gmra.mrb[0].mxu0 %v731
    %v2023 = vpop.f32.mrb[0].mxu0
    %v2024 = vadd.f32 %v924, %v2023
    %v2025 = vpop.f32.mrb[0].mxu0
    %v2026 = vadd.f32 %v928, %v2025
    %v2027 = vpop.f32.mrb[0].mxu0
    %v2028 = vadd.f32 %v924, %v2027
    %v2029 = vpop.f32.mrb[0].mxu0
    %v2030 = vadd.f32 %v928, %v2029
    %2031 = vmatprep.mubr.bf16.mxu0 %v736
    %2032 = vmatmul.mubr.bf16.gmra.mrb[0].mxu0 %v735
    %v2033 = vpop.f32.mrb[0].mxu0
    %v2034 = vadd.f32 %v924, %v2033
    %v2035 = vpop.f32.mrb[0].mxu0
    %v2036 = vadd.f32 %v928, %v2035
    %v2037 = vpop.f32.mrb[0].mxu0
    %v2038 = vadd.f32 %v924, %v2037
    %v2039 = vpop.f32.mrb[0].mxu0
    %v2040 = vadd.f32 %v928, %v2039
    %2041 = vmatprep.mubr.bf16.mxu0 %v740
    %2042 = vmatmul.mubr.bf16.gmra.mrb[0].mxu0 %v739
    %v2043 = vpop.f32.mrb[0].mxu0
    %v2044 = vadd.f32 %v924, %v2043
    %v2045 = vpop.f32.mrb[0].mxu0
    %v2046 = vadd.f32 %v928, %v2045
    %v2047 = vpop.f32.mrb[0].mxu0
    %v2048 = vadd.f32 %v924, %v2047
    %v2049 = vpop.f32.mrb[0].mxu0
    %v2050 = vadd.f32 %v928, %v2049
    %2051 = vmatprep.mubr.bf16.mxu0 %v744
    %2052 = vmatmul.mubr.bf16.gmra.mrb[0].mxu0 %v743
    %v2053 = vpop.f32.mrb[0].mxu0
    %v2054 = vadd.f32 %v924, %v2053
    %v2055 = vpop.f32.mrb[0].mxu0
    %v2056 = vadd.f32 %v928, %v2055
    %v2057 = vpop.f32.mrb[0].mxu0
    %v2058 = vadd.f32 %v924, %v2057
    %v2059 = vpop.f32.mrb[0].mxu0
    %v2060 = vadd.f32 %v928, %v2059
    %2061 = vmatprep.mubr.bf16.mxu0 %v748
    %2062 = vmatmul.mubr.bf16.gmra.mrb[0].mxu0 %v747
    %v2063 = vpop.f32.mrb[0].mxu0
    %v2064 = vadd.f32 %v924, %v2063
    %v2065 = vpop.f32.mrb[0].mxu0
    %v2066 = vadd.f32 %v928, %v2065
    %v2067 = vpop.f32.mrb[0].mxu0
    %v2068 = vadd.f32 %v924, %v2067
    %v2069 = vpop.f32.mrb[0].mxu0
    %v2070 = vadd.f32 %v928, %v2069
    %2071 = vmatprep.mubr.bf16.mxu0 %v752
    %2072 = vmatmul.mubr.bf16.gmra.mrb[0].mxu0 %v751
    %v2073 = vpop.f32.mrb[0].mxu0
    %v2074 = vadd.f32 %v924, %v2073
    %v2075 = vpop.f32.mrb[0].mxu0
    %v2076 = vadd.f32 %v928, %v2075
    %v2077 = vpop.f32.mrb[0].mxu0
    %v2078 = vadd.f32 %v924, %v2077
    %v2079 = vpop.f32.mrb[0].mxu0
    %v2080 = vadd.f32 %v928, %v2079
    %2081 = vmatprep.mubr.bf16.mxu0 %v756
    %2082 = vmatmul.mubr.bf16.gmra.mrb[0].mxu0 %v755
    %v2083 = vpop.f32.mrb[0].mxu0
    %v2084 = vadd.f32 %v924, %v2083
    %v2085 = vpop.f32.mrb[0].mxu0
    %v2086 = vadd.f32 %v928, %v2085
    %v2087 = vpop.f32.mrb[0].mxu0
    %v2088 = vadd.f32 %v924, %v2087
    %v2089 = vpop.f32.mrb[0].mxu0
    %v2090 = vadd.f32 %v928, %v2089
    %2091 = vmatprep.mubr.bf16.mxu0 %v760
    %2092 = vmatmul.mubr.bf16.gmra.mrb[0].mxu0 %v759
    %v2093 = vpop.f32.mrb[0].mxu0
    %v2094 = vadd.f32 %v924, %v2093
    %v2095 = vpop.f32.mrb[0].mxu0
    %v2096 = vadd.f32 %v928, %v2095
    %v2097 = vpop.f32.mrb[0].mxu0
    %v2098 = vadd.f32 %v924, %v2097
    %v2099 = vpop.f32.mrb[0].mxu0
    %v2100 = vadd.f32 %v928, %v2099
    %2101 = vmatprep.mubr.bf16.mxu0 %v764
    %2102 = vmatmul.mubr.bf16.gmra.mrb[0].mxu0 %v763
    %v2103 = vpop.f32.mrb[0].mxu0
    %v2104 = vadd.f32 %v924, %v2103
    %v2105 = vpop.f32.mrb[0].mxu0
    %v2106 = vadd.f32 %v928, %v2105
    %v2107 = vpop.f32.mrb[0].mxu0
    %v2108 = vadd.f32 %v924, %v2107
    %v2109 = vpop.f32.mrb[0].mxu0
    %v2110 = vadd.f32 %v928, %v2109
    %2111 = vmatprep.mubr.bf16.mxu0 %v768
    %2112 = vmatmul.mubr.bf16.gmra.mrb[0].mxu0 %v767
    %v2113 = vpop.f32.mrb[0].mxu0
    %v2114 = vadd.f32 %v924, %v2113
    %v2115 = vpop.f32.mrb[0].mxu0
    %v2116 = vadd.f32 %v928, %v2115
    %v2117 = vpop.f32.mrb[0].mxu0
    %v2118 = vadd.f32 %v924, %v2117
    %v2119 = vpop.f32.mrb[0].mxu0
    %v2120 = vadd.f32 %v928, %v2119
    %2121 = vmatprep.mubr.bf16.mxu0 %v772
    %2122 = vmatmul.mubr.bf16.gmra.mrb[0].mxu0 %v771
    %v2123 = vpop.f32.mrb[0].mxu0
    %v2124 = vadd.f32 %v924, %v2123
    %v2125 = vpop.f32.mrb[0].mxu0
    %v2126 = vadd.f32 %v928, %v2125
    %v2127 = vpop.f32.mrb[0].mxu0
    %v2128 = vadd.f32 %v924, %v2127
    %v2129 = vpop.f32.mrb[0].mxu0
    %v2130 = vadd.f32 %v928, %v2129
    %2131 = vmatprep.mubr.bf16.mxu0 %v776
    %2132 = vmatmul.mubr.bf16.gmra.mrb[0].mxu0 %v775
    %v2133 = vpop.f32.mrb[0].mxu0
    %v2134 = vadd.f32 %v924, %v2133
    %v2135 = vpop.f32.mrb[0].mxu0
    %v2136 = vadd.f32 %v928, %v2135
    %v2137 = vpop.f32.mrb[0].mxu0
    %v2138 = vadd.f32 %v924, %v2137
    %v2139 = vpop.f32.mrb[0].mxu0
    %v2140 = vadd.f32 %v928, %v2139
    %2141 = vmatprep.mubr.bf16.mxu0 %v780
    %2142 = vmatmul.mubr.bf16.gmra.mrb[0].mxu0 %v779
    %v2143 = vpop.f32.mrb[0].mxu0
    %v2144 = vadd.f32 %v924, %v2143
    %v2145 = vpop.f32.mrb[0].mxu0
    %v2146 = vadd.f32 %v928, %v2145
    %v2147 = vpop.f32.mrb[0].mxu0
    %v2148 = vadd.f32 %v924, %v2147
    %v2149 = vpop.f32.mrb[0].mxu0
    %v2150 = vadd.f32 %v928, %v2149
    %2151 = vdwg.mxu0
    %2152 = vmatprep.subr.bf16.mxu0 %v1384
    %2153 = vmatpush1.bf16.msra.mxu0 %v1383
    %2154 = vmatprep.subr.bf16.mxu0 %v1388
    %2155 = vmatpush1.bf16.msra.mxu0 %v1387
    %2156 = vmatprep.subr.bf16.mxu0 %v1392
    %2157 = vmatpush1.bf16.msra.mxu0 %v1391
    %2158 = vmatprep.subr.bf16.mxu0 %v1396
    %2159 = vmatpush1.bf16.msra.mxu0 %v1395
    %2160 = vmatprep.subr.bf16.mxu0 %v1400
    %2161 = vmatpush1.bf16.msra.mxu0 %v1399
    %2162 = vmatprep.subr.bf16.mxu0 %v1404
    %2163 = vmatpush1.bf16.msra.mxu0 %v1403
    %2164 = vmatprep.subr.bf16.mxu0 %v1408
    %2165 = vmatpush1.bf16.msra.mxu0 %v1407
    %2166 = vmatprep.subr.bf16.mxu0 %v1412
    %2167 = vmatpush1.bf16.msra.mxu0 %v1411
    %2168 = vmatprep.subr.bf16.mxu0 %v1416
    %2169 = vmatpush1.bf16.msra.mxu0 %v1415
    %2170 = vmatprep.subr.bf16.mxu0 %v1420
    %2171 = vmatpush1.bf16.msra.mxu0 %v1419
    %2172 = vmatprep.subr.bf16.mxu0 %v1424
    %2173 = vmatpush1.bf16.msra.mxu0 %v1423
    %2174 = vmatprep.subr.bf16.mxu0 %v1428
    %2175 = vmatpush1.bf16.msra.mxu0 %v1427
    %2176 = vmatprep.subr.bf16.mxu0 %v1432
    %2177 = vmatpush1.bf16.msra.mxu0 %v1431
    %2178 = vmatprep.subr.bf16.mxu0 %v1436
    %2179 = vmatpush1.bf16.msra.mxu0 %v1435
    %2180 = vmatprep.subr.bf16.mxu0 %v1440
    %2181 = vmatpush1.bf16.msra.mxu0 %v1439
    %2182 = vmatprep.subr.bf16.mxu0 %v1444
    %2183 = vmatpush1.bf16.msra.mxu0 %v1443
    %2184 = vmatprep.mubr.bf16.mxu0 %v722
    %2185 = vmatmul.mubr.bf16.gmra.mrb[0].mxu0 %v721
    %v2186 = vpop.f32.mrb[0].mxu0
    %v2187 = vadd.f32 %v1994, %v2186
    %v2188 = vpop.f32.mrb[0].mxu0
    %v2189 = vadd.f32 %v1996, %v2188
    %v2190 = vpop.f32.mrb[0].mxu0
    %v2191 = vadd.f32 %v1998, %v2190
    %v2192 = vpop.f32.mrb[0].mxu0
    %v2193 = vadd.f32 %v2000, %v2192
    %2194 = vmatprep.mubr.bf16.mxu0 %v726
    %2195 = vmatmul.mubr.bf16.gmra.mrb[0].mxu0 %v725
    %v2196 = vpop.f32.mrb[0].mxu0
    %v2197 = vadd.f32 %v2004, %v2196
    %v2198 = vpop.f32.mrb[0].mxu0
    %v2199 = vadd.f32 %v2006, %v2198
    %v2200 = vpop.f32.mrb[0].mxu0
    %v2201 = vadd.f32 %v2008, %v2200
    %v2202 = vpop.f32.mrb[0].mxu0
    %v2203 = vadd.f32 %v2010, %v2202
    %2204 = vmatprep.mubr.bf16.mxu0 %v730
    %2205 = vmatmul.mubr.bf16.gmra.mrb[0].mxu0 %v729
    %v2206 = vpop.f32.mrb[0].mxu0
    %v2207 = vadd.f32 %v2014, %v2206
    %v2208 = vpop.f32.mrb[0].mxu0
    %v2209 = vadd.f32 %v2016, %v2208
    %v2210 = vpop.f32.mrb[0].mxu0
    %v2211 = vadd.f32 %v2018, %v2210
    %v2212 = vpop.f32.mrb[0].mxu0
    %v2213 = vadd.f32 %v2020, %v2212
    %2214 = vmatprep.mubr.bf16.mxu0 %v734
    %2215 = vmatmul.mubr.bf16.gmra.mrb[0].mxu0 %v733
    %v2216 = vpop.f32.mrb[0].mxu0
    %v2217 = vadd.f32 %v2024, %v2216
    %v2218 = vpop.f32.mrb[0].mxu0
    %v2219 = vadd.f32 %v2026, %v2218
    %v2220 = vpop.f32.mrb[0].mxu0
    %v2221 = vadd.f32 %v2028, %v2220
    %v2222 = vpop.f32.mrb[0].mxu0
    %v2223 = vadd.f32 %v2030, %v2222
    %2224 = vmatprep.mubr.bf16.mxu0 %v738
    %2225 = vmatmul.mubr.bf16.gmra.mrb[0].mxu0 %v737
    %v2226 = vpop.f32.mrb[0].mxu0
    %v2227 = vadd.f32 %v2034, %v2226
    %v2228 = vpop.f32.mrb[0].mxu0
    %v2229 = vadd.f32 %v2036, %v2228
    %v2230 = vpop.f32.mrb[0].mxu0
    %v2231 = vadd.f32 %v2038, %v2230
    %v2232 = vpop.f32.mrb[0].mxu0
    %v2233 = vadd.f32 %v2040, %v2232
    %2234 = vmatprep.mubr.bf16.mxu0 %v742
    %2235 = vmatmul.mubr.bf16.gmra.mrb[0].mxu0 %v741
    %v2236 = vpop.f32.mrb[0].mxu0
    %v2237 = vadd.f32 %v2044, %v2236
    %v2238 = vpop.f32.mrb[0].mxu0
    %v2239 = vadd.f32 %v2046, %v2238
    %v2240 = vpop.f32.mrb[0].mxu0
    %v2241 = vadd.f32 %v2048, %v2240
    %v2242 = vpop.f32.mrb[0].mxu0
    %v2243 = vadd.f32 %v2050, %v2242
    %2244 = vmatprep.mubr.bf16.mxu0 %v746
    %2245 = vmatmul.mubr.bf16.gmra.mrb[0].mxu0 %v745
    %v2246 = vpop.f32.mrb[0].mxu0
    %v2247 = vadd.f32 %v2054, %v2246
    %v2248 = vpop.f32.mrb[0].mxu0
    %v2249 = vadd.f32 %v2056, %v2248
    %v2250 = vpop.f32.mrb[0].mxu0
    %v2251 = vadd.f32 %v2058, %v2250
    %v2252 = vpop.f32.mrb[0].mxu0
    %v2253 = vadd.f32 %v2060, %v2252
    %2254 = vmatprep.mubr.bf16.mxu0 %v750
    %2255 = vmatmul.mubr.bf16.gmra.mrb[0].mxu0 %v749
    %v2256 = vpop.f32.mrb[0].mxu0
    %v2257 = vadd.f32 %v2064, %v2256
    %v2258 = vpop.f32.mrb[0].mxu0
    %v2259 = vadd.f32 %v2066, %v2258
    %v2260 = vpop.f32.mrb[0].mxu0
    %v2261 = vadd.f32 %v2068, %v2260
    %v2262 = vpop.f32.mrb[0].mxu0
    %v2263 = vadd.f32 %v2070, %v2262
    %2264 = vmatprep.mubr.bf16.mxu0 %v754
    %2265 = vmatmul.mubr.bf16.gmra.mrb[0].mxu0 %v753
    %v2266 = vpop.f32.mrb[0].mxu0
    %v2267 = vadd.f32 %v2074, %v2266
    %v2268 = vpop.f32.mrb[0].mxu0
    %v2269 = vadd.f32 %v2076, %v2268
    %v2270 = vpop.f32.mrb[0].mxu0
    %v2271 = vadd.f32 %v2078, %v2270
    %v2272 = vpop.f32.mrb[0].mxu0
    %v2273 = vadd.f32 %v2080, %v2272
    %2274 = vmatprep.mubr.bf16.mxu0 %v758
    %2275 = vmatmul.mubr.bf16.gmra.mrb[0].mxu0 %v757
    %v2276 = vpop.f32.mrb[0].mxu0
    %v2277 = vadd.f32 %v2084, %v2276
    %v2278 = vpop.f32.mrb[0].mxu0
    %v2279 = vadd.f32 %v2086, %v2278
    %v2280 = vpop.f32.mrb[0].mxu0
    %v2281 = vadd.f32 %v2088, %v2280
    %v2282 = vpop.f32.mrb[0].mxu0
    %v2283 = vadd.f32 %v2090, %v2282
    %2284 = vmatprep.mubr.bf16.mxu0 %v762
    %2285 = vmatmul.mubr.bf16.gmra.mrb[0].mxu0 %v761
    %v2286 = vpop.f32.mrb[0].mxu0
    %v2287 = vadd.f32 %v2094, %v2286
    %v2288 = vpop.f32.mrb[0].mxu0
    %v2289 = vadd.f32 %v2096, %v2288
    %v2290 = vpop.f32.mrb[0].mxu0
    %v2291 = vadd.f32 %v2098, %v2290
    %v2292 = vpop.f32.mrb[0].mxu0
    %v2293 = vadd.f32 %v2100, %v2292
    %2294 = vmatprep.mubr.bf16.mxu0 %v766
    %2295 = vmatmul.mubr.bf16.gmra.mrb[0].mxu0 %v765
    %v2296 = vpop.f32.mrb[0].mxu0
    %v2297 = vadd.f32 %v2104, %v2296
    %v2298 = vpop.f32.mrb[0].mxu0
    %v2299 = vadd.f32 %v2106, %v2298
    %v2300 = vpop.f32.mrb[0].mxu0
    %v2301 = vadd.f32 %v2108, %v2300
    %v2302 = vpop.f32.mrb[0].mxu0
    %v2303 = vadd.f32 %v2110, %v2302
    %2304 = vmatprep.mubr.bf16.mxu0 %v770
    %2305 = vmatmul.mubr.bf16.gmra.mrb[0].mxu0 %v769
    %v2306 = vpop.f32.mrb[0].mxu0
    %v2307 = vadd.f32 %v2114, %v2306
    %v2308 = vpop.f32.mrb[0].mxu0
    %v2309 = vadd.f32 %v2116, %v2308
    %v2310 = vpop.f32.mrb[0].mxu0
    %v2311 = vadd.f32 %v2118, %v2310
    %v2312 = vpop.f32.mrb[0].mxu0
    %v2313 = vadd.f32 %v2120, %v2312
    %2314 = vmatprep.mubr.bf16.mxu0 %v774
    %2315 = vmatmul.mubr.bf16.gmra.mrb[0].mxu0 %v773
    %v2316 = vpop.f32.mrb[0].mxu0
    %v2317 = vadd.f32 %v2124, %v2316
    %v2318 = vpop.f32.mrb[0].mxu0
    %v2319 = vadd.f32 %v2126, %v2318
    %v2320 = vpop.f32.mrb[0].mxu0
    %v2321 = vadd.f32 %v2128, %v2320
    %v2322 = vpop.f32.mrb[0].mxu0
    %v2323 = vadd.f32 %v2130, %v2322
    %2324 = vmatprep.mubr.bf16.mxu0 %v778
    %2325 = vmatmul.mubr.bf16.gmra.mrb[0].mxu0 %v777
    %v2326 = vpop.f32.mrb[0].mxu0
    %v2327 = vadd.f32 %v2134, %v2326
    %v2328 = vpop.f32.mrb[0].mxu0
    %v2329 = vadd.f32 %v2136, %v2328
    %v2330 = vpop.f32.mrb[0].mxu0
    %v2331 = vadd.f32 %v2138, %v2330
    %v2332 = vpop.f32.mrb[0].mxu0
    %v2333 = vadd.f32 %v2140, %v2332
    %2334 = vmatprep.mubr.bf16.mxu0 %v782
    %2335 = vmatmul.mubr.bf16.gmra.mrb[0].mxu0 %v781
    %v2336 = vpop.f32.mrb[0].mxu0
    %v2337 = vadd.f32 %v2144, %v2336
    %v2338 = vpop.f32.mrb[0].mxu0
    %v2339 = vadd.f32 %v2146, %v2338
    %v2340 = vpop.f32.mrb[0].mxu0
    %v2341 = vadd.f32 %v2148, %v2340
    %v2342 = vpop.f32.mrb[0].mxu0
    %v2343 = vadd.f32 %v2150, %v2342
    %2344 = vdwg.mxu0
    %v2345 = vmax.f32 %v1801, 0.0
    %v2346 = vmax.f32 %v1803, 0.0
    %v2347 = vmax.f32 %v2187, 0.0
    %v2348 = vmax.f32 %v2189, 0.0
    %v2349 = vmax.f32 %v1805, 0.0
    %v2350 = vmax.f32 %v1807, 0.0
    %v2351 = vmax.f32 %v2191, 0.0
    %v2352 = vmax.f32 %v2193, 0.0
    %v2353 = vmax.f32 %v1811, 0.0
    %v2354 = vmax.f32 %v1813, 0.0
    %v2355 = vmax.f32 %v2197, 0.0
    %v2356 = vmax.f32 %v2199, 0.0
    %v2357 = vmax.f32 %v1815, 0.0
    %v2358 = vmax.f32 %v1817, 0.0
    %v2359 = vmax.f32 %v2201, 0.0
    %v2360 = vmax.f32 %v2203, 0.0
    %v2361 = vmax.f32 %v1821, 0.0
    %v2362 = vmax.f32 %v1823, 0.0
    %v2363 = vmax.f32 %v2207, 0.0
    %v2364 = vmax.f32 %v2209, 0.0
    %v2365 = vmax.f32 %v1825, 0.0
    %v2366 = vmax.f32 %v1827, 0.0
    %v2367 = vmax.f32 %v2211, 0.0
    %v2368 = vmax.f32 %v2213, 0.0
    %v2369 = vmax.f32 %v1831, 0.0
    %v2370 = vmax.f32 %v1833, 0.0
    %v2371 = vmax.f32 %v2217, 0.0
    %v2372 = vmax.f32 %v2219, 0.0
    %v2373 = vmax.f32 %v1835, 0.0
    %v2374 = vmax.f32 %v1837, 0.0
    %v2375 = vmax.f32 %v2221, 0.0
    %v2376 = vmax.f32 %v2223, 0.0
    %v2377 = vmax.f32 %v1841, 0.0
    %v2378 = vmax.f32 %v1843, 0.0
    %v2379 = vmax.f32 %v2227, 0.0
    %v2380 = vmax.f32 %v2229, 0.0
    %v2381 = vmax.f32 %v1845, 0.0
    %v2382 = vmax.f32 %v1847, 0.0
    %v2383 = vmax.f32 %v2231, 0.0
    %v2384 = vmax.f32 %v2233, 0.0
    %v2385 = vmax.f32 %v1851, 0.0
    %v2386 = vmax.f32 %v1853, 0.0
    %v2387 = vmax.f32 %v2237, 0.0
    %v2388 = vmax.f32 %v2239, 0.0
    %v2389 = vmax.f32 %v1855, 0.0
    %v2390 = vmax.f32 %v1857, 0.0
    %v2391 = vmax.f32 %v2241, 0.0
    %v2392 = vmax.f32 %v2243, 0.0
    %v2393 = vmax.f32 %v1861, 0.0
    %v2394 = vmax.f32 %v1863, 0.0
    %v2395 = vmax.f32 %v2247, 0.0
    %v2396 = vmax.f32 %v2249, 0.0
    %v2397 = vmax.f32 %v1865, 0.0
    %v2398 = vmax.f32 %v1867, 0.0
    %v2399 = vmax.f32 %v2251, 0.0
    %v2400 = vmax.f32 %v2253, 0.0
    %v2401 = vmax.f32 %v1871, 0.0
    %v2402 = vmax.f32 %v1873, 0.0
    %v2403 = vmax.f32 %v2257, 0.0
    %v2404 = vmax.f32 %v2259, 0.0
    %v2405 = vmax.f32 %v1875, 0.0
    %v2406 = vmax.f32 %v1877, 0.0
    %v2407 = vmax.f32 %v2261, 0.0
    %v2408 = vmax.f32 %v2263, 0.0
    %v2409 = vmax.f32 %v1881, 0.0
    %v2410 = vmax.f32 %v1883, 0.0
    %v2411 = vmax.f32 %v2267, 0.0
    %v2412 = vmax.f32 %v2269, 0.0
    %v2413 = vmax.f32 %v1885, 0.0
    %v2414 = vmax.f32 %v1887, 0.0
    %v2415 = vmax.f32 %v2271, 0.0
    %v2416 = vmax.f32 %v2273, 0.0
    %v2417 = vmax.f32 %v1891, 0.0
    %v2418 = vmax.f32 %v1893, 0.0
    %v2419 = vmax.f32 %v2277, 0.0
    %v2420 = vmax.f32 %v2279, 0.0
    %v2421 = vmax.f32 %v1895, 0.0
    %v2422 = vmax.f32 %v1897, 0.0
    %v2423 = vmax.f32 %v2281, 0.0
    %v2424 = vmax.f32 %v2283, 0.0
    %v2425 = vmax.f32 %v1901, 0.0
    %v2426 = vmax.f32 %v1903, 0.0
    %v2427 = vmax.f32 %v2287, 0.0
    %v2428 = vmax.f32 %v2289, 0.0
    %v2429 = vmax.f32 %v1905, 0.0
    %v2430 = vmax.f32 %v1907, 0.0
    %v2431 = vmax.f32 %v2291, 0.0
    %v2432 = vmax.f32 %v2293, 0.0
    %v2433 = vmax.f32 %v1911, 0.0
    %v2434 = vmax.f32 %v1913, 0.0
    %v2435 = vmax.f32 %v2297, 0.0
    %v2436 = vmax.f32 %v2299, 0.0
    %v2437 = vmax.f32 %v1915, 0.0
    %v2438 = vmax.f32 %v1917, 0.0
    %v2439 = vmax.f32 %v2301, 0.0
    %v2440 = vmax.f32 %v2303, 0.0
    %v2441 = vmax.f32 %v1921, 0.0
    %v2442 = vmax.f32 %v1923, 0.0
    %v2443 = vmax.f32 %v2307, 0.0
    %v2444 = vmax.f32 %v2309, 0.0
    %v2445 = vmax.f32 %v1925, 0.0
    %v2446 = vmax.f32 %v1927, 0.0
    %v2447 = vmax.f32 %v2311, 0.0
    %v2448 = vmax.f32 %v2313, 0.0
    %v2449 = vmax.f32 %v1931, 0.0
    %v2450 = vmax.f32 %v1933, 0.0
    %v2451 = vmax.f32 %v2317, 0.0
    %v2452 = vmax.f32 %v2319, 0.0
    %v2453 = vmax.f32 %v1935, 0.0
    %v2454 = vmax.f32 %v1937, 0.0
    %v2455 = vmax.f32 %v2321, 0.0
    %v2456 = vmax.f32 %v2323, 0.0
    %v2457 = vmax.f32 %v1941, 0.0
    %v2458 = vmax.f32 %v1943, 0.0
    %v2459 = vmax.f32 %v2327, 0.0
    %v2460 = vmax.f32 %v2329, 0.0
    %v2461 = vmax.f32 %v1945, 0.0
    %v2462 = vmax.f32 %v1947, 0.0
    %v2463 = vmax.f32 %v2331, 0.0
    %v2464 = vmax.f32 %v2333, 0.0
    %v2465 = vmax.f32 %v1951, 0.0
    %v2466 = vmax.f32 %v1953, 0.0
    %v2467 = vmax.f32 %v2337, 0.0
    %v2468 = vmax.f32 %v2339, 0.0
    %v2469 = vmax.f32 %v1955, 0.0
    %v2470 = vmax.f32 %v1957, 0.0
    %v2471 = vmax.f32 %v2341, 0.0
    %v2472 = vmax.f32 %v2343, 0.0
    %v2473 = vpack.c.bf16 %v2349, %v2345
    %v2474 = vpack.c.bf16 %v2350, %v2346
    %v2475 = vpack.c.bf16 %v2351, %v2347
    %v2476 = vpack.c.bf16 %v2352, %v2348
    %v2477 = vpack.c.bf16 %v2357, %v2353
    %v2478 = vpack.c.bf16 %v2358, %v2354
    %v2479 = vpack.c.bf16 %v2359, %v2355
    %v2480 = vpack.c.bf16 %v2360, %v2356
    %v2481 = vpack.c.bf16 %v2365, %v2361
    %v2482 = vpack.c.bf16 %v2366, %v2362
    %v2483 = vpack.c.bf16 %v2367, %v2363
    %v2484 = vpack.c.bf16 %v2368, %v2364
    %v2485 = vpack.c.bf16 %v2373, %v2369
    %v2486 = vpack.c.bf16 %v2374, %v2370
    %v2487 = vpack.c.bf16 %v2375, %v2371
    %v2488 = vpack.c.bf16 %v2376, %v2372
    %v2489 = vpack.c.bf16 %v2381, %v2377
    %v2490 = vpack.c.bf16 %v2382, %v2378
    %v2491 = vpack.c.bf16 %v2383, %v2379
    %v2492 = vpack.c.bf16 %v2384, %v2380
    %v2493 = vpack.c.bf16 %v2389, %v2385
    %v2494 = vpack.c.bf16 %v2390, %v2386
    %v2495 = vpack.c.bf16 %v2391, %v2387
    %v2496 = vpack.c.bf16 %v2392, %v2388
    %v2497 = vpack.c.bf16 %v2397, %v2393
    %v2498 = vpack.c.bf16 %v2398, %v2394
    %v2499 = vpack.c.bf16 %v2399, %v2395
    %v2500 = vpack.c.bf16 %v2400, %v2396
    %v2501 = vpack.c.bf16 %v2405, %v2401
    %v2502 = vpack.c.bf16 %v2406, %v2402
    %v2503 = vpack.c.bf16 %v2407, %v2403
    %v2504 = vpack.c.bf16 %v2408, %v2404
    %v2505 = vpack.c.bf16 %v2413, %v2409
    %v2506 = vpack.c.bf16 %v2414, %v2410
    %v2507 = vpack.c.bf16 %v2415, %v2411
    %v2508 = vpack.c.bf16 %v2416, %v2412
    %v2509 = vpack.c.bf16 %v2421, %v2417
    %v2510 = vpack.c.bf16 %v2422, %v2418
    %v2511 = vpack.c.bf16 %v2423, %v2419
    %v2512 = vpack.c.bf16 %v2424, %v2420
    %v2513 = vpack.c.bf16 %v2429, %v2425
    %v2514 = vpack.c.bf16 %v2430, %v2426
    %v2515 = vpack.c.bf16 %v2431, %v2427
    %v2516 = vpack.c.bf16 %v2432, %v2428
    %v2517 = vpack.c.bf16 %v2437, %v2433
    %v2518 = vpack.c.bf16 %v2438, %v2434
    %v2519 = vpack.c.bf16 %v2439, %v2435
    %v2520 = vpack.c.bf16 %v2440, %v2436
    %v2521 = vpack.c.bf16 %v2445, %v2441
    %v2522 = vpack.c.bf16 %v2446, %v2442
    %v2523 = vpack.c.bf16 %v2447, %v2443
    %v2524 = vpack.c.bf16 %v2448, %v2444
    %v2525 = vpack.c.bf16 %v2453, %v2449
    %v2526 = vpack.c.bf16 %v2454, %v2450
    %v2527 = vpack.c.bf16 %v2455, %v2451
    %v2528 = vpack.c.bf16 %v2456, %v2452
    %v2529 = vpack.c.bf16 %v2461, %v2457
    %v2530 = vpack.c.bf16 %v2462, %v2458
    %v2531 = vpack.c.bf16 %v2463, %v2459
    %v2532 = vpack.c.bf16 %v2464, %v2460
    %v2533 = vpack.c.bf16 %v2469, %v2465
    %v2534 = vpack.c.bf16 %v2470, %v2466
    %v2535 = vpack.c.bf16 %v2471, %v2467
    %v2536 = vpack.c.bf16 %v2472, %v2468
    %v2537 = vld [vmem:[#allocation4] sm:$0xff]
    %v2538 = vld [vmem:[#allocation4 + $0x8] sm:$0xff]
    %v2539 = vld [vmem:[#allocation4 + $0x10] sm:$0xff]
    %v2540 = vld [vmem:[#allocation4 + $0x18] sm:$0xff]
    %v2541 = vld [vmem:[#allocation4 + $0x20] sm:$0xff]
    %v2542 = vld [vmem:[#allocation4 + $0x28] sm:$0xff]
    %v2543 = vld [vmem:[#allocation4 + $0x30] sm:$0xff]
    %v2544 = vld [vmem:[#allocation4 + $0x38] sm:$0xff]
    %v2545 = vld [vmem:[#allocation4 + $0x40] sm:$0xff]
    %v2546 = vld [vmem:[#allocation4 + $0x48] sm:$0xff]
    %v2547 = vld [vmem:[#allocation4 + $0x50] sm:$0xff]
    %v2548 = vld [vmem:[#allocation4 + $0x58] sm:$0xff]
    %v2549 = vld [vmem:[#allocation4 + $0x60] sm:$0xff]
    %v2550 = vld [vmem:[#allocation4 + $0x68] sm:$0xff]
    %v2551 = vld [vmem:[#allocation4 + $0x70] sm:$0xff]
    %v2552 = vld [vmem:[#allocation4 + $0x78] sm:$0xff]
    %v2553 = vld [vmem:[#allocation4 + $0x80] sm:$0xff]
    %v2554 = vld [vmem:[#allocation4 + $0x88] sm:$0xff]
    %v2555 = vld [vmem:[#allocation4 + $0x90] sm:$0xff]
    %v2556 = vld [vmem:[#allocation4 + $0x98] sm:$0xff]
    %v2557 = vld [vmem:[#allocation4 + $0xa0] sm:$0xff]
    %v2558 = vld [vmem:[#allocation4 + $0xa8] sm:$0xff]
    %v2559 = vld [vmem:[#allocation4 + $0xb0] sm:$0xff]
    %v2560 = vld [vmem:[#allocation4 + $0xb8] sm:$0xff]
    %v2561 = vld [vmem:[#allocation4 + $0xc0] sm:$0xff]
    %v2562 = vld [vmem:[#allocation4 + $0xc8] sm:$0xff]
    %v2563 = vld [vmem:[#allocation4 + $0xd0] sm:$0xff]
    %v2564 = vld [vmem:[#allocation4 + $0xd8] sm:$0xff]
    %v2565 = vld [vmem:[#allocation4 + $0xe0] sm:$0xff]
    %v2566 = vld [vmem:[#allocation4 + $0xe8] sm:$0xff]
    %v2567 = vld [vmem:[#allocation4 + $0xf0] sm:$0xff]
    %v2568 = vld [vmem:[#allocation4 + $0xf8] sm:$0xff]
    %v2569 = vld [vmem:[#allocation4 + $0x100] sm:$0xff]
    %v2570 = vld [vmem:[#allocation4 + $0x108] sm:$0xff]
    %v2571 = vld [vmem:[#allocation4 + $0x110] sm:$0xff]
    %v2572 = vld [vmem:[#allocation4 + $0x118] sm:$0xff]
    %v2573 = vld [vmem:[#allocation4 + $0x120] sm:$0xff]
    %v2574 = vld [vmem:[#allocation4 + $0x128] sm:$0xff]
    %v2575 = vld [vmem:[#allocation4 + $0x130] sm:$0xff]
    %v2576 = vld [vmem:[#allocation4 + $0x138] sm:$0xff]
    %v2577 = vld [vmem:[#allocation4 + $0x140] sm:$0xff]
    %v2578 = vld [vmem:[#allocation4 + $0x148] sm:$0xff]
    %v2579 = vld [vmem:[#allocation4 + $0x150] sm:$0xff]
    %v2580 = vld [vmem:[#allocation4 + $0x158] sm:$0xff]
    %v2581 = vld [vmem:[#allocation4 + $0x160] sm:$0xff]
    %v2582 = vld [vmem:[#allocation4 + $0x168] sm:$0xff]
    %v2583 = vld [vmem:[#allocation4 + $0x170] sm:$0xff]
    %v2584 = vld [vmem:[#allocation4 + $0x178] sm:$0xff]
    %v2585 = vld [vmem:[#allocation4 + $0x180] sm:$0xff]
    %v2586 = vld [vmem:[#allocation4 + $0x188] sm:$0xff]
    %v2587 = vld [vmem:[#allocation4 + $0x190] sm:$0xff]
    %v2588 = vld [vmem:[#allocation4 + $0x198] sm:$0xff]
    %v2589 = vld [vmem:[#allocation4 + $0x1a0] sm:$0xff]
    %v2590 = vld [vmem:[#allocation4 + $0x1a8] sm:$0xff]
    %v2591 = vld [vmem:[#allocation4 + $0x1b0] sm:$0xff]
    %v2592 = vld [vmem:[#allocation4 + $0x1b8] sm:$0xff]
    %v2593 = vld [vmem:[#allocation4 + $0x1c0] sm:$0xff]
    %v2594 = vld [vmem:[#allocation4 + $0x1c8] sm:$0xff]
    %v2595 = vld [vmem:[#allocation4 + $0x1d0] sm:$0xff]
    %v2596 = vld [vmem:[#allocation4 + $0x1d8] sm:$0xff]
    %v2597 = vld [vmem:[#allocation4 + $0x1e0] sm:$0xff]
    %v2598 = vld [vmem:[#allocation4 + $0x1e8] sm:$0xff]
    %v2599 = vld [vmem:[#allocation4 + $0x1f0] sm:$0xff]
    %v2600 = vld [vmem:[#allocation4 + $0x1f8] sm:$0xff]
    %v2601 = vld [vmem:[#allocation4 + $0x200] sm:$0xff]
    %v2602 = vld [vmem:[#allocation4 + $0x208] sm:$0xff]
    %v2603 = vld [vmem:[#allocation4 + $0x210] sm:$0xff]
    %v2604 = vld [vmem:[#allocation4 + $0x218] sm:$0xff]
    %v2605 = vld [vmem:[#allocation4 + $0x220] sm:$0xff]
    %v2606 = vld [vmem:[#allocation4 + $0x228] sm:$0xff]
    %v2607 = vld [vmem:[#allocation4 + $0x230] sm:$0xff]
    %v2608 = vld [vmem:[#allocation4 + $0x238] sm:$0xff]
    %v2609 = vld [vmem:[#allocation4 + $0x240] sm:$0xff]
    %v2610 = vld [vmem:[#allocation4 + $0x248] sm:$0xff]
    %v2611 = vld [vmem:[#allocation4 + $0x250] sm:$0xff]
    %v2612 = vld [vmem:[#allocation4 + $0x258] sm:$0xff]
    %v2613 = vld [vmem:[#allocation4 + $0x260] sm:$0xff]
    %v2614 = vld [vmem:[#allocation4 + $0x268] sm:$0xff]
    %v2615 = vld [vmem:[#allocation4 + $0x270] sm:$0xff]
    %v2616 = vld [vmem:[#allocation4 + $0x278] sm:$0xff]
    %v2617 = vld [vmem:[#allocation4 + $0x280] sm:$0xff]
    %v2618 = vld [vmem:[#allocation4 + $0x288] sm:$0xff]
    %v2619 = vld [vmem:[#allocation4 + $0x290] sm:$0xff]
    %v2620 = vld [vmem:[#allocation4 + $0x298] sm:$0xff]
    %v2621 = vld [vmem:[#allocation4 + $0x2a0] sm:$0xff]
    %v2622 = vld [vmem:[#allocation4 + $0x2a8] sm:$0xff]
    %v2623 = vld [vmem:[#allocation4 + $0x2b0] sm:$0xff]
    %v2624 = vld [vmem:[#allocation4 + $0x2b8] sm:$0xff]
    %v2625 = vld [vmem:[#allocation4 + $0x2c0] sm:$0xff]
    %v2626 = vld [vmem:[#allocation4 + $0x2c8] sm:$0xff]
    %v2627 = vld [vmem:[#allocation4 + $0x2d0] sm:$0xff]
    %v2628 = vld [vmem:[#allocation4 + $0x2d8] sm:$0xff]
    %v2629 = vld [vmem:[#allocation4 + $0x2e0] sm:$0xff]
    %v2630 = vld [vmem:[#allocation4 + $0x2e8] sm:$0xff]
    %v2631 = vld [vmem:[#allocation4 + $0x2f0] sm:$0xff]
    %v2632 = vld [vmem:[#allocation4 + $0x2f8] sm:$0xff]
    %v2633 = vld [vmem:[#allocation4 + $0x300] sm:$0xff]
    %v2634 = vld [vmem:[#allocation4 + $0x308] sm:$0xff]
    %v2635 = vld [vmem:[#allocation4 + $0x310] sm:$0xff]
    %v2636 = vld [vmem:[#allocation4 + $0x318] sm:$0xff]
    %v2637 = vld [vmem:[#allocation4 + $0x320] sm:$0xff]
    %v2638 = vld [vmem:[#allocation4 + $0x328] sm:$0xff]
    %v2639 = vld [vmem:[#allocation4 + $0x330] sm:$0xff]
    %v2640 = vld [vmem:[#allocation4 + $0x338] sm:$0xff]
    %v2641 = vld [vmem:[#allocation4 + $0x340] sm:$0xff]
    %v2642 = vld [vmem:[#allocation4 + $0x348] sm:$0xff]
    %v2643 = vld [vmem:[#allocation4 + $0x350] sm:$0xff]
    %v2644 = vld [vmem:[#allocation4 + $0x358] sm:$0xff]
    %v2645 = vld [vmem:[#allocation4 + $0x360] sm:$0xff]
    %v2646 = vld [vmem:[#allocation4 + $0x368] sm:$0xff]
    %v2647 = vld [vmem:[#allocation4 + $0x370] sm:$0xff]
    %v2648 = vld [vmem:[#allocation4 + $0x378] sm:$0xff]
    %v2649 = vld [vmem:[#allocation4 + $0x380] sm:$0xff]
    %v2650 = vld [vmem:[#allocation4 + $0x388] sm:$0xff]
    %v2651 = vld [vmem:[#allocation4 + $0x390] sm:$0xff]
    %v2652 = vld [vmem:[#allocation4 + $0x398] sm:$0xff]
    %v2653 = vld [vmem:[#allocation4 + $0x3a0] sm:$0xff]
    %v2654 = vld [vmem:[#allocation4 + $0x3a8] sm:$0xff]
    %v2655 = vld [vmem:[#allocation4 + $0x3b0] sm:$0xff]
    %v2656 = vld [vmem:[#allocation4 + $0x3b8] sm:$0xff]
    %v2657 = vld [vmem:[#allocation4 + $0x3c0] sm:$0xff]
    %v2658 = vld [vmem:[#allocation4 + $0x3c8] sm:$0xff]
    %v2659 = vld [vmem:[#allocation4 + $0x3d0] sm:$0xff]
    %v2660 = vld [vmem:[#allocation4 + $0x3d8] sm:$0xff]
    %v2661 = vld [vmem:[#allocation4 + $0x3e0] sm:$0xff]
    %v2662 = vld [vmem:[#allocation4 + $0x3e8] sm:$0xff]
    %v2663 = vld [vmem:[#allocation4 + $0x3f0] sm:$0xff]
    %v2664 = vld [vmem:[#allocation4 + $0x3f8] sm:$0xff]
    %v2665 = vld [vmem:[%s6] sm:$0xf]
    %v2667 = vlaneseq
    %v2668 = vshrl.u32 %v2667, 7
    %v2669 = vsub.s32 0, %v2668
    %v2670 = vrot.slane %v2665, %v2669
    %v2671 = vlaneseq
    %v2672 = vshrl.u32 %v2671, 7
    %v2673 = vsub.s32 1, %v2672
    %v2674 = vrot.slane %v2665, %v2673
    %v2675 = vlaneseq
    %v2676 = vshrl.u32 %v2675, 7
    %v2677 = vsub.s32 2, %v2676
    %v2678 = vrot.slane %v2665, %v2677
    %v2679 = vlaneseq
    %v2680 = vshrl.u32 %v2679, 7
    %v2681 = vsub.s32 3, %v2680
    %v2682 = vrot.slane %v2665, %v2681
    %v2815 = vunpack.c.l.b16 %v2537
    %v2816 = vunpack.c.h.b16 %v2537
    %v2817 = vunpack.c.l.b16 %v2538
    %v2818 = vunpack.c.h.b16 %v2538
    %v2819 = vunpack.c.l.b16 %v2539
    %v2820 = vunpack.c.h.b16 %v2539
    %v2821 = vunpack.c.l.b16 %v2540
    %v2822 = vunpack.c.h.b16 %v2540
    %v2823 = vunpack.c.l.b16 %v2541
    %v2824 = vunpack.c.h.b16 %v2541
    %v2825 = vunpack.c.l.b16 %v2542
    %v2826 = vunpack.c.h.b16 %v2542
    %v2827 = vunpack.c.l.b16 %v2543
    %v2828 = vunpack.c.h.b16 %v2543
    %v2829 = vunpack.c.l.b16 %v2544
    %v2830 = vunpack.c.h.b16 %v2544
    %v2831 = vunpack.c.l.b16 %v2545
    %v2832 = vunpack.c.h.b16 %v2545
    %v2833 = vunpack.c.l.b16 %v2546
    %v2834 = vunpack.c.h.b16 %v2546
    %v2835 = vunpack.c.l.b16 %v2547
    %v2836 = vunpack.c.h.b16 %v2547
    %v2837 = vunpack.c.l.b16 %v2548
    %v2838 = vunpack.c.h.b16 %v2548
    %v2839 = vunpack.c.l.b16 %v2549
    %v2840 = vunpack.c.h.b16 %v2549
    %v2841 = vunpack.c.l.b16 %v2550
    %v2842 = vunpack.c.h.b16 %v2550
    %v2843 = vunpack.c.l.b16 %v2551
    %v2844 = vunpack.c.h.b16 %v2551
    %v2845 = vunpack.c.l.b16 %v2552
    %v2846 = vunpack.c.h.b16 %v2552
    %v2847 = vunpack.c.l.b16 %v2553
    %v2848 = vunpack.c.h.b16 %v2553
    %v2849 = vunpack.c.l.b16 %v2554
    %v2850 = vunpack.c.h.b16 %v2554
    %v2851 = vunpack.c.l.b16 %v2555
    %v2852 = vunpack.c.h.b16 %v2555
    %v2853 = vunpack.c.l.b16 %v2556
    %v2854 = vunpack.c.h.b16 %v2556
    %v2855 = vunpack.c.l.b16 %v2557
    %v2856 = vunpack.c.h.b16 %v2557
    %v2857 = vunpack.c.l.b16 %v2558
    %v2858 = vunpack.c.h.b16 %v2558
    %v2859 = vunpack.c.l.b16 %v2559
    %v2860 = vunpack.c.h.b16 %v2559
    %v2861 = vunpack.c.l.b16 %v2560
    %v2862 = vunpack.c.h.b16 %v2560
    %v2863 = vunpack.c.l.b16 %v2561
    %v2864 = vunpack.c.h.b16 %v2561
    %v2865 = vunpack.c.l.b16 %v2562
    %v2866 = vunpack.c.h.b16 %v2562
    %v2867 = vunpack.c.l.b16 %v2563
    %v2868 = vunpack.c.h.b16 %v2563
    %v2869 = vunpack.c.l.b16 %v2564
    %v2870 = vunpack.c.h.b16 %v2564
    %v2871 = vunpack.c.l.b16 %v2565
    %v2872 = vunpack.c.h.b16 %v2565
    %v2873 = vunpack.c.l.b16 %v2566
    %v2874 = vunpack.c.h.b16 %v2566
    %v2875 = vunpack.c.l.b16 %v2567
    %v2876 = vunpack.c.h.b16 %v2567
    %v2877 = vunpack.c.l.b16 %v2568
    %v2878 = vunpack.c.h.b16 %v2568
    %v2879 = vunpack.c.l.b16 %v2569
    %v2880 = vunpack.c.h.b16 %v2569
    %v2881 = vunpack.c.l.b16 %v2570
    %v2882 = vunpack.c.h.b16 %v2570
    %v2883 = vunpack.c.l.b16 %v2571
    %v2884 = vunpack.c.h.b16 %v2571
    %v2885 = vunpack.c.l.b16 %v2572
    %v2886 = vunpack.c.h.b16 %v2572
    %v2887 = vunpack.c.l.b16 %v2573
    %v2888 = vunpack.c.h.b16 %v2573
    %v2889 = vunpack.c.l.b16 %v2574
    %v2890 = vunpack.c.h.b16 %v2574
    %v2891 = vunpack.c.l.b16 %v2575
    %v2892 = vunpack.c.h.b16 %v2575
    %v2893 = vunpack.c.l.b16 %v2576
    %v2894 = vunpack.c.h.b16 %v2576
    %v2895 = vunpack.c.l.b16 %v2577
    %v2896 = vunpack.c.h.b16 %v2577
    %v2897 = vunpack.c.l.b16 %v2578
    %v2898 = vunpack.c.h.b16 %v2578
    %v2899 = vunpack.c.l.b16 %v2579
    %v2900 = vunpack.c.h.b16 %v2579
    %v2901 = vunpack.c.l.b16 %v2580
    %v2902 = vunpack.c.h.b16 %v2580
    %v2903 = vunpack.c.l.b16 %v2581
    %v2904 = vunpack.c.h.b16 %v2581
    %v2905 = vunpack.c.l.b16 %v2582
    %v2906 = vunpack.c.h.b16 %v2582
    %v2907 = vunpack.c.l.b16 %v2583
    %v2908 = vunpack.c.h.b16 %v2583
    %v2909 = vunpack.c.l.b16 %v2584
    %v2910 = vunpack.c.h.b16 %v2584
    %v2911 = vunpack.c.l.b16 %v2585
    %v2912 = vunpack.c.h.b16 %v2585
    %v2913 = vunpack.c.l.b16 %v2586
    %v2914 = vunpack.c.h.b16 %v2586
    %v2915 = vunpack.c.l.b16 %v2587
    %v2916 = vunpack.c.h.b16 %v2587
    %v2917 = vunpack.c.l.b16 %v2588
    %v2918 = vunpack.c.h.b16 %v2588
    %v2919 = vunpack.c.l.b16 %v2589
    %v2920 = vunpack.c.h.b16 %v2589
    %v2921 = vunpack.c.l.b16 %v2590
    %v2922 = vunpack.c.h.b16 %v2590
    %v2923 = vunpack.c.l.b16 %v2591
    %v2924 = vunpack.c.h.b16 %v2591
    %v2925 = vunpack.c.l.b16 %v2592
    %v2926 = vunpack.c.h.b16 %v2592
    %v2927 = vunpack.c.l.b16 %v2593
    %v2928 = vunpack.c.h.b16 %v2593
    %v2929 = vunpack.c.l.b16 %v2594
    %v2930 = vunpack.c.h.b16 %v2594
    %v2931 = vunpack.c.l.b16 %v2595
    %v2932 = vunpack.c.h.b16 %v2595
    %v2933 = vunpack.c.l.b16 %v2596
    %v2934 = vunpack.c.h.b16 %v2596
    %v2935 = vunpack.c.l.b16 %v2597
    %v2936 = vunpack.c.h.b16 %v2597
    %v2937 = vunpack.c.l.b16 %v2598
    %v2938 = vunpack.c.h.b16 %v2598
    %v2939 = vunpack.c.l.b16 %v2599
    %v2940 = vunpack.c.h.b16 %v2599
    %v2941 = vunpack.c.l.b16 %v2600
    %v2942 = vunpack.c.h.b16 %v2600
    %v2943 = vunpack.c.l.b16 %v2601
    %v2944 = vunpack.c.h.b16 %v2601
    %v2945 = vunpack.c.l.b16 %v2602
    %v2946 = vunpack.c.h.b16 %v2602
    %v2947 = vunpack.c.l.b16 %v2603
    %v2948 = vunpack.c.h.b16 %v2603
    %v2949 = vunpack.c.l.b16 %v2604
    %v2950 = vunpack.c.h.b16 %v2604
    %v2951 = vunpack.c.l.b16 %v2605
    %v2952 = vunpack.c.h.b16 %v2605
    %v2953 = vunpack.c.l.b16 %v2606
    %v2954 = vunpack.c.h.b16 %v2606
    %v2955 = vunpack.c.l.b16 %v2607
    %v2956 = vunpack.c.h.b16 %v2607
    %v2957 = vunpack.c.l.b16 %v2608
    %v2958 = vunpack.c.h.b16 %v2608
    %v2959 = vunpack.c.l.b16 %v2609
    %v2960 = vunpack.c.h.b16 %v2609
    %v2961 = vunpack.c.l.b16 %v2610
    %v2962 = vunpack.c.h.b16 %v2610
    %v2963 = vunpack.c.l.b16 %v2611
    %v2964 = vunpack.c.h.b16 %v2611
    %v2965 = vunpack.c.l.b16 %v2612
    %v2966 = vunpack.c.h.b16 %v2612
    %v2967 = vunpack.c.l.b16 %v2613
    %v2968 = vunpack.c.h.b16 %v2613
    %v2969 = vunpack.c.l.b16 %v2614
    %v2970 = vunpack.c.h.b16 %v2614
    %v2971 = vunpack.c.l.b16 %v2615
    %v2972 = vunpack.c.h.b16 %v2615
    %v2973 = vunpack.c.l.b16 %v2616
    %v2974 = vunpack.c.h.b16 %v2616
    %v2975 = vunpack.c.l.b16 %v2617
    %v2976 = vunpack.c.h.b16 %v2617
    %v2977 = vunpack.c.l.b16 %v2618
    %v2978 = vunpack.c.h.b16 %v2618
    %v2979 = vunpack.c.l.b16 %v2619
    %v2980 = vunpack.c.h.b16 %v2619
    %v2981 = vunpack.c.l.b16 %v2620
    %v2982 = vunpack.c.h.b16 %v2620
    %v2983 = vunpack.c.l.b16 %v2621
    %v2984 = vunpack.c.h.b16 %v2621
    %v2985 = vunpack.c.l.b16 %v2622
    %v2986 = vunpack.c.h.b16 %v2622
    %v2987 = vunpack.c.l.b16 %v2623
    %v2988 = vunpack.c.h.b16 %v2623
    %v2989 = vunpack.c.l.b16 %v2624
    %v2990 = vunpack.c.h.b16 %v2624
    %v2991 = vunpack.c.l.b16 %v2625
    %v2992 = vunpack.c.h.b16 %v2625
    %v2993 = vunpack.c.l.b16 %v2626
    %v2994 = vunpack.c.h.b16 %v2626
    %v2995 = vunpack.c.l.b16 %v2627
    %v2996 = vunpack.c.h.b16 %v2627
    %v2997 = vunpack.c.l.b16 %v2628
    %v2998 = vunpack.c.h.b16 %v2628
    %v2999 = vunpack.c.l.b16 %v2629
    %v3000 = vunpack.c.h.b16 %v2629
    %v3001 = vunpack.c.l.b16 %v2630
    %v3002 = vunpack.c.h.b16 %v2630
    %v3003 = vunpack.c.l.b16 %v2631
    %v3004 = vunpack.c.h.b16 %v2631
    %v3005 = vunpack.c.l.b16 %v2632
    %v3006 = vunpack.c.h.b16 %v2632
    %v3007 = vunpack.c.l.b16 %v2633
    %v3008 = vunpack.c.h.b16 %v2633
    %v3009 = vunpack.c.l.b16 %v2634
    %v3010 = vunpack.c.h.b16 %v2634
    %v3011 = vunpack.c.l.b16 %v2635
    %v3012 = vunpack.c.h.b16 %v2635
    %v3013 = vunpack.c.l.b16 %v2636
    %v3014 = vunpack.c.h.b16 %v2636
    %v3015 = vunpack.c.l.b16 %v2637
    %v3016 = vunpack.c.h.b16 %v2637
    %v3017 = vunpack.c.l.b16 %v2638
    %v3018 = vunpack.c.h.b16 %v2638
    %v3019 = vunpack.c.l.b16 %v2639
    %v3020 = vunpack.c.h.b16 %v2639
    %v3021 = vunpack.c.l.b16 %v2640
    %v3022 = vunpack.c.h.b16 %v2640
    %v3023 = vunpack.c.l.b16 %v2641
    %v3024 = vunpack.c.h.b16 %v2641
    %v3025 = vunpack.c.l.b16 %v2642
    %v3026 = vunpack.c.h.b16 %v2642
    %v3027 = vunpack.c.l.b16 %v2643
    %v3028 = vunpack.c.h.b16 %v2643
    %v3029 = vunpack.c.l.b16 %v2644
    %v3030 = vunpack.c.h.b16 %v2644
    %v3031 = vunpack.c.l.b16 %v2645
    %v3032 = vunpack.c.h.b16 %v2645
    %v3033 = vunpack.c.l.b16 %v2646
    %v3034 = vunpack.c.h.b16 %v2646
    %v3035 = vunpack.c.l.b16 %v2647
    %v3036 = vunpack.c.h.b16 %v2647
    %v3037 = vunpack.c.l.b16 %v2648
    %v3038 = vunpack.c.h.b16 %v2648
    %v3039 = vunpack.c.l.b16 %v2649
    %v3040 = vunpack.c.h.b16 %v2649
    %v3041 = vunpack.c.l.b16 %v2650
    %v3042 = vunpack.c.h.b16 %v2650
    %v3043 = vunpack.c.l.b16 %v2651
    %v3044 = vunpack.c.h.b16 %v2651
    %v3045 = vunpack.c.l.b16 %v2652
    %v3046 = vunpack.c.h.b16 %v2652
    %v3047 = vunpack.c.l.b16 %v2653
    %v3048 = vunpack.c.h.b16 %v2653
    %v3049 = vunpack.c.l.b16 %v2654
    %v3050 = vunpack.c.h.b16 %v2654
    %v3051 = vunpack.c.l.b16 %v2655
    %v3052 = vunpack.c.h.b16 %v2655
    %v3053 = vunpack.c.l.b16 %v2656
    %v3054 = vunpack.c.h.b16 %v2656
    %v3055 = vunpack.c.l.b16 %v2657
    %v3056 = vunpack.c.h.b16 %v2657
    %v3057 = vunpack.c.l.b16 %v2658
    %v3058 = vunpack.c.h.b16 %v2658
    %v3059 = vunpack.c.l.b16 %v2659
    %v3060 = vunpack.c.h.b16 %v2659
    %v3061 = vunpack.c.l.b16 %v2660
    %v3062 = vunpack.c.h.b16 %v2660
    %v3063 = vunpack.c.l.b16 %v2661
    %v3064 = vunpack.c.h.b16 %v2661
    %v3065 = vunpack.c.l.b16 %v2662
    %v3066 = vunpack.c.h.b16 %v2662
    %v3067 = vunpack.c.l.b16 %v2663
    %v3068 = vunpack.c.h.b16 %v2663
    %v3069 = vunpack.c.l.b16 %v2664
    %v3070 = vunpack.c.h.b16 %v2664
    %v3071 = vpack.c.b16 %v2819, %v2815
    %v3072 = vpack.c.b16 %v2820, %v2816
    %v3073 = vpack.c.b16 %v2821, %v2817
    %v3074 = vpack.c.b16 %v2822, %v2818
    %v3075 = vpack.c.b16 %v2827, %v2823
    %v3076 = vpack.c.b16 %v2828, %v2824
    %v3077 = vpack.c.b16 %v2829, %v2825
    %v3078 = vpack.c.b16 %v2830, %v2826
    %v3079 = vpack.c.b16 %v2835, %v2831
    %v3080 = vpack.c.b16 %v2836, %v2832
    %v3081 = vpack.c.b16 %v2837, %v2833
    %v3082 = vpack.c.b16 %v2838, %v2834
    %v3083 = vpack.c.b16 %v2843, %v2839
    %v3084 = vpack.c.b16 %v2844, %v2840
    %v3085 = vpack.c.b16 %v2845, %v2841
    %v3086 = vpack.c.b16 %v2846, %v2842
    %v3087 = vpack.c.b16 %v2851, %v2847
    %v3088 = vpack.c.b16 %v2852, %v2848
    %v3089 = vpack.c.b16 %v2853, %v2849
    %v3090 = vpack.c.b16 %v2854, %v2850
    %v3091 = vpack.c.b16 %v2859, %v2855
    %v3092 = vpack.c.b16 %v2860, %v2856
    %v3093 = vpack.c.b16 %v2861, %v2857
    %v3094 = vpack.c.b16 %v2862, %v2858
    %v3095 = vpack.c.b16 %v2867, %v2863
    %v3096 = vpack.c.b16 %v2868, %v2864
    %v3097 = vpack.c.b16 %v2869, %v2865
    %v3098 = vpack.c.b16 %v2870, %v2866
    %v3099 = vpack.c.b16 %v2875, %v2871
    %v3100 = vpack.c.b16 %v2876, %v2872
    %v3101 = vpack.c.b16 %v2877, %v2873
    %v3102 = vpack.c.b16 %v2878, %v2874
    %v3103 = vpack.c.b16 %v2883, %v2879
    %v3104 = vpack.c.b16 %v2884, %v2880
    %v3105 = vpack.c.b16 %v2885, %v2881
    %v3106 = vpack.c.b16 %v2886, %v2882
    %v3107 = vpack.c.b16 %v2891, %v2887
    %v3108 = vpack.c.b16 %v2892, %v2888
    %v3109 = vpack.c.b16 %v2893, %v2889
    %v3110 = vpack.c.b16 %v2894, %v2890
    %v3111 = vpack.c.b16 %v2899, %v2895
    %v3112 = vpack.c.b16 %v2900, %v2896
    %v3113 = vpack.c.b16 %v2901, %v2897
    %v3114 = vpack.c.b16 %v2902, %v2898
    %v3115 = vpack.c.b16 %v2907, %v2903
    %v3116 = vpack.c.b16 %v2908, %v2904
    %v3117 = vpack.c.b16 %v2909, %v2905
    %v3118 = vpack.c.b16 %v2910, %v2906
    %v3119 = vpack.c.b16 %v2915, %v2911
    %v3120 = vpack.c.b16 %v2916, %v2912
    %v3121 = vpack.c.b16 %v2917, %v2913
    %v3122 = vpack.c.b16 %v2918, %v2914
    %v3123 = vpack.c.b16 %v2923, %v2919
    %v3124 = vpack.c.b16 %v2924, %v2920
    %v3125 = vpack.c.b16 %v2925, %v2921
    %v3126 = vpack.c.b16 %v2926, %v2922
    %v3127 = vpack.c.b16 %v2931, %v2927
    %v3128 = vpack.c.b16 %v2932, %v2928
    %v3129 = vpack.c.b16 %v2933, %v2929
    %v3130 = vpack.c.b16 %v2934, %v2930
    %v3131 = vpack.c.b16 %v2939, %v2935
    %v3132 = vpack.c.b16 %v2940, %v2936
    %v3133 = vpack.c.b16 %v2941, %v2937
    %v3134 = vpack.c.b16 %v2942, %v2938
    %v3135 = vpack.c.b16 %v2947, %v2943
    %v3136 = vpack.c.b16 %v2948, %v2944
    %v3137 = vpack.c.b16 %v2949, %v2945
    %v3138 = vpack.c.b16 %v2950, %v2946
    %v3139 = vpack.c.b16 %v2955, %v2951
    %v3140 = vpack.c.b16 %v2956, %v2952
    %v3141 = vpack.c.b16 %v2957, %v2953
    %v3142 = vpack.c.b16 %v2958, %v2954
    %v3143 = vpack.c.b16 %v2963, %v2959
    %v3144 = vpack.c.b16 %v2964, %v2960
    %v3145 = vpack.c.b16 %v2965, %v2961
    %v3146 = vpack.c.b16 %v2966, %v2962
    %v3147 = vpack.c.b16 %v2971, %v2967
    %v3148 = vpack.c.b16 %v2972, %v2968
    %v3149 = vpack.c.b16 %v2973, %v2969
    %v3150 = vpack.c.b16 %v2974, %v2970
    %v3151 = vpack.c.b16 %v2979, %v2975
    %v3152 = vpack.c.b16 %v2980, %v2976
    %v3153 = vpack.c.b16 %v2981, %v2977
    %v3154 = vpack.c.b16 %v2982, %v2978
    %v3155 = vpack.c.b16 %v2987, %v2983
    %v3156 = vpack.c.b16 %v2988, %v2984
    %v3157 = vpack.c.b16 %v2989, %v2985
    %v3158 = vpack.c.b16 %v2990, %v2986
    %v3159 = vpack.c.b16 %v2995, %v2991
    %v3160 = vpack.c.b16 %v2996, %v2992
    %v3161 = vpack.c.b16 %v2997, %v2993
    %v3162 = vpack.c.b16 %v2998, %v2994
    %v3163 = vpack.c.b16 %v3003, %v2999
    %v3164 = vpack.c.b16 %v3004, %v3000
    %v3165 = vpack.c.b16 %v3005, %v3001
    %v3166 = vpack.c.b16 %v3006, %v3002
    %v3167 = vpack.c.b16 %v3011, %v3007
    %v3168 = vpack.c.b16 %v3012, %v3008
    %v3169 = vpack.c.b16 %v3013, %v3009
    %v3170 = vpack.c.b16 %v3014, %v3010
    %v3171 = vpack.c.b16 %v3019, %v3015
    %v3172 = vpack.c.b16 %v3020, %v3016
    %v3173 = vpack.c.b16 %v3021, %v3017
    %v3174 = vpack.c.b16 %v3022, %v3018
    %v3175 = vpack.c.b16 %v3027, %v3023
    %v3176 = vpack.c.b16 %v3028, %v3024
    %v3177 = vpack.c.b16 %v3029, %v3025
    %v3178 = vpack.c.b16 %v3030, %v3026
    %v3179 = vpack.c.b16 %v3035, %v3031
    %v3180 = vpack.c.b16 %v3036, %v3032
    %v3181 = vpack.c.b16 %v3037, %v3033
    %v3182 = vpack.c.b16 %v3038, %v3034
    %v3183 = vpack.c.b16 %v3043, %v3039
    %v3184 = vpack.c.b16 %v3044, %v3040
    %v3185 = vpack.c.b16 %v3045, %v3041
    %v3186 = vpack.c.b16 %v3046, %v3042
    %v3187 = vpack.c.b16 %v3051, %v3047
    %v3188 = vpack.c.b16 %v3052, %v3048
    %v3189 = vpack.c.b16 %v3053, %v3049
    %v3190 = vpack.c.b16 %v3054, %v3050
    %v3191 = vpack.c.b16 %v3059, %v3055
    %v3192 = vpack.c.b16 %v3060, %v3056
    %v3193 = vpack.c.b16 %v3061, %v3057
    %v3194 = vpack.c.b16 %v3062, %v3058
    %v3195 = vpack.c.b16 %v3067, %v3063
    %v3196 = vpack.c.b16 %v3068, %v3064
    %v3197 = vpack.c.b16 %v3069, %v3065
    %v3198 = vpack.c.b16 %v3070, %v3066
    %3327 = vmatprep.subr.bf16.mxu0 %v3072
    %3328 = vmatpush1.bf16.msra.mxu0 %v3071
    %3329 = vmatprep.subr.bf16.mxu0 %v3076
    %3330 = vmatpush1.bf16.msra.mxu0 %v3075
    %3331 = vmatprep.subr.bf16.mxu0 %v3080
    %3332 = vmatpush1.bf16.msra.mxu0 %v3079
    %3333 = vmatprep.subr.bf16.mxu0 %v3084
    %3334 = vmatpush1.bf16.msra.mxu0 %v3083
    %3335 = vmatprep.subr.bf16.mxu0 %v3088
    %3336 = vmatpush1.bf16.msra.mxu0 %v3087
    %3337 = vmatprep.subr.bf16.mxu0 %v3092
    %3338 = vmatpush1.bf16.msra.mxu0 %v3091
    %3339 = vmatprep.subr.bf16.mxu0 %v3096
    %3340 = vmatpush1.bf16.msra.mxu0 %v3095
    %3341 = vmatprep.subr.bf16.mxu0 %v3100
    %3342 = vmatpush1.bf16.msra.mxu0 %v3099
    %3343 = vmatprep.subr.bf16.mxu0 %v3104
    %3344 = vmatpush1.bf16.msra.mxu0 %v3103
    %3345 = vmatprep.subr.bf16.mxu0 %v3108
    %3346 = vmatpush1.bf16.msra.mxu0 %v3107
    %3347 = vmatprep.subr.bf16.mxu0 %v3112
    %3348 = vmatpush1.bf16.msra.mxu0 %v3111
    %3349 = vmatprep.subr.bf16.mxu0 %v3116
    %3350 = vmatpush1.bf16.msra.mxu0 %v3115
    %3351 = vmatprep.subr.bf16.mxu0 %v3120
    %3352 = vmatpush1.bf16.msra.mxu0 %v3119
    %3353 = vmatprep.subr.bf16.mxu0 %v3124
    %3354 = vmatpush1.bf16.msra.mxu0 %v3123
    %3355 = vmatprep.subr.bf16.mxu0 %v3128
    %3356 = vmatpush1.bf16.msra.mxu0 %v3127
    %3357 = vmatprep.subr.bf16.mxu0 %v3132
    %3358 = vmatpush1.bf16.msra.mxu0 %v3131
    %3359 = vmatprep.mubr.bf16.mxu0 %v2474
    %3360 = vmatmul.mubr.bf16.gmra.mrb[0].mxu0 %v2473
    %v3361 = vpop.f32.mrb[0].mxu0
    %v3362 = vadd.f32 %v2670, %v3361
    %v3363 = vpop.f32.mrb[0].mxu0
    %v3364 = vadd.f32 %v2674, %v3363
    %v3365 = vpop.f32.mrb[0].mxu0
    %v3366 = vadd.f32 %v2670, %v3365
    %v3367 = vpop.f32.mrb[0].mxu0
    %v3368 = vadd.f32 %v2674, %v3367
    %3369 = vmatprep.mubr.bf16.mxu0 %v2478
    %3370 = vmatmul.mubr.bf16.gmra.mrb[0].mxu0 %v2477
    %v3371 = vpop.f32.mrb[0].mxu0
    %v3372 = vadd.f32 %v2670, %v3371
    %v3373 = vpop.f32.mrb[0].mxu0
    %v3374 = vadd.f32 %v2674, %v3373
    %v3375 = vpop.f32.mrb[0].mxu0
    %v3376 = vadd.f32 %v2670, %v3375
    %v3377 = vpop.f32.mrb[0].mxu0
    %v3378 = vadd.f32 %v2674, %v3377
    %3379 = vmatprep.mubr.bf16.mxu0 %v2482
    %3380 = vmatmul.mubr.bf16.gmra.mrb[0].mxu0 %v2481
    %v3381 = vpop.f32.mrb[0].mxu0
    %v3382 = vadd.f32 %v2670, %v3381
    %v3383 = vpop.f32.mrb[0].mxu0
    %v3384 = vadd.f32 %v2674, %v3383
    %v3385 = vpop.f32.mrb[0].mxu0
    %v3386 = vadd.f32 %v2670, %v3385
    %v3387 = vpop.f32.mrb[0].mxu0
    %v3388 = vadd.f32 %v2674, %v3387
    %3389 = vmatprep.mubr.bf16.mxu0 %v2486
    %3390 = vmatmul.mubr.bf16.gmra.mrb[0].mxu0 %v2485
    %v3391 = vpop.f32.mrb[0].mxu0
    %v3392 = vadd.f32 %v2670, %v3391
    %v3393 = vpop.f32.mrb[0].mxu0
    %v3394 = vadd.f32 %v2674, %v3393
    %v3395 = vpop.f32.mrb[0].mxu0
    %v3396 = vadd.f32 %v2670, %v3395
    %v3397 = vpop.f32.mrb[0].mxu0
    %v3398 = vadd.f32 %v2674, %v3397
    %3399 = vmatprep.mubr.bf16.mxu0 %v2490
    %3400 = vmatmul.mubr.bf16.gmra.mrb[0].mxu0 %v2489
    %v3401 = vpop.f32.mrb[0].mxu0
    %v3402 = vadd.f32 %v2670, %v3401
    %v3403 = vpop.f32.mrb[0].mxu0
    %v3404 = vadd.f32 %v2674, %v3403
    %v3405 = vpop.f32.mrb[0].mxu0
    %v3406 = vadd.f32 %v2670, %v3405
    %v3407 = vpop.f32.mrb[0].mxu0
    %v3408 = vadd.f32 %v2674, %v3407
    %3409 = vmatprep.mubr.bf16.mxu0 %v2494
    %3410 = vmatmul.mubr.bf16.gmra.mrb[0].mxu0 %v2493
    %v3411 = vpop.f32.mrb[0].mxu0
    %v3412 = vadd.f32 %v2670, %v3411
    %v3413 = vpop.f32.mrb[0].mxu0
    %v3414 = vadd.f32 %v2674, %v3413
    %v3415 = vpop.f32.mrb[0].mxu0
    %v3416 = vadd.f32 %v2670, %v3415
    %v3417 = vpop.f32.mrb[0].mxu0
    %v3418 = vadd.f32 %v2674, %v3417
    %3419 = vmatprep.mubr.bf16.mxu0 %v2498
    %3420 = vmatmul.mubr.bf16.gmra.mrb[0].mxu0 %v2497
    %v3421 = vpop.f32.mrb[0].mxu0
    %v3422 = vadd.f32 %v2670, %v3421
    %v3423 = vpop.f32.mrb[0].mxu0
    %v3424 = vadd.f32 %v2674, %v3423
    %v3425 = vpop.f32.mrb[0].mxu0
    %v3426 = vadd.f32 %v2670, %v3425
    %v3427 = vpop.f32.mrb[0].mxu0
    %v3428 = vadd.f32 %v2674, %v3427
    %3429 = vmatprep.mubr.bf16.mxu0 %v2502
    %3430 = vmatmul.mubr.bf16.gmra.mrb[0].mxu0 %v2501
    %v3431 = vpop.f32.mrb[0].mxu0
    %v3432 = vadd.f32 %v2670, %v3431
    %v3433 = vpop.f32.mrb[0].mxu0
    %v3434 = vadd.f32 %v2674, %v3433
    %v3435 = vpop.f32.mrb[0].mxu0
    %v3436 = vadd.f32 %v2670, %v3435
    %v3437 = vpop.f32.mrb[0].mxu0
    %v3438 = vadd.f32 %v2674, %v3437
    %3439 = vmatprep.mubr.bf16.mxu0 %v2506
    %3440 = vmatmul.mubr.bf16.gmra.mrb[0].mxu0 %v2505
    %v3441 = vpop.f32.mrb[0].mxu0
    %v3442 = vadd.f32 %v2670, %v3441
    %v3443 = vpop.f32.mrb[0].mxu0
    %v3444 = vadd.f32 %v2674, %v3443
    %v3445 = vpop.f32.mrb[0].mxu0
    %v3446 = vadd.f32 %v2670, %v3445
    %v3447 = vpop.f32.mrb[0].mxu0
    %v3448 = vadd.f32 %v2674, %v3447
    %3449 = vmatprep.mubr.bf16.mxu0 %v2510
    %3450 = vmatmul.mubr.bf16.gmra.mrb[0].mxu0 %v2509
    %v3451 = vpop.f32.mrb[0].mxu0
    %v3452 = vadd.f32 %v2670, %v3451
    %v3453 = vpop.f32.mrb[0].mxu0
    %v3454 = vadd.f32 %v2674, %v3453
    %v3455 = vpop.f32.mrb[0].mxu0
    %v3456 = vadd.f32 %v2670, %v3455
    %v3457 = vpop.f32.mrb[0].mxu0
    %v3458 = vadd.f32 %v2674, %v3457
    %3459 = vmatprep.mubr.bf16.mxu0 %v2514
    %3460 = vmatmul.mubr.bf16.gmra.mrb[0].mxu0 %v2513
    %v3461 = vpop.f32.mrb[0].mxu0
    %v3462 = vadd.f32 %v2670, %v3461
    %v3463 = vpop.f32.mrb[0].mxu0
    %v3464 = vadd.f32 %v2674, %v3463
    %v3465 = vpop.f32.mrb[0].mxu0
    %v3466 = vadd.f32 %v2670, %v3465
    %v3467 = vpop.f32.mrb[0].mxu0
    %v3468 = vadd.f32 %v2674, %v3467
    %3469 = vmatprep.mubr.bf16.mxu0 %v2518
    %3470 = vmatmul.mubr.bf16.gmra.mrb[0].mxu0 %v2517
    %v3471 = vpop.f32.mrb[0].mxu0
    %v3472 = vadd.f32 %v2670, %v3471
    %v3473 = vpop.f32.mrb[0].mxu0
    %v3474 = vadd.f32 %v2674, %v3473
    %v3475 = vpop.f32.mrb[0].mxu0
    %v3476 = vadd.f32 %v2670, %v3475
    %v3477 = vpop.f32.mrb[0].mxu0
    %v3478 = vadd.f32 %v2674, %v3477
    %3479 = vmatprep.mubr.bf16.mxu0 %v2522
    %3480 = vmatmul.mubr.bf16.gmra.mrb[0].mxu0 %v2521
    %v3481 = vpop.f32.mrb[0].mxu0
    %v3482 = vadd.f32 %v2670, %v3481
    %v3483 = vpop.f32.mrb[0].mxu0
    %v3484 = vadd.f32 %v2674, %v3483
    %v3485 = vpop.f32.mrb[0].mxu0
    %v3486 = vadd.f32 %v2670, %v3485
    %v3487 = vpop.f32.mrb[0].mxu0
    %v3488 = vadd.f32 %v2674, %v3487
    %3489 = vmatprep.mubr.bf16.mxu0 %v2526
    %3490 = vmatmul.mubr.bf16.gmra.mrb[0].mxu0 %v2525
    %v3491 = vpop.f32.mrb[0].mxu0
    %v3492 = vadd.f32 %v2670, %v3491
    %v3493 = vpop.f32.mrb[0].mxu0
    %v3494 = vadd.f32 %v2674, %v3493
    %v3495 = vpop.f32.mrb[0].mxu0
    %v3496 = vadd.f32 %v2670, %v3495
    %v3497 = vpop.f32.mrb[0].mxu0
    %v3498 = vadd.f32 %v2674, %v3497
    %3499 = vmatprep.mubr.bf16.mxu0 %v2530
    %3500 = vmatmul.mubr.bf16.gmra.mrb[0].mxu0 %v2529
    %v3501 = vpop.f32.mrb[0].mxu0
    %v3502 = vadd.f32 %v2670, %v3501
    %v3503 = vpop.f32.mrb[0].mxu0
    %v3504 = vadd.f32 %v2674, %v3503
    %v3505 = vpop.f32.mrb[0].mxu0
    %v3506 = vadd.f32 %v2670, %v3505
    %v3507 = vpop.f32.mrb[0].mxu0
    %v3508 = vadd.f32 %v2674, %v3507
    %3509 = vmatprep.mubr.bf16.mxu0 %v2534
    %3510 = vmatmul.mubr.bf16.gmra.mrb[0].mxu0 %v2533
    %v3511 = vpop.f32.mrb[0].mxu0
    %v3512 = vadd.f32 %v2670, %v3511
    %v3513 = vpop.f32.mrb[0].mxu0
    %v3514 = vadd.f32 %v2674, %v3513
    %v3515 = vpop.f32.mrb[0].mxu0
    %v3516 = vadd.f32 %v2670, %v3515
    %v3517 = vpop.f32.mrb[0].mxu0
    %v3518 = vadd.f32 %v2674, %v3517
    %3519 = vdwg.mxu0
    %3520 = vmatprep.subr.bf16.mxu0 %v3136
    %3521 = vmatpush1.bf16.msra.mxu0 %v3135
    %3522 = vmatprep.subr.bf16.mxu0 %v3140
    %3523 = vmatpush1.bf16.msra.mxu0 %v3139
    %3524 = vmatprep.subr.bf16.mxu0 %v3144
    %3525 = vmatpush1.bf16.msra.mxu0 %v3143
    %3526 = vmatprep.subr.bf16.mxu0 %v3148
    %3527 = vmatpush1.bf16.msra.mxu0 %v3147
    %3528 = vmatprep.subr.bf16.mxu0 %v3152
    %3529 = vmatpush1.bf16.msra.mxu0 %v3151
    %3530 = vmatprep.subr.bf16.mxu0 %v3156
    %3531 = vmatpush1.bf16.msra.mxu0 %v3155
    %3532 = vmatprep.subr.bf16.mxu0 %v3160
    %3533 = vmatpush1.bf16.msra.mxu0 %v3159
    %3534 = vmatprep.subr.bf16.mxu0 %v3164
    %3535 = vmatpush1.bf16.msra.mxu0 %v3163
    %3536 = vmatprep.subr.bf16.mxu0 %v3168
    %3537 = vmatpush1.bf16.msra.mxu0 %v3167
    %3538 = vmatprep.subr.bf16.mxu0 %v3172
    %3539 = vmatpush1.bf16.msra.mxu0 %v3171
    %3540 = vmatprep.subr.bf16.mxu0 %v3176
    %3541 = vmatpush1.bf16.msra.mxu0 %v3175
    %3542 = vmatprep.subr.bf16.mxu0 %v3180
    %3543 = vmatpush1.bf16.msra.mxu0 %v3179
    %3544 = vmatprep.subr.bf16.mxu0 %v3184
    %3545 = vmatpush1.bf16.msra.mxu0 %v3183
    %3546 = vmatprep.subr.bf16.mxu0 %v3188
    %3547 = vmatpush1.bf16.msra.mxu0 %v3187
    %3548 = vmatprep.subr.bf16.mxu0 %v3192
    %3549 = vmatpush1.bf16.msra.mxu0 %v3191
    %3550 = vmatprep.subr.bf16.mxu0 %v3196
    %3551 = vmatpush1.bf16.msra.mxu0 %v3195
    %3552 = vmatprep.mubr.bf16.mxu0 %v2476
    %3553 = vmatmul.mubr.bf16.gmra.mrb[0].mxu0 %v2475
    %v3554 = vpop.f32.mrb[0].mxu0
    %v3555 = vadd.f32 %v3362, %v3554
    %v3556 = vpop.f32.mrb[0].mxu0
    %v3557 = vadd.f32 %v3364, %v3556
    %v3558 = vpop.f32.mrb[0].mxu0
    %v3559 = vadd.f32 %v3366, %v3558
    %v3560 = vpop.f32.mrb[0].mxu0
    %v3561 = vadd.f32 %v3368, %v3560
    %3562 = vmatprep.mubr.bf16.mxu0 %v2480
    %3563 = vmatmul.mubr.bf16.gmra.mrb[0].mxu0 %v2479
    %v3564 = vpop.f32.mrb[0].mxu0
    %v3565 = vadd.f32 %v3372, %v3564
    %v3566 = vpop.f32.mrb[0].mxu0
    %v3567 = vadd.f32 %v3374, %v3566
    %v3568 = vpop.f32.mrb[0].mxu0
    %v3569 = vadd.f32 %v3376, %v3568
    %v3570 = vpop.f32.mrb[0].mxu0
    %v3571 = vadd.f32 %v3378, %v3570
    %3572 = vmatprep.mubr.bf16.mxu0 %v2484
    %3573 = vmatmul.mubr.bf16.gmra.mrb[0].mxu0 %v2483
    %v3574 = vpop.f32.mrb[0].mxu0
    %v3575 = vadd.f32 %v3382, %v3574
    %v3576 = vpop.f32.mrb[0].mxu0
    %v3577 = vadd.f32 %v3384, %v3576
    %v3578 = vpop.f32.mrb[0].mxu0
    %v3579 = vadd.f32 %v3386, %v3578
    %v3580 = vpop.f32.mrb[0].mxu0
    %v3581 = vadd.f32 %v3388, %v3580
    %3582 = vmatprep.mubr.bf16.mxu0 %v2488
    %3583 = vmatmul.mubr.bf16.gmra.mrb[0].mxu0 %v2487
    %v3584 = vpop.f32.mrb[0].mxu0
    %v3585 = vadd.f32 %v3392, %v3584
    %v3586 = vpop.f32.mrb[0].mxu0
    %v3587 = vadd.f32 %v3394, %v3586
    %v3588 = vpop.f32.mrb[0].mxu0
    %v3589 = vadd.f32 %v3396, %v3588
    %v3590 = vpop.f32.mrb[0].mxu0
    %v3591 = vadd.f32 %v3398, %v3590
    %3592 = vmatprep.mubr.bf16.mxu0 %v2492
    %3593 = vmatmul.mubr.bf16.gmra.mrb[0].mxu0 %v2491
    %v3594 = vpop.f32.mrb[0].mxu0
    %v3595 = vadd.f32 %v3402, %v3594
    %v3596 = vpop.f32.mrb[0].mxu0
    %v3597 = vadd.f32 %v3404, %v3596
    %v3598 = vpop.f32.mrb[0].mxu0
    %v3599 = vadd.f32 %v3406, %v3598
    %v3600 = vpop.f32.mrb[0].mxu0
    %v3601 = vadd.f32 %v3408, %v3600
    %3602 = vmatprep.mubr.bf16.mxu0 %v2496
    %3603 = vmatmul.mubr.bf16.gmra.mrb[0].mxu0 %v2495
    %v3604 = vpop.f32.mrb[0].mxu0
    %v3605 = vadd.f32 %v3412, %v3604
    %v3606 = vpop.f32.mrb[0].mxu0
    %v3607 = vadd.f32 %v3414, %v3606
    %v3608 = vpop.f32.mrb[0].mxu0
    %v3609 = vadd.f32 %v3416, %v3608
    %v3610 = vpop.f32.mrb[0].mxu0
    %v3611 = vadd.f32 %v3418, %v3610
    %3612 = vmatprep.mubr.bf16.mxu0 %v2500
    %3613 = vmatmul.mubr.bf16.gmra.mrb[0].mxu0 %v2499
    %v3614 = vpop.f32.mrb[0].mxu0
    %v3615 = vadd.f32 %v3422, %v3614
    %v3616 = vpop.f32.mrb[0].mxu0
    %v3617 = vadd.f32 %v3424, %v3616
    %v3618 = vpop.f32.mrb[0].mxu0
    %v3619 = vadd.f32 %v3426, %v3618
    %v3620 = vpop.f32.mrb[0].mxu0
    %v3621 = vadd.f32 %v3428, %v3620
    %3622 = vmatprep.mubr.bf16.mxu0 %v2504
    %3623 = vmatmul.mubr.bf16.gmra.mrb[0].mxu0 %v2503
    %v3624 = vpop.f32.mrb[0].mxu0
    %v3625 = vadd.f32 %v3432, %v3624
    %v3626 = vpop.f32.mrb[0].mxu0
    %v3627 = vadd.f32 %v3434, %v3626
    %v3628 = vpop.f32.mrb[0].mxu0
    %v3629 = vadd.f32 %v3436, %v3628
    %v3630 = vpop.f32.mrb[0].mxu0
    %v3631 = vadd.f32 %v3438, %v3630
    %3632 = vmatprep.mubr.bf16.mxu0 %v2508
    %3633 = vmatmul.mubr.bf16.gmra.mrb[0].mxu0 %v2507
    %v3634 = vpop.f32.mrb[0].mxu0
    %v3635 = vadd.f32 %v3442, %v3634
    %v3636 = vpop.f32.mrb[0].mxu0
    %v3637 = vadd.f32 %v3444, %v3636
    %v3638 = vpop.f32.mrb[0].mxu0
    %v3639 = vadd.f32 %v3446, %v3638
    %v3640 = vpop.f32.mrb[0].mxu0
    %v3641 = vadd.f32 %v3448, %v3640
    %3642 = vmatprep.mubr.bf16.mxu0 %v2512
    %3643 = vmatmul.mubr.bf16.gmra.mrb[0].mxu0 %v2511
    %v3644 = vpop.f32.mrb[0].mxu0
    %v3645 = vadd.f32 %v3452, %v3644
    %v3646 = vpop.f32.mrb[0].mxu0
    %v3647 = vadd.f32 %v3454, %v3646
    %v3648 = vpop.f32.mrb[0].mxu0
    %v3649 = vadd.f32 %v3456, %v3648
    %v3650 = vpop.f32.mrb[0].mxu0
    %v3651 = vadd.f32 %v3458, %v3650
    %3652 = vmatprep.mubr.bf16.mxu0 %v2516
    %3653 = vmatmul.mubr.bf16.gmra.mrb[0].mxu0 %v2515
    %v3654 = vpop.f32.mrb[0].mxu0
    %v3655 = vadd.f32 %v3462, %v3654
    %v3656 = vpop.f32.mrb[0].mxu0
    %v3657 = vadd.f32 %v3464, %v3656
    %v3658 = vpop.f32.mrb[0].mxu0
    %v3659 = vadd.f32 %v3466, %v3658
    %v3660 = vpop.f32.mrb[0].mxu0
    %v3661 = vadd.f32 %v3468, %v3660
    %3662 = vmatprep.mubr.bf16.mxu0 %v2520
    %3663 = vmatmul.mubr.bf16.gmra.mrb[0].mxu0 %v2519
    %v3664 = vpop.f32.mrb[0].mxu0
    %v3665 = vadd.f32 %v3472, %v3664
    %v3666 = vpop.f32.mrb[0].mxu0
    %v3667 = vadd.f32 %v3474, %v3666
    %v3668 = vpop.f32.mrb[0].mxu0
    %v3669 = vadd.f32 %v3476, %v3668
    %v3670 = vpop.f32.mrb[0].mxu0
    %v3671 = vadd.f32 %v3478, %v3670
    %3672 = vmatprep.mubr.bf16.mxu0 %v2524
    %3673 = vmatmul.mubr.bf16.gmra.mrb[0].mxu0 %v2523
    %v3674 = vpop.f32.mrb[0].mxu0
    %v3675 = vadd.f32 %v3482, %v3674
    %v3676 = vpop.f32.mrb[0].mxu0
    %v3677 = vadd.f32 %v3484, %v3676
    %v3678 = vpop.f32.mrb[0].mxu0
    %v3679 = vadd.f32 %v3486, %v3678
    %v3680 = vpop.f32.mrb[0].mxu0
    %v3681 = vadd.f32 %v3488, %v3680
    %3682 = vmatprep.mubr.bf16.mxu0 %v2528
    %3683 = vmatmul.mubr.bf16.gmra.mrb[0].mxu0 %v2527
    %v3684 = vpop.f32.mrb[0].mxu0
    %v3685 = vadd.f32 %v3492, %v3684
    %v3686 = vpop.f32.mrb[0].mxu0
    %v3687 = vadd.f32 %v3494, %v3686
    %v3688 = vpop.f32.mrb[0].mxu0
    %v3689 = vadd.f32 %v3496, %v3688
    %v3690 = vpop.f32.mrb[0].mxu0
    %v3691 = vadd.f32 %v3498, %v3690
    %3692 = vmatprep.mubr.bf16.mxu0 %v2532
    %3693 = vmatmul.mubr.bf16.gmra.mrb[0].mxu0 %v2531
    %v3694 = vpop.f32.mrb[0].mxu0
    %v3695 = vadd.f32 %v3502, %v3694
    %v3696 = vpop.f32.mrb[0].mxu0
    %v3697 = vadd.f32 %v3504, %v3696
    %v3698 = vpop.f32.mrb[0].mxu0
    %v3699 = vadd.f32 %v3506, %v3698
    %v3700 = vpop.f32.mrb[0].mxu0
    %v3701 = vadd.f32 %v3508, %v3700
    %3702 = vmatprep.mubr.bf16.mxu0 %v2536
    %3703 = vmatmul.mubr.bf16.gmra.mrb[0].mxu0 %v2535
    %v3704 = vpop.f32.mrb[0].mxu0
    %v3705 = vadd.f32 %v3512, %v3704
    %v3706 = vpop.f32.mrb[0].mxu0
    %v3707 = vadd.f32 %v3514, %v3706
    %v3708 = vpop.f32.mrb[0].mxu0
    %v3709 = vadd.f32 %v3516, %v3708
    %v3710 = vpop.f32.mrb[0].mxu0
    %v3711 = vadd.f32 %v3518, %v3710
    %3712 = vdwg.mxu0
    %3713 = vmatprep.subr.bf16.mxu0 %v3074
    %3714 = vmatpush1.bf16.msra.mxu0 %v3073
    %3715 = vmatprep.subr.bf16.mxu0 %v3078
    %3716 = vmatpush1.bf16.msra.mxu0 %v3077
    %3717 = vmatprep.subr.bf16.mxu0 %v3082
    %3718 = vmatpush1.bf16.msra.mxu0 %v3081
    %3719 = vmatprep.subr.bf16.mxu0 %v3086
    %3720 = vmatpush1.bf16.msra.mxu0 %v3085
    %3721 = vmatprep.subr.bf16.mxu0 %v3090
    %3722 = vmatpush1.bf16.msra.mxu0 %v3089
    %3723 = vmatprep.subr.bf16.mxu0 %v3094
    %3724 = vmatpush1.bf16.msra.mxu0 %v3093
    %3725 = vmatprep.subr.bf16.mxu0 %v3098
    %3726 = vmatpush1.bf16.msra.mxu0 %v3097
    %3727 = vmatprep.subr.bf16.mxu0 %v3102
    %3728 = vmatpush1.bf16.msra.mxu0 %v3101
    %3729 = vmatprep.subr.bf16.mxu0 %v3106
    %3730 = vmatpush1.bf16.msra.mxu0 %v3105
    %3731 = vmatprep.subr.bf16.mxu0 %v3110
    %3732 = vmatpush1.bf16.msra.mxu0 %v3109
    %3733 = vmatprep.subr.bf16.mxu0 %v3114
    %3734 = vmatpush1.bf16.msra.mxu0 %v3113
    %3735 = vmatprep.subr.bf16.mxu0 %v3118
    %3736 = vmatpush1.bf16.msra.mxu0 %v3117
    %3737 = vmatprep.subr.bf16.mxu0 %v3122
    %3738 = vmatpush1.bf16.msra.mxu0 %v3121
    %3739 = vmatprep.subr.bf16.mxu0 %v3126
    %3740 = vmatpush1.bf16.msra.mxu0 %v3125
    %3741 = vmatprep.subr.bf16.mxu0 %v3130
    %3742 = vmatpush1.bf16.msra.mxu0 %v3129
    %3743 = vmatprep.subr.bf16.mxu0 %v3134
    %3744 = vmatpush1.bf16.msra.mxu0 %v3133
    %3745 = vmatprep.mubr.bf16.mxu0 %v2474
    %3746 = vmatmul.mubr.bf16.gmra.mrb[0].mxu0 %v2473
    %v3747 = vpop.f32.mrb[0].mxu0
    %v3748 = vadd.f32 %v2678, %v3747
    %v3749 = vpop.f32.mrb[0].mxu0
    %v3750 = vadd.f32 %v2682, %v3749
    %v3751 = vpop.f32.mrb[0].mxu0
    %v3752 = vadd.f32 %v2678, %v3751
    %v3753 = vpop.f32.mrb[0].mxu0
    %v3754 = vadd.f32 %v2682, %v3753
    %3755 = vmatprep.mubr.bf16.mxu0 %v2478
    %3756 = vmatmul.mubr.bf16.gmra.mrb[0].mxu0 %v2477
    %v3757 = vpop.f32.mrb[0].mxu0
    %v3758 = vadd.f32 %v2678, %v3757
    %v3759 = vpop.f32.mrb[0].mxu0
    %v3760 = vadd.f32 %v2682, %v3759
    %v3761 = vpop.f32.mrb[0].mxu0
    %v3762 = vadd.f32 %v2678, %v3761
    %v3763 = vpop.f32.mrb[0].mxu0
    %v3764 = vadd.f32 %v2682, %v3763
    %3765 = vmatprep.mubr.bf16.mxu0 %v2482
    %3766 = vmatmul.mubr.bf16.gmra.mrb[0].mxu0 %v2481
    %v3767 = vpop.f32.mrb[0].mxu0
    %v3768 = vadd.f32 %v2678, %v3767
    %v3769 = vpop.f32.mrb[0].mxu0
    %v3770 = vadd.f32 %v2682, %v3769
    %v3771 = vpop.f32.mrb[0].mxu0
    %v3772 = vadd.f32 %v2678, %v3771
    %v3773 = vpop.f32.mrb[0].mxu0
    %v3774 = vadd.f32 %v2682, %v3773
    %3775 = vmatprep.mubr.bf16.mxu0 %v2486
    %3776 = vmatmul.mubr.bf16.gmra.mrb[0].mxu0 %v2485
    %v3777 = vpop.f32.mrb[0].mxu0
    %v3778 = vadd.f32 %v2678, %v3777
    %v3779 = vpop.f32.mrb[0].mxu0
    %v3780 = vadd.f32 %v2682, %v3779
    %v3781 = vpop.f32.mrb[0].mxu0
    %v3782 = vadd.f32 %v2678, %v3781
    %v3783 = vpop.f32.mrb[0].mxu0
    %v3784 = vadd.f32 %v2682, %v3783
    %3785 = vmatprep.mubr.bf16.mxu0 %v2490
    %3786 = vmatmul.mubr.bf16.gmra.mrb[0].mxu0 %v2489
    %v3787 = vpop.f32.mrb[0].mxu0
    %v3788 = vadd.f32 %v2678, %v3787
    %v3789 = vpop.f32.mrb[0].mxu0
    %v3790 = vadd.f32 %v2682, %v3789
    %v3791 = vpop.f32.mrb[0].mxu0
    %v3792 = vadd.f32 %v2678, %v3791
    %v3793 = vpop.f32.mrb[0].mxu0
    %v3794 = vadd.f32 %v2682, %v3793
    %3795 = vmatprep.mubr.bf16.mxu0 %v2494
    %3796 = vmatmul.mubr.bf16.gmra.mrb[0].mxu0 %v2493
    %v3797 = vpop.f32.mrb[0].mxu0
    %v3798 = vadd.f32 %v2678, %v3797
    %v3799 = vpop.f32.mrb[0].mxu0
    %v3800 = vadd.f32 %v2682, %v3799
    %v3801 = vpop.f32.mrb[0].mxu0
    %v3802 = vadd.f32 %v2678, %v3801
    %v3803 = vpop.f32.mrb[0].mxu0
    %v3804 = vadd.f32 %v2682, %v3803
    %3805 = vmatprep.mubr.bf16.mxu0 %v2498
    %3806 = vmatmul.mubr.bf16.gmra.mrb[0].mxu0 %v2497
    %v3807 = vpop.f32.mrb[0].mxu0
    %v3808 = vadd.f32 %v2678, %v3807
    %v3809 = vpop.f32.mrb[0].mxu0
    %v3810 = vadd.f32 %v2682, %v3809
    %v3811 = vpop.f32.mrb[0].mxu0
    %v3812 = vadd.f32 %v2678, %v3811
    %v3813 = vpop.f32.mrb[0].mxu0
    %v3814 = vadd.f32 %v2682, %v3813
    %3815 = vmatprep.mubr.bf16.mxu0 %v2502
    %3816 = vmatmul.mubr.bf16.gmra.mrb[0].mxu0 %v2501
    %v3817 = vpop.f32.mrb[0].mxu0
    %v3818 = vadd.f32 %v2678, %v3817
    %v3819 = vpop.f32.mrb[0].mxu0
    %v3820 = vadd.f32 %v2682, %v3819
    %v3821 = vpop.f32.mrb[0].mxu0
    %v3822 = vadd.f32 %v2678, %v3821
    %v3823 = vpop.f32.mrb[0].mxu0
    %v3824 = vadd.f32 %v2682, %v3823
    %3825 = vmatprep.mubr.bf16.mxu0 %v2506
    %3826 = vmatmul.mubr.bf16.gmra.mrb[0].mxu0 %v2505
    %v3827 = vpop.f32.mrb[0].mxu0
    %v3828 = vadd.f32 %v2678, %v3827
    %v3829 = vpop.f32.mrb[0].mxu0
    %v3830 = vadd.f32 %v2682, %v3829
    %v3831 = vpop.f32.mrb[0].mxu0
    %v3832 = vadd.f32 %v2678, %v3831
    %v3833 = vpop.f32.mrb[0].mxu0
    %v3834 = vadd.f32 %v2682, %v3833
    %3835 = vmatprep.mubr.bf16.mxu0 %v2510
    %3836 = vmatmul.mubr.bf16.gmra.mrb[0].mxu0 %v2509
    %v3837 = vpop.f32.mrb[0].mxu0
    %v3838 = vadd.f32 %v2678, %v3837
    %v3839 = vpop.f32.mrb[0].mxu0
    %v3840 = vadd.f32 %v2682, %v3839
    %v3841 = vpop.f32.mrb[0].mxu0
    %v3842 = vadd.f32 %v2678, %v3841
    %v3843 = vpop.f32.mrb[0].mxu0
    %v3844 = vadd.f32 %v2682, %v3843
    %3845 = vmatprep.mubr.bf16.mxu0 %v2514
    %3846 = vmatmul.mubr.bf16.gmra.mrb[0].mxu0 %v2513
    %v3847 = vpop.f32.mrb[0].mxu0
    %v3848 = vadd.f32 %v2678, %v3847
    %v3849 = vpop.f32.mrb[0].mxu0
    %v3850 = vadd.f32 %v2682, %v3849
    %v3851 = vpop.f32.mrb[0].mxu0
    %v3852 = vadd.f32 %v2678, %v3851
    %v3853 = vpop.f32.mrb[0].mxu0
    %v3854 = vadd.f32 %v2682, %v3853
    %3855 = vmatprep.mubr.bf16.mxu0 %v2518
    %3856 = vmatmul.mubr.bf16.gmra.mrb[0].mxu0 %v2517
    %v3857 = vpop.f32.mrb[0].mxu0
    %v3858 = vadd.f32 %v2678, %v3857
    %v3859 = vpop.f32.mrb[0].mxu0
    %v3860 = vadd.f32 %v2682, %v3859
    %v3861 = vpop.f32.mrb[0].mxu0
    %v3862 = vadd.f32 %v2678, %v3861
    %v3863 = vpop.f32.mrb[0].mxu0
    %v3864 = vadd.f32 %v2682, %v3863
    %3865 = vmatprep.mubr.bf16.mxu0 %v2522
    %3866 = vmatmul.mubr.bf16.gmra.mrb[0].mxu0 %v2521
    %v3867 = vpop.f32.mrb[0].mxu0
    %v3868 = vadd.f32 %v2678, %v3867
    %v3869 = vpop.f32.mrb[0].mxu0
    %v3870 = vadd.f32 %v2682, %v3869
    %v3871 = vpop.f32.mrb[0].mxu0
    %v3872 = vadd.f32 %v2678, %v3871
    %v3873 = vpop.f32.mrb[0].mxu0
    %v3874 = vadd.f32 %v2682, %v3873
    %3875 = vmatprep.mubr.bf16.mxu0 %v2526
    %3876 = vmatmul.mubr.bf16.gmra.mrb[0].mxu0 %v2525
    %v3877 = vpop.f32.mrb[0].mxu0
    %v3878 = vadd.f32 %v2678, %v3877
    %v3879 = vpop.f32.mrb[0].mxu0
    %v3880 = vadd.f32 %v2682, %v3879
    %v3881 = vpop.f32.mrb[0].mxu0
    %v3882 = vadd.f32 %v2678, %v3881
    %v3883 = vpop.f32.mrb[0].mxu0
    %v3884 = vadd.f32 %v2682, %v3883
    %3885 = vmatprep.mubr.bf16.mxu0 %v2530
    %3886 = vmatmul.mubr.bf16.gmra.mrb[0].mxu0 %v2529
    %v3887 = vpop.f32.mrb[0].mxu0
    %v3888 = vadd.f32 %v2678, %v3887
    %v3889 = vpop.f32.mrb[0].mxu0
    %v3890 = vadd.f32 %v2682, %v3889
    %v3891 = vpop.f32.mrb[0].mxu0
    %v3892 = vadd.f32 %v2678, %v3891
    %v3893 = vpop.f32.mrb[0].mxu0
    %v3894 = vadd.f32 %v2682, %v3893
    %3895 = vmatprep.mubr.bf16.mxu0 %v2534
    %3896 = vmatmul.mubr.bf16.gmra.mrb[0].mxu0 %v2533
    %v3897 = vpop.f32.mrb[0].mxu0
    %v3898 = vadd.f32 %v2678, %v3897
    %v3899 = vpop.f32.mrb[0].mxu0
    %v3900 = vadd.f32 %v2682, %v3899
    %v3901 = vpop.f32.mrb[0].mxu0
    %v3902 = vadd.f32 %v2678, %v3901
    %v3903 = vpop.f32.mrb[0].mxu0
    %v3904 = vadd.f32 %v2682, %v3903
    %3905 = vdwg.mxu0
    %3906 = vmatprep.subr.bf16.mxu0 %v3138
    %3907 = vmatpush1.bf16.msra.mxu0 %v3137
    %3908 = vmatprep.subr.bf16.mxu0 %v3142
    %3909 = vmatpush1.bf16.msra.mxu0 %v3141
    %3910 = vmatprep.subr.bf16.mxu0 %v3146
    %3911 = vmatpush1.bf16.msra.mxu0 %v3145
    %3912 = vmatprep.subr.bf16.mxu0 %v3150
    %3913 = vmatpush1.bf16.msra.mxu0 %v3149
    %3914 = vmatprep.subr.bf16.mxu0 %v3154
    %3915 = vmatpush1.bf16.msra.mxu0 %v3153
    %3916 = vmatprep.subr.bf16.mxu0 %v3158
    %3917 = vmatpush1.bf16.msra.mxu0 %v3157
    %3918 = vmatprep.subr.bf16.mxu0 %v3162
    %3919 = vmatpush1.bf16.msra.mxu0 %v3161
    %3920 = vmatprep.subr.bf16.mxu0 %v3166
    %3921 = vmatpush1.bf16.msra.mxu0 %v3165
    %3922 = vmatprep.subr.bf16.mxu0 %v3170
    %3923 = vmatpush1.bf16.msra.mxu0 %v3169
    %3924 = vmatprep.subr.bf16.mxu0 %v3174
    %3925 = vmatpush1.bf16.msra.mxu0 %v3173
    %3926 = vmatprep.subr.bf16.mxu0 %v3178
    %3927 = vmatpush1.bf16.msra.mxu0 %v3177
    %3928 = vmatprep.subr.bf16.mxu0 %v3182
    %3929 = vmatpush1.bf16.msra.mxu0 %v3181
    %3930 = vmatprep.subr.bf16.mxu0 %v3186
    %3931 = vmatpush1.bf16.msra.mxu0 %v3185
    %3932 = vmatprep.subr.bf16.mxu0 %v3190
    %3933 = vmatpush1.bf16.msra.mxu0 %v3189
    %3934 = vmatprep.subr.bf16.mxu0 %v3194
    %3935 = vmatpush1.bf16.msra.mxu0 %v3193
    %3936 = vmatprep.subr.bf16.mxu0 %v3198
    %3937 = vmatpush1.bf16.msra.mxu0 %v3197
    %3938 = vmatprep.mubr.bf16.mxu0 %v2476
    %3939 = vmatmul.mubr.bf16.gmra.mrb[0].mxu0 %v2475
    %v3940 = vpop.f32.mrb[0].mxu0
    %v3941 = vadd.f32 %v3748, %v3940
    %v3942 = vpop.f32.mrb[0].mxu0
    %v3943 = vadd.f32 %v3750, %v3942
    %v3944 = vpop.f32.mrb[0].mxu0
    %v3945 = vadd.f32 %v3752, %v3944
    %v3946 = vpop.f32.mrb[0].mxu0
    %v3947 = vadd.f32 %v3754, %v3946
    %3948 = vmatprep.mubr.bf16.mxu0 %v2480
    %3949 = vmatmul.mubr.bf16.gmra.mrb[0].mxu0 %v2479
    %v3950 = vpop.f32.mrb[0].mxu0
    %v3951 = vadd.f32 %v3758, %v3950
    %v3952 = vpop.f32.mrb[0].mxu0
    %v3953 = vadd.f32 %v3760, %v3952
    %v3954 = vpop.f32.mrb[0].mxu0
    %v3955 = vadd.f32 %v3762, %v3954
    %v3956 = vpop.f32.mrb[0].mxu0
    %v3957 = vadd.f32 %v3764, %v3956
    %3958 = vmatprep.mubr.bf16.mxu0 %v2484
    %3959 = vmatmul.mubr.bf16.gmra.mrb[0].mxu0 %v2483
    %v3960 = vpop.f32.mrb[0].mxu0
    %v3961 = vadd.f32 %v3768, %v3960
    %v3962 = vpop.f32.mrb[0].mxu0
    %v3963 = vadd.f32 %v3770, %v3962
    %v3964 = vpop.f32.mrb[0].mxu0
    %v3965 = vadd.f32 %v3772, %v3964
    %v3966 = vpop.f32.mrb[0].mxu0
    %v3967 = vadd.f32 %v3774, %v3966
    %3968 = vmatprep.mubr.bf16.mxu0 %v2488
    %3969 = vmatmul.mubr.bf16.gmra.mrb[0].mxu0 %v2487
    %v3970 = vpop.f32.mrb[0].mxu0
    %v3971 = vadd.f32 %v3778, %v3970
    %v3972 = vpop.f32.mrb[0].mxu0
    %v3973 = vadd.f32 %v3780, %v3972
    %v3974 = vpop.f32.mrb[0].mxu0
    %v3975 = vadd.f32 %v3782, %v3974
    %v3976 = vpop.f32.mrb[0].mxu0
    %v3977 = vadd.f32 %v3784, %v3976
    %3978 = vmatprep.mubr.bf16.mxu0 %v2492
    %3979 = vmatmul.mubr.bf16.gmra.mrb[0].mxu0 %v2491
    %v3980 = vpop.f32.mrb[0].mxu0
    %v3981 = vadd.f32 %v3788, %v3980
    %v3982 = vpop.f32.mrb[0].mxu0
    %v3983 = vadd.f32 %v3790, %v3982
    %v3984 = vpop.f32.mrb[0].mxu0
    %v3985 = vadd.f32 %v3792, %v3984
    %v3986 = vpop.f32.mrb[0].mxu0
    %v3987 = vadd.f32 %v3794, %v3986
    %3988 = vmatprep.mubr.bf16.mxu0 %v2496
    %3989 = vmatmul.mubr.bf16.gmra.mrb[0].mxu0 %v2495
    %v3990 = vpop.f32.mrb[0].mxu0
    %v3991 = vadd.f32 %v3798, %v3990
    %v3992 = vpop.f32.mrb[0].mxu0
    %v3993 = vadd.f32 %v3800, %v3992
    %v3994 = vpop.f32.mrb[0].mxu0
    %v3995 = vadd.f32 %v3802, %v3994
    %v3996 = vpop.f32.mrb[0].mxu0
    %v3997 = vadd.f32 %v3804, %v3996
    %3998 = vmatprep.mubr.bf16.mxu0 %v2500
    %3999 = vmatmul.mubr.bf16.gmra.mrb[0].mxu0 %v2499
    %v4000 = vpop.f32.mrb[0].mxu0
    %v4001 = vadd.f32 %v3808, %v4000
    %v4002 = vpop.f32.mrb[0].mxu0
    %v4003 = vadd.f32 %v3810, %v4002
    %v4004 = vpop.f32.mrb[0].mxu0
    %v4005 = vadd.f32 %v3812, %v4004
    %v4006 = vpop.f32.mrb[0].mxu0
    %v4007 = vadd.f32 %v3814, %v4006
    %4008 = vmatprep.mubr.bf16.mxu0 %v2504
    %4009 = vmatmul.mubr.bf16.gmra.mrb[0].mxu0 %v2503
    %v4010 = vpop.f32.mrb[0].mxu0
    %v4011 = vadd.f32 %v3818, %v4010
    %v4012 = vpop.f32.mrb[0].mxu0
    %v4013 = vadd.f32 %v3820, %v4012
    %v4014 = vpop.f32.mrb[0].mxu0
    %v4015 = vadd.f32 %v3822, %v4014
    %v4016 = vpop.f32.mrb[0].mxu0
    %v4017 = vadd.f32 %v3824, %v4016
    %4018 = vmatprep.mubr.bf16.mxu0 %v2508
    %4019 = vmatmul.mubr.bf16.gmra.mrb[0].mxu0 %v2507
    %v4020 = vpop.f32.mrb[0].mxu0
    %v4021 = vadd.f32 %v3828, %v4020
    %v4022 = vpop.f32.mrb[0].mxu0
    %v4023 = vadd.f32 %v3830, %v4022
    %v4024 = vpop.f32.mrb[0].mxu0
    %v4025 = vadd.f32 %v3832, %v4024
    %v4026 = vpop.f32.mrb[0].mxu0
    %v4027 = vadd.f32 %v3834, %v4026
    %4028 = vmatprep.mubr.bf16.mxu0 %v2512
    %4029 = vmatmul.mubr.bf16.gmra.mrb[0].mxu0 %v2511
    %v4030 = vpop.f32.mrb[0].mxu0
    %v4031 = vadd.f32 %v3838, %v4030
    %v4032 = vpop.f32.mrb[0].mxu0
    %v4033 = vadd.f32 %v3840, %v4032
    %v4034 = vpop.f32.mrb[0].mxu0
    %v4035 = vadd.f32 %v3842, %v4034
    %v4036 = vpop.f32.mrb[0].mxu0
    %v4037 = vadd.f32 %v3844, %v4036
    %4038 = vmatprep.mubr.bf16.mxu0 %v2516
    %4039 = vmatmul.mubr.bf16.gmra.mrb[0].mxu0 %v2515
    %v4040 = vpop.f32.mrb[0].mxu0
    %v4041 = vadd.f32 %v3848, %v4040
    %v4042 = vpop.f32.mrb[0].mxu0
    %v4043 = vadd.f32 %v3850, %v4042
    %v4044 = vpop.f32.mrb[0].mxu0
    %v4045 = vadd.f32 %v3852, %v4044
    %v4046 = vpop.f32.mrb[0].mxu0
    %v4047 = vadd.f32 %v3854, %v4046
    %4048 = vmatprep.mubr.bf16.mxu0 %v2520
    %4049 = vmatmul.mubr.bf16.gmra.mrb[0].mxu0 %v2519
    %v4050 = vpop.f32.mrb[0].mxu0
    %v4051 = vadd.f32 %v3858, %v4050
    %v4052 = vpop.f32.mrb[0].mxu0
    %v4053 = vadd.f32 %v3860, %v4052
    %v4054 = vpop.f32.mrb[0].mxu0
    %v4055 = vadd.f32 %v3862, %v4054
    %v4056 = vpop.f32.mrb[0].mxu0
    %v4057 = vadd.f32 %v3864, %v4056
    %4058 = vmatprep.mubr.bf16.mxu0 %v2524
    %4059 = vmatmul.mubr.bf16.gmra.mrb[0].mxu0 %v2523
    %v4060 = vpop.f32.mrb[0].mxu0
    %v4061 = vadd.f32 %v3868, %v4060
    %v4062 = vpop.f32.mrb[0].mxu0
    %v4063 = vadd.f32 %v3870, %v4062
    %v4064 = vpop.f32.mrb[0].mxu0
    %v4065 = vadd.f32 %v3872, %v4064
    %v4066 = vpop.f32.mrb[0].mxu0
    %v4067 = vadd.f32 %v3874, %v4066
    %4068 = vmatprep.mubr.bf16.mxu0 %v2528
    %4069 = vmatmul.mubr.bf16.gmra.mrb[0].mxu0 %v2527
    %v4070 = vpop.f32.mrb[0].mxu0
    %v4071 = vadd.f32 %v3878, %v4070
    %v4072 = vpop.f32.mrb[0].mxu0
    %v4073 = vadd.f32 %v3880, %v4072
    %v4074 = vpop.f32.mrb[0].mxu0
    %v4075 = vadd.f32 %v3882, %v4074
    %v4076 = vpop.f32.mrb[0].mxu0
    %v4077 = vadd.f32 %v3884, %v4076
    %4078 = vmatprep.mubr.bf16.mxu0 %v2532
    %4079 = vmatmul.mubr.bf16.gmra.mrb[0].mxu0 %v2531
    %v4080 = vpop.f32.mrb[0].mxu0
    %v4081 = vadd.f32 %v3888, %v4080
    %v4082 = vpop.f32.mrb[0].mxu0
    %v4083 = vadd.f32 %v3890, %v4082
    %v4084 = vpop.f32.mrb[0].mxu0
    %v4085 = vadd.f32 %v3892, %v4084
    %v4086 = vpop.f32.mrb[0].mxu0
    %v4087 = vadd.f32 %v3894, %v4086
    %4088 = vmatprep.mubr.bf16.mxu0 %v2536
    %4089 = vmatmul.mubr.bf16.gmra.mrb[0].mxu0 %v2535
    %v4090 = vpop.f32.mrb[0].mxu0
    %v4091 = vadd.f32 %v3898, %v4090
    %v4092 = vpop.f32.mrb[0].mxu0
    %v4093 = vadd.f32 %v3900, %v4092
    %v4094 = vpop.f32.mrb[0].mxu0
    %v4095 = vadd.f32 %v3902, %v4094
    %v4096 = vpop.f32.mrb[0].mxu0
    %v4097 = vadd.f32 %v3904, %v4096
    %4098 = vdwg.mxu0
    %v4099 = vmax.f32 %v3555, 0.0
    %v4100 = vmax.f32 %v3557, 0.0
    %v4101 = vmax.f32 %v3941, 0.0
    %v4102 = vmax.f32 %v3943, 0.0
    %v4103 = vmax.f32 %v3559, 0.0
    %v4104 = vmax.f32 %v3561, 0.0
    %v4105 = vmax.f32 %v3945, 0.0
    %v4106 = vmax.f32 %v3947, 0.0
    %v4107 = vmax.f32 %v3565, 0.0
    %v4108 = vmax.f32 %v3567, 0.0
    %v4109 = vmax.f32 %v3951, 0.0
    %v4110 = vmax.f32 %v3953, 0.0
    %v4111 = vmax.f32 %v3569, 0.0
    %v4112 = vmax.f32 %v3571, 0.0
    %v4113 = vmax.f32 %v3955, 0.0
    %v4114 = vmax.f32 %v3957, 0.0
    %v4115 = vmax.f32 %v3575, 0.0
    %v4116 = vmax.f32 %v3577, 0.0
    %v4117 = vmax.f32 %v3961, 0.0
    %v4118 = vmax.f32 %v3963, 0.0
    %v4119 = vmax.f32 %v3579, 0.0
    %v4120 = vmax.f32 %v3581, 0.0
    %v4121 = vmax.f32 %v3965, 0.0
    %v4122 = vmax.f32 %v3967, 0.0
    %v4123 = vmax.f32 %v3585, 0.0
    %v4124 = vmax.f32 %v3587, 0.0
    %v4125 = vmax.f32 %v3971, 0.0
    %v4126 = vmax.f32 %v3973, 0.0
    %v4127 = vmax.f32 %v3589, 0.0
    %v4128 = vmax.f32 %v3591, 0.0
    %v4129 = vmax.f32 %v3975, 0.0
    %v4130 = vmax.f32 %v3977, 0.0
    %v4131 = vmax.f32 %v3595, 0.0
    %v4132 = vmax.f32 %v3597, 0.0
    %v4133 = vmax.f32 %v3981, 0.0
    %v4134 = vmax.f32 %v3983, 0.0
    %v4135 = vmax.f32 %v3599, 0.0
    %v4136 = vmax.f32 %v3601, 0.0
    %v4137 = vmax.f32 %v3985, 0.0
    %v4138 = vmax.f32 %v3987, 0.0
    %v4139 = vmax.f32 %v3605, 0.0
    %v4140 = vmax.f32 %v3607, 0.0
    %v4141 = vmax.f32 %v3991, 0.0
    %v4142 = vmax.f32 %v3993, 0.0
    %v4143 = vmax.f32 %v3609, 0.0
    %v4144 = vmax.f32 %v3611, 0.0
    %v4145 = vmax.f32 %v3995, 0.0
    %v4146 = vmax.f32 %v3997, 0.0
    %v4147 = vmax.f32 %v3615, 0.0
    %v4148 = vmax.f32 %v3617, 0.0
    %v4149 = vmax.f32 %v4001, 0.0
    %v4150 = vmax.f32 %v4003, 0.0
    %v4151 = vmax.f32 %v3619, 0.0
    %v4152 = vmax.f32 %v3621, 0.0
    %v4153 = vmax.f32 %v4005, 0.0
    %v4154 = vmax.f32 %v4007, 0.0
    %v4155 = vmax.f32 %v3625, 0.0
    %v4156 = vmax.f32 %v3627, 0.0
    %v4157 = vmax.f32 %v4011, 0.0
    %v4158 = vmax.f32 %v4013, 0.0
    %v4159 = vmax.f32 %v3629, 0.0
    %v4160 = vmax.f32 %v3631, 0.0
    %v4161 = vmax.f32 %v4015, 0.0
    %v4162 = vmax.f32 %v4017, 0.0
    %v4163 = vmax.f32 %v3635, 0.0
    %v4164 = vmax.f32 %v3637, 0.0
    %v4165 = vmax.f32 %v4021, 0.0
    %v4166 = vmax.f32 %v4023, 0.0
    %v4167 = vmax.f32 %v3639, 0.0
    %v4168 = vmax.f32 %v3641, 0.0
    %v4169 = vmax.f32 %v4025, 0.0
    %v4170 = vmax.f32 %v4027, 0.0
    %v4171 = vmax.f32 %v3645, 0.0
    %v4172 = vmax.f32 %v3647, 0.0
    %v4173 = vmax.f32 %v4031, 0.0
    %v4174 = vmax.f32 %v4033, 0.0
    %v4175 = vmax.f32 %v3649, 0.0
    %v4176 = vmax.f32 %v3651, 0.0
    %v4177 = vmax.f32 %v4035, 0.0
    %v4178 = vmax.f32 %v4037, 0.0
    %v4179 = vmax.f32 %v3655, 0.0
    %v4180 = vmax.f32 %v3657, 0.0
    %v4181 = vmax.f32 %v4041, 0.0
    %v4182 = vmax.f32 %v4043, 0.0
    %v4183 = vmax.f32 %v3659, 0.0
    %v4184 = vmax.f32 %v3661, 0.0
    %v4185 = vmax.f32 %v4045, 0.0
    %v4186 = vmax.f32 %v4047, 0.0
    %v4187 = vmax.f32 %v3665, 0.0
    %v4188 = vmax.f32 %v3667, 0.0
    %v4189 = vmax.f32 %v4051, 0.0
    %v4190 = vmax.f32 %v4053, 0.0
    %v4191 = vmax.f32 %v3669, 0.0
    %v4192 = vmax.f32 %v3671, 0.0
    %v4193 = vmax.f32 %v4055, 0.0
    %v4194 = vmax.f32 %v4057, 0.0
    %v4195 = vmax.f32 %v3675, 0.0
    %v4196 = vmax.f32 %v3677, 0.0
    %v4197 = vmax.f32 %v4061, 0.0
    %v4198 = vmax.f32 %v4063, 0.0
    %v4199 = vmax.f32 %v3679, 0.0
    %v4200 = vmax.f32 %v3681, 0.0
    %v4201 = vmax.f32 %v4065, 0.0
    %v4202 = vmax.f32 %v4067, 0.0
    %v4203 = vmax.f32 %v3685, 0.0
    %v4204 = vmax.f32 %v3687, 0.0
    %v4205 = vmax.f32 %v4071, 0.0
    %v4206 = vmax.f32 %v4073, 0.0
    %v4207 = vmax.f32 %v3689, 0.0
    %v4208 = vmax.f32 %v3691, 0.0
    %v4209 = vmax.f32 %v4075, 0.0
    %v4210 = vmax.f32 %v4077, 0.0
    %v4211 = vmax.f32 %v3695, 0.0
    %v4212 = vmax.f32 %v3697, 0.0
    %v4213 = vmax.f32 %v4081, 0.0
    %v4214 = vmax.f32 %v4083, 0.0
    %v4215 = vmax.f32 %v3699, 0.0
    %v4216 = vmax.f32 %v3701, 0.0
    %v4217 = vmax.f32 %v4085, 0.0
    %v4218 = vmax.f32 %v4087, 0.0
    %v4219 = vmax.f32 %v3705, 0.0
    %v4220 = vmax.f32 %v3707, 0.0
    %v4221 = vmax.f32 %v4091, 0.0
    %v4222 = vmax.f32 %v4093, 0.0
    %v4223 = vmax.f32 %v3709, 0.0
    %v4224 = vmax.f32 %v3711, 0.0
    %v4225 = vmax.f32 %v4095, 0.0
    %v4226 = vmax.f32 %v4097, 0.0
    %v4227 = vpack.c.bf16 %v4103, %v4099
    %v4228 = vpack.c.bf16 %v4104, %v4100
    %v4229 = vpack.c.bf16 %v4105, %v4101
    %v4230 = vpack.c.bf16 %v4106, %v4102
    %v4231 = vpack.c.bf16 %v4111, %v4107
    %v4232 = vpack.c.bf16 %v4112, %v4108
    %v4233 = vpack.c.bf16 %v4113, %v4109
    %v4234 = vpack.c.bf16 %v4114, %v4110
    %v4235 = vpack.c.bf16 %v4119, %v4115
    %v4236 = vpack.c.bf16 %v4120, %v4116
    %v4237 = vpack.c.bf16 %v4121, %v4117
    %v4238 = vpack.c.bf16 %v4122, %v4118
    %v4239 = vpack.c.bf16 %v4127, %v4123
    %v4240 = vpack.c.bf16 %v4128, %v4124
    %v4241 = vpack.c.bf16 %v4129, %v4125
    %v4242 = vpack.c.bf16 %v4130, %v4126
    %v4243 = vpack.c.bf16 %v4135, %v4131
    %v4244 = vpack.c.bf16 %v4136, %v4132
    %v4245 = vpack.c.bf16 %v4137, %v4133
    %v4246 = vpack.c.bf16 %v4138, %v4134
    %v4247 = vpack.c.bf16 %v4143, %v4139
    %v4248 = vpack.c.bf16 %v4144, %v4140
    %v4249 = vpack.c.bf16 %v4145, %v4141
    %v4250 = vpack.c.bf16 %v4146, %v4142
    %v4251 = vpack.c.bf16 %v4151, %v4147
    %v4252 = vpack.c.bf16 %v4152, %v4148
    %v4253 = vpack.c.bf16 %v4153, %v4149
    %v4254 = vpack.c.bf16 %v4154, %v4150
    %v4255 = vpack.c.bf16 %v4159, %v4155
    %v4256 = vpack.c.bf16 %v4160, %v4156
    %v4257 = vpack.c.bf16 %v4161, %v4157
    %v4258 = vpack.c.bf16 %v4162, %v4158
    %v4259 = vpack.c.bf16 %v4167, %v4163
    %v4260 = vpack.c.bf16 %v4168, %v4164
    %v4261 = vpack.c.bf16 %v4169, %v4165
    %v4262 = vpack.c.bf16 %v4170, %v4166
    %v4263 = vpack.c.bf16 %v4175, %v4171
    %v4264 = vpack.c.bf16 %v4176, %v4172
    %v4265 = vpack.c.bf16 %v4177, %v4173
    %v4266 = vpack.c.bf16 %v4178, %v4174
    %v4267 = vpack.c.bf16 %v4183, %v4179
    %v4268 = vpack.c.bf16 %v4184, %v4180
    %v4269 = vpack.c.bf16 %v4185, %v4181
    %v4270 = vpack.c.bf16 %v4186, %v4182
    %v4271 = vpack.c.bf16 %v4191, %v4187
    %v4272 = vpack.c.bf16 %v4192, %v4188
    %v4273 = vpack.c.bf16 %v4193, %v4189
    %v4274 = vpack.c.bf16 %v4194, %v4190
    %v4275 = vpack.c.bf16 %v4199, %v4195
    %v4276 = vpack.c.bf16 %v4200, %v4196
    %v4277 = vpack.c.bf16 %v4201, %v4197
    %v4278 = vpack.c.bf16 %v4202, %v4198
    %v4279 = vpack.c.bf16 %v4207, %v4203
    %v4280 = vpack.c.bf16 %v4208, %v4204
    %v4281 = vpack.c.bf16 %v4209, %v4205
    %v4282 = vpack.c.bf16 %v4210, %v4206
    %v4283 = vpack.c.bf16 %v4215, %v4211
    %v4284 = vpack.c.bf16 %v4216, %v4212
    %v4285 = vpack.c.bf16 %v4217, %v4213
    %v4286 = vpack.c.bf16 %v4218, %v4214
    %v4287 = vpack.c.bf16 %v4223, %v4219
    %v4288 = vpack.c.bf16 %v4224, %v4220
    %v4289 = vpack.c.bf16 %v4225, %v4221
    %v4290 = vpack.c.bf16 %v4226, %v4222
    %v4291 = vld [vmem:[%s7] sm:$0xf]
    %v4292 = vld [vmem:[%s7 + $0x4] sm:$0xf]
    %v4293 = vld [vmem:[%s7 + $0x8] sm:$0xf]
    %v4294 = vld [vmem:[%s7 + $0xc] sm:$0xf]
    %v4295 = vld [vmem:[%s7 + $0x10] sm:$0xf]
    %v4296 = vld [vmem:[%s7 + $0x14] sm:$0xf]
    %v4297 = vld [vmem:[%s7 + $0x18] sm:$0xf]
    %v4298 = vld [vmem:[%s7 + $0x1c] sm:$0xf]
    %v4299 = vld [vmem:[%s7 + $0x20] sm:$0xf]
    %v4300 = vld [vmem:[%s7 + $0x24] sm:$0xf]
    %v4301 = vld [vmem:[%s7 + $0x28] sm:$0xf]
    %v4302 = vld [vmem:[%s7 + $0x2c] sm:$0xf]
    %v4303 = vld [vmem:[%s7 + $0x30] sm:$0xf]
    %v4304 = vld [vmem:[%s7 + $0x34] sm:$0xf]
    %v4305 = vld [vmem:[%s7 + $0x38] sm:$0xf]
    %v4306 = vld [vmem:[%s7 + $0x3c] sm:$0xf]
    %v4307 = vld [vmem:[%s7 + $0x40] sm:$0xf]
    %v4308 = vld [vmem:[%s7 + $0x44] sm:$0xf]
    %v4309 = vld [vmem:[%s7 + $0x48] sm:$0xf]
    %v4310 = vld [vmem:[%s7 + $0x4c] sm:$0xf]
    %v4311 = vld [vmem:[%s7 + $0x50] sm:$0xf]
    %v4312 = vld [vmem:[%s7 + $0x54] sm:$0xf]
    %v4313 = vld [vmem:[%s7 + $0x58] sm:$0xf]
    %v4314 = vld [vmem:[%s7 + $0x5c] sm:$0xf]
    %v4315 = vld [vmem:[%s7 + $0x60] sm:$0xf]
    %v4316 = vld [vmem:[%s7 + $0x64] sm:$0xf]
    %v4317 = vld [vmem:[%s7 + $0x68] sm:$0xf]
    %v4318 = vld [vmem:[%s7 + $0x6c] sm:$0xf]
    %v4319 = vld [vmem:[%s7 + $0x70] sm:$0xf]
    %v4320 = vld [vmem:[%s7 + $0x74] sm:$0xf]
    %v4321 = vld [vmem:[%s7 + $0x78] sm:$0xf]
    %v4322 = vld [vmem:[%s7 + $0x7c] sm:$0xf]
    %v4323 = vld [vmem:[%s7 + $0x80] sm:$0xf]
    %v4324 = vld [vmem:[%s7 + $0x84] sm:$0xf]
    %v4325 = vld [vmem:[%s7 + $0x88] sm:$0xf]
    %v4326 = vld [vmem:[%s7 + $0x8c] sm:$0xf]
    %v4327 = vld [vmem:[%s7 + $0x90] sm:$0xf]
    %v4328 = vld [vmem:[%s7 + $0x94] sm:$0xf]
    %v4329 = vld [vmem:[%s7 + $0x98] sm:$0xf]
    %v4330 = vld [vmem:[%s7 + $0x9c] sm:$0xf]
    %v4331 = vld [vmem:[%s7 + $0xa0] sm:$0xf]
    %v4332 = vld [vmem:[%s7 + $0xa4] sm:$0xf]
    %v4333 = vld [vmem:[%s7 + $0xa8] sm:$0xf]
    %v4334 = vld [vmem:[%s7 + $0xac] sm:$0xf]
    %v4335 = vld [vmem:[%s7 + $0xb0] sm:$0xf]
    %v4336 = vld [vmem:[%s7 + $0xb4] sm:$0xf]
    %v4337 = vld [vmem:[%s7 + $0xb8] sm:$0xf]
    %v4338 = vld [vmem:[%s7 + $0xbc] sm:$0xf]
    %v4339 = vld [vmem:[%s7 + $0xc0] sm:$0xf]
    %v4340 = vld [vmem:[%s7 + $0xc4] sm:$0xf]
    %v4341 = vld [vmem:[%s7 + $0xc8] sm:$0xf]
    %v4342 = vld [vmem:[%s7 + $0xcc] sm:$0xf]
    %v4343 = vld [vmem:[%s7 + $0xd0] sm:$0xf]
    %v4344 = vld [vmem:[%s7 + $0xd4] sm:$0xf]
    %v4345 = vld [vmem:[%s7 + $0xd8] sm:$0xf]
    %v4346 = vld [vmem:[%s7 + $0xdc] sm:$0xf]
    %v4347 = vld [vmem:[%s7 + $0xe0] sm:$0xf]
    %v4348 = vld [vmem:[%s7 + $0xe4] sm:$0xf]
    %v4349 = vld [vmem:[%s7 + $0xe8] sm:$0xf]
    %v4350 = vld [vmem:[%s7 + $0xec] sm:$0xf]
    %v4351 = vld [vmem:[%s7 + $0xf0] sm:$0xf]
    %v4352 = vld [vmem:[%s7 + $0xf4] sm:$0xf]
    %v4353 = vld [vmem:[%s7 + $0xf8] sm:$0xf]
    %v4354 = vld [vmem:[%s7 + $0xfc] sm:$0xf]
    %v4355 = vld [vmem:[%s8] sm:$0x1]
    %v4357 = vlaneseq
    %v4358 = vshrl.u32 %v4357, 7
    %v4359 = vsub.s32 0, %v4358
    %v4360 = vrot.slane %v4355, %v4359
    %v4426 = vunpack.c.l.b16 %v4291
    %v4427 = vunpack.c.l.b16 %v4292
    %v4428 = vunpack.c.l.b16 %v4293
    %v4429 = vunpack.c.l.b16 %v4294
    %v4430 = vunpack.c.l.b16 %v4295
    %v4431 = vunpack.c.l.b16 %v4296
    %v4432 = vunpack.c.l.b16 %v4297
    %v4433 = vunpack.c.l.b16 %v4298
    %v4434 = vunpack.c.l.b16 %v4299
    %v4435 = vunpack.c.l.b16 %v4300
    %v4436 = vunpack.c.l.b16 %v4301
    %v4437 = vunpack.c.l.b16 %v4302
    %v4438 = vunpack.c.l.b16 %v4303
    %v4439 = vunpack.c.l.b16 %v4304
    %v4440 = vunpack.c.l.b16 %v4305
    %v4441 = vunpack.c.l.b16 %v4306
    %v4442 = vunpack.c.l.b16 %v4307
    %v4443 = vunpack.c.l.b16 %v4308
    %v4444 = vunpack.c.l.b16 %v4309
    %v4445 = vunpack.c.l.b16 %v4310
    %v4446 = vunpack.c.l.b16 %v4311
    %v4447 = vunpack.c.l.b16 %v4312
    %v4448 = vunpack.c.l.b16 %v4313
    %v4449 = vunpack.c.l.b16 %v4314
    %v4450 = vunpack.c.l.b16 %v4315
    %v4451 = vunpack.c.l.b16 %v4316
    %v4452 = vunpack.c.l.b16 %v4317
    %v4453 = vunpack.c.l.b16 %v4318
    %v4454 = vunpack.c.l.b16 %v4319
    %v4455 = vunpack.c.l.b16 %v4320
    %v4456 = vunpack.c.l.b16 %v4321
    %v4457 = vunpack.c.l.b16 %v4322
    %v4458 = vunpack.c.l.b16 %v4323
    %v4459 = vunpack.c.l.b16 %v4324
    %v4460 = vunpack.c.l.b16 %v4325
    %v4461 = vunpack.c.l.b16 %v4326
    %v4462 = vunpack.c.l.b16 %v4327
    %v4463 = vunpack.c.l.b16 %v4328
    %v4464 = vunpack.c.l.b16 %v4329
    %v4465 = vunpack.c.l.b16 %v4330
    %v4466 = vunpack.c.l.b16 %v4331
    %v4467 = vunpack.c.l.b16 %v4332
    %v4468 = vunpack.c.l.b16 %v4333
    %v4469 = vunpack.c.l.b16 %v4334
    %v4470 = vunpack.c.l.b16 %v4335
    %v4471 = vunpack.c.l.b16 %v4336
    %v4472 = vunpack.c.l.b16 %v4337
    %v4473 = vunpack.c.l.b16 %v4338
    %v4474 = vunpack.c.l.b16 %v4339
    %v4475 = vunpack.c.l.b16 %v4340
    %v4476 = vunpack.c.l.b16 %v4341
    %v4477 = vunpack.c.l.b16 %v4342
    %v4478 = vunpack.c.l.b16 %v4343
    %v4479 = vunpack.c.l.b16 %v4344
    %v4480 = vunpack.c.l.b16 %v4345
    %v4481 = vunpack.c.l.b16 %v4346
    %v4482 = vunpack.c.l.b16 %v4347
    %v4483 = vunpack.c.l.b16 %v4348
    %v4484 = vunpack.c.l.b16 %v4349
    %v4485 = vunpack.c.l.b16 %v4350
    %v4486 = vunpack.c.l.b16 %v4351
    %v4487 = vunpack.c.l.b16 %v4352
    %v4488 = vunpack.c.l.b16 %v4353
    %v4489 = vunpack.c.l.b16 %v4354
    %v4490 = vpack.c.b16 %v4427, %v4426
    %v4491 = vpack.c.b16 %v4429, %v4428
    %v4492 = vpack.c.b16 %v4431, %v4430
    %v4493 = vpack.c.b16 %v4433, %v4432
    %v4494 = vpack.c.b16 %v4435, %v4434
    %v4495 = vpack.c.b16 %v4437, %v4436
    %v4496 = vpack.c.b16 %v4439, %v4438
    %v4497 = vpack.c.b16 %v4441, %v4440
    %v4498 = vpack.c.b16 %v4443, %v4442
    %v4499 = vpack.c.b16 %v4445, %v4444
    %v4500 = vpack.c.b16 %v4447, %v4446
    %v4501 = vpack.c.b16 %v4449, %v4448
    %v4502 = vpack.c.b16 %v4451, %v4450
    %v4503 = vpack.c.b16 %v4453, %v4452
    %v4504 = vpack.c.b16 %v4455, %v4454
    %v4505 = vpack.c.b16 %v4457, %v4456
    %v4506 = vpack.c.b16 %v4459, %v4458
    %v4507 = vpack.c.b16 %v4461, %v4460
    %v4508 = vpack.c.b16 %v4463, %v4462
    %v4509 = vpack.c.b16 %v4465, %v4464
    %v4510 = vpack.c.b16 %v4467, %v4466
    %v4511 = vpack.c.b16 %v4469, %v4468
    %v4512 = vpack.c.b16 %v4471, %v4470
    %v4513 = vpack.c.b16 %v4473, %v4472
    %v4514 = vpack.c.b16 %v4475, %v4474
    %v4515 = vpack.c.b16 %v4477, %v4476
    %v4516 = vpack.c.b16 %v4479, %v4478
    %v4517 = vpack.c.b16 %v4481, %v4480
    %v4518 = vpack.c.b16 %v4483, %v4482
    %v4519 = vpack.c.b16 %v4485, %v4484
    %v4520 = vpack.c.b16 %v4487, %v4486
    %v4521 = vpack.c.b16 %v4489, %v4488
    %4554 = vmatprep.subr.bf16.mxu0 0
    %4555 = vmatpush1.bf16.msra.mxu0 %v4490
    %4556 = vmatprep.subr.bf16.mxu0 0
    %4557 = vmatpush1.bf16.msra.mxu0 %v4491
    %4558 = vmatprep.subr.bf16.mxu0 0
    %4559 = vmatpush1.bf16.msra.mxu0 %v4492
    %4560 = vmatprep.subr.bf16.mxu0 0
    %4561 = vmatpush1.bf16.msra.mxu0 %v4493
    %4562 = vmatprep.subr.bf16.mxu0 0
    %4563 = vmatpush1.bf16.msra.mxu0 %v4494
    %4564 = vmatprep.subr.bf16.mxu0 0
    %4565 = vmatpush1.bf16.msra.mxu0 %v4495
    %4566 = vmatprep.subr.bf16.mxu0 0
    %4567 = vmatpush1.bf16.msra.mxu0 %v4496
    %4568 = vmatprep.subr.bf16.mxu0 0
    %4569 = vmatpush1.bf16.msra.mxu0 %v4497
    %4570 = vmatprep.subr.bf16.mxu0 0
    %4571 = vmatpush1.bf16.msra.mxu0 %v4498
    %4572 = vmatprep.subr.bf16.mxu0 0
    %4573 = vmatpush1.bf16.msra.mxu0 %v4499
    %4574 = vmatprep.subr.bf16.mxu0 0
    %4575 = vmatpush1.bf16.msra.mxu0 %v4500
    %4576 = vmatprep.subr.bf16.mxu0 0
    %4577 = vmatpush1.bf16.msra.mxu0 %v4501
    %4578 = vmatprep.subr.bf16.mxu0 0
    %4579 = vmatpush1.bf16.msra.mxu0 %v4502
    %4580 = vmatprep.subr.bf16.mxu0 0
    %4581 = vmatpush1.bf16.msra.mxu0 %v4503
    %4582 = vmatprep.subr.bf16.mxu0 0
    %4583 = vmatpush1.bf16.msra.mxu0 %v4504
    %4584 = vmatprep.subr.bf16.mxu0 0
    %4585 = vmatpush1.bf16.msra.mxu0 %v4505
    %4586 = vmatprep.mubr.bf16.mxu0 %v4228
    %4587 = vmatmul.mubr.bf16.gmra.mrb[0].mxu0 %v4227
    %v4588 = vpop.f32.mrb[0].mxu0
    %v4589 = vadd.f32 %v4360, %v4588
    %v4590 = vpop.f32.mrb[0].mxu0
    %v4591 = vpop.f32.mrb[0].mxu0
    %v4592 = vadd.f32 %v4360, %v4591
    %v4593 = vpop.f32.mrb[0].mxu0
    %4594 = vmatprep.mubr.bf16.mxu0 %v4232
    %4595 = vmatmul.mubr.bf16.gmra.mrb[0].mxu0 %v4231
    %v4596 = vpop.f32.mrb[0].mxu0
    %v4597 = vadd.f32 %v4360, %v4596
    %v4598 = vpop.f32.mrb[0].mxu0
    %v4599 = vpop.f32.mrb[0].mxu0
    %v4600 = vadd.f32 %v4360, %v4599
    %v4601 = vpop.f32.mrb[0].mxu0
    %4602 = vmatprep.mubr.bf16.mxu0 %v4236
    %4603 = vmatmul.mubr.bf16.gmra.mrb[0].mxu0 %v4235
    %v4604 = vpop.f32.mrb[0].mxu0
    %v4605 = vadd.f32 %v4360, %v4604
    %v4606 = vpop.f32.mrb[0].mxu0
    %v4607 = vpop.f32.mrb[0].mxu0
    %v4608 = vadd.f32 %v4360, %v4607
    %v4609 = vpop.f32.mrb[0].mxu0
    %4610 = vmatprep.mubr.bf16.mxu0 %v4240
    %4611 = vmatmul.mubr.bf16.gmra.mrb[0].mxu0 %v4239
    %v4612 = vpop.f32.mrb[0].mxu0
    %v4613 = vadd.f32 %v4360, %v4612
    %v4614 = vpop.f32.mrb[0].mxu0
    %v4615 = vpop.f32.mrb[0].mxu0
    %v4616 = vadd.f32 %v4360, %v4615
    %v4617 = vpop.f32.mrb[0].mxu0
    %4618 = vmatprep.mubr.bf16.mxu0 %v4244
    %4619 = vmatmul.mubr.bf16.gmra.mrb[0].mxu0 %v4243
    %v4620 = vpop.f32.mrb[0].mxu0
    %v4621 = vadd.f32 %v4360, %v4620
    %v4622 = vpop.f32.mrb[0].mxu0
    %v4623 = vpop.f32.mrb[0].mxu0
    %v4624 = vadd.f32 %v4360, %v4623
    %v4625 = vpop.f32.mrb[0].mxu0
    %4626 = vmatprep.mubr.bf16.mxu0 %v4248
    %4627 = vmatmul.mubr.bf16.gmra.mrb[0].mxu0 %v4247
    %v4628 = vpop.f32.mrb[0].mxu0
    %v4629 = vadd.f32 %v4360, %v4628
    %v4630 = vpop.f32.mrb[0].mxu0
    %v4631 = vpop.f32.mrb[0].mxu0
    %v4632 = vadd.f32 %v4360, %v4631
    %v4633 = vpop.f32.mrb[0].mxu0
    %4634 = vmatprep.mubr.bf16.mxu0 %v4252
    %4635 = vmatmul.mubr.bf16.gmra.mrb[0].mxu0 %v4251
    %v4636 = vpop.f32.mrb[0].mxu0
    %v4637 = vadd.f32 %v4360, %v4636
    %v4638 = vpop.f32.mrb[0].mxu0
    %v4639 = vpop.f32.mrb[0].mxu0
    %v4640 = vadd.f32 %v4360, %v4639
    %v4641 = vpop.f32.mrb[0].mxu0
    %4642 = vmatprep.mubr.bf16.mxu0 %v4256
    %4643 = vmatmul.mubr.bf16.gmra.mrb[0].mxu0 %v4255
    %v4644 = vpop.f32.mrb[0].mxu0
    %v4645 = vadd.f32 %v4360, %v4644
    %v4646 = vpop.f32.mrb[0].mxu0
    %v4647 = vpop.f32.mrb[0].mxu0
    %v4648 = vadd.f32 %v4360, %v4647
    %v4649 = vpop.f32.mrb[0].mxu0
    %4650 = vmatprep.mubr.bf16.mxu0 %v4260
    %4651 = vmatmul.mubr.bf16.gmra.mrb[0].mxu0 %v4259
    %v4652 = vpop.f32.mrb[0].mxu0
    %v4653 = vadd.f32 %v4360, %v4652
    %v4654 = vpop.f32.mrb[0].mxu0
    %v4655 = vpop.f32.mrb[0].mxu0
    %v4656 = vadd.f32 %v4360, %v4655
    %v4657 = vpop.f32.mrb[0].mxu0
    %4658 = vmatprep.mubr.bf16.mxu0 %v4264
    %4659 = vmatmul.mubr.bf16.gmra.mrb[0].mxu0 %v4263
    %v4660 = vpop.f32.mrb[0].mxu0
    %v4661 = vadd.f32 %v4360, %v4660
    %v4662 = vpop.f32.mrb[0].mxu0
    %v4663 = vpop.f32.mrb[0].mxu0
    %v4664 = vadd.f32 %v4360, %v4663
    %v4665 = vpop.f32.mrb[0].mxu0
    %4666 = vmatprep.mubr.bf16.mxu0 %v4268
    %4667 = vmatmul.mubr.bf16.gmra.mrb[0].mxu0 %v4267
    %v4668 = vpop.f32.mrb[0].mxu0
    %v4669 = vadd.f32 %v4360, %v4668
    %v4670 = vpop.f32.mrb[0].mxu0
    %v4671 = vpop.f32.mrb[0].mxu0
    %v4672 = vadd.f32 %v4360, %v4671
    %v4673 = vpop.f32.mrb[0].mxu0
    %4674 = vmatprep.mubr.bf16.mxu0 %v4272
    %4675 = vmatmul.mubr.bf16.gmra.mrb[0].mxu0 %v4271
    %v4676 = vpop.f32.mrb[0].mxu0
    %v4677 = vadd.f32 %v4360, %v4676
    %v4678 = vpop.f32.mrb[0].mxu0
    %v4679 = vpop.f32.mrb[0].mxu0
    %v4680 = vadd.f32 %v4360, %v4679
    %v4681 = vpop.f32.mrb[0].mxu0
    %4682 = vmatprep.mubr.bf16.mxu0 %v4276
    %4683 = vmatmul.mubr.bf16.gmra.mrb[0].mxu0 %v4275
    %v4684 = vpop.f32.mrb[0].mxu0
    %v4685 = vadd.f32 %v4360, %v4684
    %v4686 = vpop.f32.mrb[0].mxu0
    %v4687 = vpop.f32.mrb[0].mxu0
    %v4688 = vadd.f32 %v4360, %v4687
    %v4689 = vpop.f32.mrb[0].mxu0
    %4690 = vmatprep.mubr.bf16.mxu0 %v4280
    %4691 = vmatmul.mubr.bf16.gmra.mrb[0].mxu0 %v4279
    %v4692 = vpop.f32.mrb[0].mxu0
    %v4693 = vadd.f32 %v4360, %v4692
    %v4694 = vpop.f32.mrb[0].mxu0
    %v4695 = vpop.f32.mrb[0].mxu0
    %v4696 = vadd.f32 %v4360, %v4695
    %v4697 = vpop.f32.mrb[0].mxu0
    %4698 = vmatprep.mubr.bf16.mxu0 %v4284
    %4699 = vmatmul.mubr.bf16.gmra.mrb[0].mxu0 %v4283
    %v4700 = vpop.f32.mrb[0].mxu0
    %v4701 = vadd.f32 %v4360, %v4700
    %v4702 = vpop.f32.mrb[0].mxu0
    %v4703 = vpop.f32.mrb[0].mxu0
    %v4704 = vadd.f32 %v4360, %v4703
    %v4705 = vpop.f32.mrb[0].mxu0
    %4706 = vmatprep.mubr.bf16.mxu0 %v4288
    %4707 = vmatmul.mubr.bf16.gmra.mrb[0].mxu0 %v4287
    %v4708 = vpop.f32.mrb[0].mxu0
    %v4709 = vadd.f32 %v4360, %v4708
    %v4710 = vpop.f32.mrb[0].mxu0
    %v4711 = vpop.f32.mrb[0].mxu0
    %v4712 = vadd.f32 %v4360, %v4711
    %v4713 = vpop.f32.mrb[0].mxu0
    %4714 = vdwg.mxu0
    %4715 = vmatprep.subr.bf16.mxu0 0
    %4716 = vmatpush1.bf16.msra.mxu0 %v4506
    %4717 = vmatprep.subr.bf16.mxu0 0
    %4718 = vmatpush1.bf16.msra.mxu0 %v4507
    %4719 = vmatprep.subr.bf16.mxu0 0
    %4720 = vmatpush1.bf16.msra.mxu0 %v4508
    %4721 = vmatprep.subr.bf16.mxu0 0
    %4722 = vmatpush1.bf16.msra.mxu0 %v4509
    %4723 = vmatprep.subr.bf16.mxu0 0
    %4724 = vmatpush1.bf16.msra.mxu0 %v4510
    %4725 = vmatprep.subr.bf16.mxu0 0
    %4726 = vmatpush1.bf16.msra.mxu0 %v4511
    %4727 = vmatprep.subr.bf16.mxu0 0
    %4728 = vmatpush1.bf16.msra.mxu0 %v4512
    %4729 = vmatprep.subr.bf16.mxu0 0
    %4730 = vmatpush1.bf16.msra.mxu0 %v4513
    %4731 = vmatprep.subr.bf16.mxu0 0
    %4732 = vmatpush1.bf16.msra.mxu0 %v4514
    %4733 = vmatprep.subr.bf16.mxu0 0
    %4734 = vmatpush1.bf16.msra.mxu0 %v4515
    %4735 = vmatprep.subr.bf16.mxu0 0
    %4736 = vmatpush1.bf16.msra.mxu0 %v4516
    %4737 = vmatprep.subr.bf16.mxu0 0
    %4738 = vmatpush1.bf16.msra.mxu0 %v4517
    %4739 = vmatprep.subr.bf16.mxu0 0
    %4740 = vmatpush1.bf16.msra.mxu0 %v4518
    %4741 = vmatprep.subr.bf16.mxu0 0
    %4742 = vmatpush1.bf16.msra.mxu0 %v4519
    %4743 = vmatprep.subr.bf16.mxu0 0
    %4744 = vmatpush1.bf16.msra.mxu0 %v4520
    %4745 = vmatprep.subr.bf16.mxu0 0
    %4746 = vmatpush1.bf16.msra.mxu0 %v4521
    %4747 = vmatprep.mubr.bf16.mxu0 %v4230
    %4748 = vmatmul.mubr.bf16.gmra.mrb[0].mxu0 %v4229
    %v4749 = vpop.f32.mrb[0].mxu0
    %v4750 = vadd.f32 %v4589, %v4749
    %v4751 = vpop.f32.mrb[0].mxu0
    %v4752 = vpop.f32.mrb[0].mxu0
    %v4753 = vadd.f32 %v4592, %v4752
    %v4754 = vpop.f32.mrb[0].mxu0
    %4755 = vmatprep.mubr.bf16.mxu0 %v4234
    %4756 = vmatmul.mubr.bf16.gmra.mrb[0].mxu0 %v4233
    %v4757 = vpop.f32.mrb[0].mxu0
    %v4758 = vadd.f32 %v4597, %v4757
    %v4759 = vpop.f32.mrb[0].mxu0
    %v4760 = vpop.f32.mrb[0].mxu0
    %v4761 = vadd.f32 %v4600, %v4760
    %v4762 = vpop.f32.mrb[0].mxu0
    %4763 = vmatprep.mubr.bf16.mxu0 %v4238
    %4764 = vmatmul.mubr.bf16.gmra.mrb[0].mxu0 %v4237
    %v4765 = vpop.f32.mrb[0].mxu0
    %v4766 = vadd.f32 %v4605, %v4765
    %v4767 = vpop.f32.mrb[0].mxu0
    %v4768 = vpop.f32.mrb[0].mxu0
    %v4769 = vadd.f32 %v4608, %v4768
    %v4770 = vpop.f32.mrb[0].mxu0
    %4771 = vmatprep.mubr.bf16.mxu0 %v4242
    %4772 = vmatmul.mubr.bf16.gmra.mrb[0].mxu0 %v4241
    %v4773 = vpop.f32.mrb[0].mxu0
    %v4774 = vadd.f32 %v4613, %v4773
    %v4775 = vpop.f32.mrb[0].mxu0
    %v4776 = vpop.f32.mrb[0].mxu0
    %v4777 = vadd.f32 %v4616, %v4776
    %v4778 = vpop.f32.mrb[0].mxu0
    %4779 = vmatprep.mubr.bf16.mxu0 %v4246
    %4780 = vmatmul.mubr.bf16.gmra.mrb[0].mxu0 %v4245
    %v4781 = vpop.f32.mrb[0].mxu0
    %v4782 = vadd.f32 %v4621, %v4781
    %v4783 = vpop.f32.mrb[0].mxu0
    %v4784 = vpop.f32.mrb[0].mxu0
    %v4785 = vadd.f32 %v4624, %v4784
    %v4786 = vpop.f32.mrb[0].mxu0
    %4787 = vmatprep.mubr.bf16.mxu0 %v4250
    %4788 = vmatmul.mubr.bf16.gmra.mrb[0].mxu0 %v4249
    %v4789 = vpop.f32.mrb[0].mxu0
    %v4790 = vadd.f32 %v4629, %v4789
    %v4791 = vpop.f32.mrb[0].mxu0
    %v4792 = vpop.f32.mrb[0].mxu0
    %v4793 = vadd.f32 %v4632, %v4792
    %v4794 = vpop.f32.mrb[0].mxu0
    %4795 = vmatprep.mubr.bf16.mxu0 %v4254
    %4796 = vmatmul.mubr.bf16.gmra.mrb[0].mxu0 %v4253
    %v4797 = vpop.f32.mrb[0].mxu0
    %v4798 = vadd.f32 %v4637, %v4797
    %v4799 = vpop.f32.mrb[0].mxu0
    %v4800 = vpop.f32.mrb[0].mxu0
    %v4801 = vadd.f32 %v4640, %v4800
    %v4802 = vpop.f32.mrb[0].mxu0
    %4803 = vmatprep.mubr.bf16.mxu0 %v4258
    %4804 = vmatmul.mubr.bf16.gmra.mrb[0].mxu0 %v4257
    %v4805 = vpop.f32.mrb[0].mxu0
    %v4806 = vadd.f32 %v4645, %v4805
    %v4807 = vpop.f32.mrb[0].mxu0
    %v4808 = vpop.f32.mrb[0].mxu0
    %v4809 = vadd.f32 %v4648, %v4808
    %v4810 = vpop.f32.mrb[0].mxu0
    %4811 = vmatprep.mubr.bf16.mxu0 %v4262
    %4812 = vmatmul.mubr.bf16.gmra.mrb[0].mxu0 %v4261
    %v4813 = vpop.f32.mrb[0].mxu0
    %v4814 = vadd.f32 %v4653, %v4813
    %v4815 = vpop.f32.mrb[0].mxu0
    %v4816 = vpop.f32.mrb[0].mxu0
    %v4817 = vadd.f32 %v4656, %v4816
    %v4818 = vpop.f32.mrb[0].mxu0
    %4819 = vmatprep.mubr.bf16.mxu0 %v4266
    %4820 = vmatmul.mubr.bf16.gmra.mrb[0].mxu0 %v4265
    %v4821 = vpop.f32.mrb[0].mxu0
    %v4822 = vadd.f32 %v4661, %v4821
    %v4823 = vpop.f32.mrb[0].mxu0
    %v4824 = vpop.f32.mrb[0].mxu0
    %v4825 = vadd.f32 %v4664, %v4824
    %v4826 = vpop.f32.mrb[0].mxu0
    %4827 = vmatprep.mubr.bf16.mxu0 %v4270
    %4828 = vmatmul.mubr.bf16.gmra.mrb[0].mxu0 %v4269
    %v4829 = vpop.f32.mrb[0].mxu0
    %v4830 = vadd.f32 %v4669, %v4829
    %v4831 = vpop.f32.mrb[0].mxu0
    %v4832 = vpop.f32.mrb[0].mxu0
    %v4833 = vadd.f32 %v4672, %v4832
    %v4834 = vpop.f32.mrb[0].mxu0
    %4835 = vmatprep.mubr.bf16.mxu0 %v4274
    %4836 = vmatmul.mubr.bf16.gmra.mrb[0].mxu0 %v4273
    %v4837 = vpop.f32.mrb[0].mxu0
    %v4838 = vadd.f32 %v4677, %v4837
    %v4839 = vpop.f32.mrb[0].mxu0
    %v4840 = vpop.f32.mrb[0].mxu0
    %v4841 = vadd.f32 %v4680, %v4840
    %v4842 = vpop.f32.mrb[0].mxu0
    %4843 = vmatprep.mubr.bf16.mxu0 %v4278
    %4844 = vmatmul.mubr.bf16.gmra.mrb[0].mxu0 %v4277
    %v4845 = vpop.f32.mrb[0].mxu0
    %v4846 = vadd.f32 %v4685, %v4845
    %v4847 = vpop.f32.mrb[0].mxu0
    %v4848 = vpop.f32.mrb[0].mxu0
    %v4849 = vadd.f32 %v4688, %v4848
    %v4850 = vpop.f32.mrb[0].mxu0
    %4851 = vmatprep.mubr.bf16.mxu0 %v4282
    %4852 = vmatmul.mubr.bf16.gmra.mrb[0].mxu0 %v4281
    %v4853 = vpop.f32.mrb[0].mxu0
    %v4854 = vadd.f32 %v4693, %v4853
    %v4855 = vpop.f32.mrb[0].mxu0
    %v4856 = vpop.f32.mrb[0].mxu0
    %v4857 = vadd.f32 %v4696, %v4856
    %v4858 = vpop.f32.mrb[0].mxu0
    %4859 = vmatprep.mubr.bf16.mxu0 %v4286
    %4860 = vmatmul.mubr.bf16.gmra.mrb[0].mxu0 %v4285
    %v4861 = vpop.f32.mrb[0].mxu0
    %v4862 = vadd.f32 %v4701, %v4861
    %v4863 = vpop.f32.mrb[0].mxu0
    %v4864 = vpop.f32.mrb[0].mxu0
    %v4865 = vadd.f32 %v4704, %v4864
    %v4866 = vpop.f32.mrb[0].mxu0
    %4867 = vmatprep.mubr.bf16.mxu0 %v4290
    %4868 = vmatmul.mubr.bf16.gmra.mrb[0].mxu0 %v4289
    %v4869 = vpop.f32.mrb[0].mxu0
    %v4870 = vadd.f32 %v4709, %v4869
    %v4871 = vpop.f32.mrb[0].mxu0
    %v4872 = vpop.f32.mrb[0].mxu0
    %v4873 = vadd.f32 %v4712, %v4872
    %v4874 = vpop.f32.mrb[0].mxu0
    %4875 = vdwg.mxu0
    %vm4876 = vcmask 23552
    %4877 = vst.msk [vmem:[%s9] sm:$0xff] %vm4876, %v4750
    %4878 = vst.msk [vmem:[%s9 + $0x8] sm:$0xff] %vm4876, %v4753
    %4879 = vst.msk [vmem:[%s9 + $0x10] sm:$0xff] %vm4876, %v4758
    %4880 = vst.msk [vmem:[%s9 + $0x18] sm:$0xff] %vm4876, %v4761
    %4881 = vst.msk [vmem:[%s9 + $0x20] sm:$0xff] %vm4876, %v4766
    %4882 = vst.msk [vmem:[%s9 + $0x28] sm:$0xff] %vm4876, %v4769
    %4883 = vst.msk [vmem:[%s9 + $0x30] sm:$0xff] %vm4876, %v4774
    %4884 = vst.msk [vmem:[%s9 + $0x38] sm:$0xff] %vm4876, %v4777
    %4885 = vst.msk [vmem:[%s9 + $0x40] sm:$0xff] %vm4876, %v4782
    %4886 = vst.msk [vmem:[%s9 + $0x48] sm:$0xff] %vm4876, %v4785
    %4887 = vst.msk [vmem:[%s9 + $0x50] sm:$0xff] %vm4876, %v4790
    %4888 = vst.msk [vmem:[%s9 + $0x58] sm:$0xff] %vm4876, %v4793
    %4889 = vst.msk [vmem:[%s9 + $0x60] sm:$0xff] %vm4876, %v4798
    %4890 = vst.msk [vmem:[%s9 + $0x68] sm:$0xff] %vm4876, %v4801
    %4891 = vst.msk [vmem:[%s9 + $0x70] sm:$0xff] %vm4876, %v4806
    %4892 = vst.msk [vmem:[%s9 + $0x78] sm:$0xff] %vm4876, %v4809
    %4893 = vst.msk [vmem:[%s9 + $0x80] sm:$0xff] %vm4876, %v4814
    %4894 = vst.msk [vmem:[%s9 + $0x88] sm:$0xff] %vm4876, %v4817
    %4895 = vst.msk [vmem:[%s9 + $0x90] sm:$0xff] %vm4876, %v4822
    %4896 = vst.msk [vmem:[%s9 + $0x98] sm:$0xff] %vm4876, %v4825
    %4897 = vst.msk [vmem:[%s9 + $0xa0] sm:$0xff] %vm4876, %v4830
    %4898 = vst.msk [vmem:[%s9 + $0xa8] sm:$0xff] %vm4876, %v4833
    %4899 = vst.msk [vmem:[%s9 + $0xb0] sm:$0xff] %vm4876, %v4838
    %4900 = vst.msk [vmem:[%s9 + $0xb8] sm:$0xff] %vm4876, %v4841
    %4901 = vst.msk [vmem:[%s9 + $0xc0] sm:$0xff] %vm4876, %v4846
    %4902 = vst.msk [vmem:[%s9 + $0xc8] sm:$0xff] %vm4876, %v4849
    %4903 = vst.msk [vmem:[%s9 + $0xd0] sm:$0xff] %vm4876, %v4854
    %4904 = vst.msk [vmem:[%s9 + $0xd8] sm:$0xff] %vm4876, %v4857
    %4905 = vst.msk [vmem:[%s9 + $0xe0] sm:$0xff] %vm4876, %v4862
    %4906 = vst.msk [vmem:[%s9 + $0xe8] sm:$0xff] %vm4876, %v4865
    %4907 = vst.msk [vmem:[%s9 + $0xf0] sm:$0xff] %vm4876, %v4870
    %4908 = vst.msk [vmem:[%s9 + $0xf8] sm:$0xff] %vm4876, %v4873
    // Predicated region
    $region46: #{tpu_custom_call.1} parent=1 // pred_check
      _
    $region47: #{tpu_custom_call.1} parent=1 // pred_check_branch
      %4910 = sbr.rel (0) target = $region49
    $region48: #{tpu_custom_call.1} parent=1 // pred_region
      _
    $region49: #{tpu_custom_call.1} parent=1 // pred_fallthru
      _
    // Predicated region
    $region50: #{tpu_custom_call.1} parent=1 // pred_check
      _
    $region51: #{tpu_custom_call.1} parent=1 // pred_check_branch
      %4912 = sbr.rel (0) target = $region53
    $region52: #{tpu_custom_call.1} parent=1 // pred_region
      _
    $region53: #{tpu_custom_call.1} parent=1 // pred_fallthru
      _
    %4913 = vsyncpa [#allocation3], 1
    %4914 = vsyncpa [#allocation5], 1

</llo_original>
